<compile_context>
chip_gen: v7x
topology: tpu7x:2x2x1
jax: 0.10.0
libtpu: 0.0.40
codegen_flags: <defaults>
</compile_context>

<pallas_src>
import functools

import jax
import jax.numpy as jnp
import numpy as np
from jax.experimental import pallas as pl
from jax.experimental.pallas import tpu as pltpu

_V5 = np.array([1.0, 4.0, 6.0, 4.0, 1.0], dtype=np.float64) / 16.0
_WEIGHTS = (1.0, 2.0, 4.0, 8.0, 16.0)


def _reflect_index(q, n):
    """Original index feeding position q of the reflect-2-padded length-n axis."""
    i = q - 2
    if i < 0:
        i = -i
    if i > n - 1:
        i = 2 * (n - 1) - i
    return i


@functools.lru_cache(maxsize=None)
def _axis_operators(n):
    """1-D polyphase pyramid operators along an even axis of size n.

    down1d = D @ x  (D: (n//2, n))  reflect-pad-2 + 5-tap blur + even samples
    up1d   = U @ d  (U: (n, n//2))  zero-stuff (x4 total) + reflect-pad-2 + blur
    Entries are multiples of 1/16 -> exact in float32.
    """
    if n % 2 != 0 or n < 4:
        raise ValueError(
            f"spatial size {n} is too small/odd for the 5x5 reflect-padded blur")
    m = n // 2
    down = np.zeros((m, n), dtype=np.float64)
    for i in range(m):
        for a in range(5):
            down[i, _reflect_index(2 * i + a, n)] += _V5[a]
    up = np.zeros((n, m), dtype=np.float64)
    for y in range(n):
        for a in range(5):
            src = _reflect_index(y + a, n)
            if src % 2 == 0:
                up[y, src // 2] += 2.0 * _V5[a]
    return down.astype(np.float32), up.astype(np.float32)


def _level_matrices(h, w):
    dh, uh = _axis_operators(h)
    dw, uw = _axis_operators(w)
    return (jnp.asarray(dh),      # DR (h/2, h)
            jnp.asarray(dw.T),    # DC (w, w/2)
            jnp.asarray(uh),      # UR (h, h/2)
            jnp.asarray(uw.T))    # UC (w/2, w)


def _batched_sandwich(left, x, right):
    """Compute left @ x[g] @ right for every image g on the MXU.

    left (O, K), x (G, K, M), right (M, P) -> (G, O, P).  Uses batched
    dot_generals (the documented flash-attention einsum pattern).
    """
    g = x.shape[0]
    rb = jnp.broadcast_to(right[None], (g,) + right.shape)
    t = jnp.einsum("gkm,gmp->gkp", x, rb, preferred_element_type=jnp.float32)
    lb = jnp.broadcast_to(left[None], (g,) + left.shape)
    return jnp.einsum("gok,gkp->gop", lb, t, preferred_element_type=jnp.float32)


def _make_pyramid_kernel(level_shapes, weights):
    num_levels = len(level_shapes)

    def kernel(*refs):
        op_refs = refs[:4 * num_levels]
        p_ref = refs[4 * num_levels]
        t_ref = refs[4 * num_levels + 1]
        out_ref = refs[4 * num_levels + 2]

        # The pyramid is a linear map, so the L1 of the laplacian difference
        # equals the L1 of the laplacian of the difference image.
        d = p_ref[...] - t_ref[...]                       # (G, H0, W0) f32
        acc = jnp.float32(0.0)
        for lvl in range(num_levels):
            h, w, he, we = level_shapes[lvl]
            dr = op_refs[4 * lvl + 0][...]
            dc = op_refs[4 * lvl + 1][...]
            ur = op_refs[4 * lvl + 2][...]
            uc = op_refs[4 * lvl + 3][...]
            if (he, we) != (h, w):                        # crop_to_even_size
                d = d[:, :he, :we]
            down = _batched_sandwich(dr, d, dc)           # (G, he/2, we/2)
            up = _batched_sandwich(ur, down, uc)          # (G, he,   we)
            resid = d - up                                # laplacian residual diff
            acc = acc + jnp.float32(weights[lvl] / (he * we)) * jnp.sum(jnp.abs(resid))
            d = down
        out_ref[0, 0] = acc                               # per-group partial sum

    return kernel


def lap_loss(predict, target, max_levels=5):
    """Laplacian-pyramid L1 loss matching the PyTorch LapLoss.forward."""
    if max_levels > len(_WEIGHTS):
        raise ValueError("max_levels > 5 is not supported (reference has 5 weights)")
    B, C, H, W = predict.shape
    N = B * C
    he0, we0 = H - H % 2, W - W % 2

    # Static per-level (h, w, h_even, w_even) schedule.
    level_shapes = []
    h, w = he0, we0
    for _ in range(max_levels):
        he, we = h - h % 2, w - w % 2
        level_shapes.append((h, w, he, we))
        h, w = he // 2, we // 2

    ops = []
    for (_, _, he, we) in level_shapes:
        ops.extend(_level_matrices(he, we))

    p = predict.astype(jnp.float32).reshape(N, H, W)[:, :he0, :we0]
    t = target.astype(jnp.float32).reshape(N, H, W)[:, :he0, :we0]

    # Group size: as many images per grid step as comfortably fit in VMEM.
    per_image_bytes = he0 * we0 * 4
    g_cap = max(1, int((8 * 1024 * 1024) // (10 * per_image_bytes)))
    G = min(N, g_cap)
    num_groups = -(-N // G)
    n_pad = num_groups * G
    if n_pad != N:
        pad = ((0, n_pad - N), (0, 0), (0, 0))
        p = jnp.pad(p, pad)   # zero pads -> zero residuals -> loss unchanged
        t = jnp.pad(t, pad)

    op_specs = [pl.BlockSpec(o.shape, lambda g: (0, 0)) for o in ops]
    img_spec = pl.BlockSpec((G, he0, we0), lambda g: (g, 0, 0))
    out_spec = pl.BlockSpec((1, 1), lambda g: (g, 0),
                            memory_space=pltpu.MemorySpace.SMEM)

    op_bytes = sum(int(np.prod(o.shape)) * 4 for o in ops)
    block_bytes = G * he0 * we0 * 4
    vmem_need = 2 * 2 * block_bytes + 2 * op_bytes + 10 * block_bytes
    vmem_limit = int(min(64 * 1024 * 1024, max(32 * 1024 * 1024, 2 * vmem_need)))

    kernel = _make_pyramid_kernel(tuple(level_shapes), _WEIGHTS)
    partial = pl.pallas_call(
        kernel,
        grid=(num_groups,),
        in_specs=op_specs + [img_spec, img_spec],
        out_specs=out_spec,
        out_shape=jax.ShapeDtypeStruct((num_groups, 1), jnp.float32),
        compiler_params=pltpu.CompilerParams(
            dimension_semantics=("parallel",),   # independent groups -> v7x megacore OK
            vmem_limit_bytes=vmem_limit),
    )(*ops, p, t)

    return jnp.sum(partial) / N   # .mean() of a scalar is the scalar itself


def _reference_lap_loss(predict, target, max_levels=5):
    """Direct XLA transcription of the PyTorch LapLoss (self-check only)."""
    B, C, H, W = predict.shape
    p = predict.astype(jnp.float32).reshape(B * C, H, W)
    t = target.astype(jnp.float32).reshape(B * C, H, W)

    def blur(x):
        xp = jnp.pad(x, ((0, 0), (2, 2), (2, 2)), mode="reflect")
        h, w = x.shape[1], x.shape[2]
        out = jnp.zeros_like(x)
        for a in range(5):
            for b in range(5):
                out = out + float(_V5[a] * _V5[b]) * xp[:, a:a + h, b:b + w]
        return out

    def pyramid(img):
        cur, pyr = img, []
        for _ in range(max_levels):
            h, w = cur.shape[1], cur.shape[2]
            cur = cur[:, :h - h % 2, :w - w % 2]
            down = blur(cur)[:, ::2, ::2]
            up = blur(jnp.zeros_like(cur).at[:, ::2, ::2].set(4.0 * down))
            pyr.append(cur - up)
            cur = down
        return pyr

    total = jnp.float32(0.0)
    for i, (a, b) in enumerate(zip(pyramid(p), pyramid(t))):
        total = total + _WEIGHTS[i] * jnp.mean(jnp.abs(a - b))
    return total


if __name__ == "__main__":
    # C == 1 keeps the reference gauss_convolution reshape shape-consistent;
    # 64x64 keeps all 5 levels >= 4 px so the reflect-pad-2 stays valid.
    B, C, H, W = 2, 1, 64, 64
    kp, kt = jax.random.split(jax.random.PRNGKey(0))
    predict = jax.random.normal(kp, (B, C, H, W), dtype=jnp.float32)
    target = jax.random.normal(kt, (B, C, H, W), dtype=jnp.float32)

    loss_fn = jax.jit(functools.partial(lap_loss, max_levels=5))
    loss = loss_fn(predict, target)
    jax.block_until_ready(loss)
    assert bool(jnp.isfinite(loss)), "loss is not finite"

    ref = jax.jit(functools.partial(_reference_lap_loss, max_levels=5))(predict, target)
    jax.block_until_ready(ref)
    assert bool(jnp.allclose(loss, ref, rtol=5e-3, atol=5e-3)), (float(loss), float(ref))

    print("KERNEL_OK")
</pallas_src>

<mosaic_0001>
module attributes {stable_mosaic.version = 11 : i64} {
  func.func @kernel(%arg0: i32, %arg1: memref<32x64xf32, #tpu.memory_space<vmem>>, %arg2: memref<64x32xf32, #tpu.memory_space<vmem>>, %arg3: memref<64x32xf32, #tpu.memory_space<vmem>>, %arg4: memref<32x64xf32, #tpu.memory_space<vmem>>, %arg5: memref<16x32xf32, #tpu.memory_space<vmem>>, %arg6: memref<32x16xf32, #tpu.memory_space<vmem>>, %arg7: memref<32x16xf32, #tpu.memory_space<vmem>>, %arg8: memref<16x32xf32, #tpu.memory_space<vmem>>, %arg9: memref<8x16xf32, #tpu.memory_space<vmem>>, %arg10: memref<16x8xf32, #tpu.memory_space<vmem>>, %arg11: memref<16x8xf32, #tpu.memory_space<vmem>>, %arg12: memref<8x16xf32, #tpu.memory_space<vmem>>, %arg13: memref<4x8xf32, #tpu.memory_space<vmem>>, %arg14: memref<8x4xf32, #tpu.memory_space<vmem>>, %arg15: memref<8x4xf32, #tpu.memory_space<vmem>>, %arg16: memref<4x8xf32, #tpu.memory_space<vmem>>, %arg17: memref<2x4xf32, #tpu.memory_space<vmem>>, %arg18: memref<4x2xf32, #tpu.memory_space<vmem>>, %arg19: memref<4x2xf32, #tpu.memory_space<vmem>>, %arg20: memref<2x4xf32, #tpu.memory_space<vmem>>, %arg21: memref<2x64x64xf32, #tpu.memory_space<vmem>>, %arg22: memref<2x64x64xf32, #tpu.memory_space<vmem>>, %arg23: memref<1x1xf32, #tpu.memory_space<smem>>) attributes {dimension_semantics = [#tpu.dimension_semantics<parallel>], iteration_bounds = array<i64: 1>, scalar_prefetch = 0 : i64, scratch_operands = 0 : i64, tpu.core_type = #tpu.core_type<tc>, window_params = [{pipeline_mode = #tpu.pipeline_mode<synchronous>, transform_indices = @transform_0, window_bounds = array<i64: 32, 64>}, {pipeline_mode = #tpu.pipeline_mode<synchronous>, transform_indices = @transform_1, window_bounds = array<i64: 64, 32>}, {pipeline_mode = #tpu.pipeline_mode<synchronous>, transform_indices = @transform_2, window_bounds = array<i64: 64, 32>}, {pipeline_mode = #tpu.pipeline_mode<synchronous>, transform_indices = @transform_3, window_bounds = array<i64: 32, 64>}, {pipeline_mode = #tpu.pipeline_mode<synchronous>, transform_indices = @transform_4, window_bounds = array<i64: 16, 32>}, {pipeline_mode = #tpu.pipeline_mode<synchronous>, transform_indices = @transform_5, window_bounds = array<i64: 32, 16>}, {pipeline_mode = #tpu.pipeline_mode<synchronous>, transform_indices = @transform_6, window_bounds = array<i64: 32, 16>}, {pipeline_mode = #tpu.pipeline_mode<synchronous>, transform_indices = @transform_7, window_bounds = array<i64: 16, 32>}, {pipeline_mode = #tpu.pipeline_mode<synchronous>, transform_indices = @transform_8, window_bounds = array<i64: 8, 16>}, {pipeline_mode = #tpu.pipeline_mode<synchronous>, transform_indices = @transform_9, window_bounds = array<i64: 16, 8>}, {pipeline_mode = #tpu.pipeline_mode<synchronous>, transform_indices = @transform_10, window_bounds = array<i64: 16, 8>}, {pipeline_mode = #tpu.pipeline_mode<synchronous>, transform_indices = @transform_11, window_bounds = array<i64: 8, 16>}, {pipeline_mode = #tpu.pipeline_mode<synchronous>, transform_indices = @transform_12, window_bounds = array<i64: 4, 8>}, {pipeline_mode = #tpu.pipeline_mode<synchronous>, transform_indices = @transform_13, window_bounds = array<i64: 8, 4>}, {pipeline_mode = #tpu.pipeline_mode<synchronous>, transform_indices = @transform_14, window_bounds = array<i64: 8, 4>}, {pipeline_mode = #tpu.pipeline_mode<synchronous>, transform_indices = @transform_15, window_bounds = array<i64: 4, 8>}, {pipeline_mode = #tpu.pipeline_mode<synchronous>, transform_indices = @transform_16, window_bounds = array<i64: 2, 4>}, {pipeline_mode = #tpu.pipeline_mode<synchronous>, transform_indices = @transform_17, window_bounds = array<i64: 4, 2>}, {pipeline_mode = #tpu.pipeline_mode<synchronous>, transform_indices = @transform_18, window_bounds = array<i64: 4, 2>}, {pipeline_mode = #tpu.pipeline_mode<synchronous>, transform_indices = @transform_19, window_bounds = array<i64: 2, 4>}, {transform_indices = @transform_20, window_bounds = array<i64: 2, 64, 64>}, {transform_indices = @transform_21, window_bounds = array<i64: 2, 64, 64>}, {transform_indices = @transform_22, window_bounds = array<i64: 1, 1>}]} {
    %c0 = arith.constant 0 : index
    %c0_0 = arith.constant 0 : index
    %c0_1 = arith.constant 0 : index
    %0 = vector.load %arg21[%c0, %c0_0, %c0_1] : memref<2x64x64xf32, #tpu.memory_space<vmem>>, vector<2x64x64xf32>
    %c0_2 = arith.constant 0 : index
    %c0_3 = arith.constant 0 : index
    %c0_4 = arith.constant 0 : index
    %1 = vector.load %arg22[%c0_2, %c0_3, %c0_4] : memref<2x64x64xf32, #tpu.memory_space<vmem>>, vector<2x64x64xf32>
    %2 = arith.subf %0, %1 : vector<2x64x64xf32>
    %c0_5 = arith.constant 0 : index
    %c0_6 = arith.constant 0 : index
    %3 = vector.load %arg1[%c0_5, %c0_6] : memref<32x64xf32, #tpu.memory_space<vmem>>, vector<32x64xf32>
    %c0_7 = arith.constant 0 : index
    %c0_8 = arith.constant 0 : index
    %4 = vector.load %arg2[%c0_7, %c0_8] : memref<64x32xf32, #tpu.memory_space<vmem>>, vector<64x32xf32>
    %c0_9 = arith.constant 0 : index
    %c0_10 = arith.constant 0 : index
    %5 = vector.load %arg3[%c0_9, %c0_10] : memref<64x32xf32, #tpu.memory_space<vmem>>, vector<64x32xf32>
    %c0_11 = arith.constant 0 : index
    %c0_12 = arith.constant 0 : index
    %6 = vector.load %arg4[%c0_11, %c0_12] : memref<32x64xf32, #tpu.memory_space<vmem>>, vector<32x64xf32>
    %7 = vector.shape_cast %4 : vector<64x32xf32> to vector<1x64x32xf32>
    %8 = vector.shape_cast %7 : vector<1x64x32xf32> to vector<1x64x32xf32>
    %9 = vector.broadcast %8 : vector<1x64x32xf32> to vector<2x64x32xf32>
    "tpu.trace_start"() <{level = 10 : i32, message = "gkm,gmp->gkp"}> : () -> ()
    %cst = arith.constant dense<0.000000e+00> : vector<2x64x32xf32>
    %10 = tpu.matmul %2, %9, %cst {dimension_numbers = #tpu.dot_dimension_numbers<[2], [1], [1], [2], [0, 0, 0, 1, 1, 2], [0], [0]>} : vector<2x64x64xf32>, vector<2x64x32xf32>, vector<2x64x32xf32> -> vector<2x64x32xf32>
    "tpu.trace_stop"() : () -> ()
    %11 = vector.shape_cast %3 : vector<32x64xf32> to vector<1x32x64xf32>
    %12 = vector.shape_cast %11 : vector<1x32x64xf32> to vector<1x32x64xf32>
    %13 = vector.broadcast %12 : vector<1x32x64xf32> to vector<2x32x64xf32>
    "tpu.trace_start"() <{level = 10 : i32, message = "gok,gkp->gop"}> : () -> ()
    %cst_13 = arith.constant dense<0.000000e+00> : vector<2x32x32xf32>
    %14 = tpu.matmul %13, %10, %cst_13 {dimension_numbers = #tpu.dot_dimension_numbers<[2], [1], [1], [2], [0, 0, 0, 1, 1, 2], [0], [0]>} : vector<2x32x64xf32>, vector<2x64x32xf32>, vector<2x32x32xf32> -> vector<2x32x32xf32>
    "tpu.trace_stop"() : () -> ()
    %15 = vector.shape_cast %6 : vector<32x64xf32> to vector<1x32x64xf32>
    %16 = vector.shape_cast %15 : vector<1x32x64xf32> to vector<1x32x64xf32>
    %17 = vector.broadcast %16 : vector<1x32x64xf32> to vector<2x32x64xf32>
    "tpu.trace_start"() <{level = 10 : i32, message = "gkm,gmp->gkp"}> : () -> ()
    %cst_14 = arith.constant dense<0.000000e+00> : vector<2x32x64xf32>
    %18 = tpu.matmul %14, %17, %cst_14 {dimension_numbers = #tpu.dot_dimension_numbers<[2], [1], [1], [2], [0, 0, 0, 1, 1, 2], [0], [0]>} : vector<2x32x32xf32>, vector<2x32x64xf32>, vector<2x32x64xf32> -> vector<2x32x64xf32>
    "tpu.trace_stop"() : () -> ()
    %19 = vector.shape_cast %5 : vector<64x32xf32> to vector<1x64x32xf32>
    %20 = vector.shape_cast %19 : vector<1x64x32xf32> to vector<1x64x32xf32>
    %21 = vector.broadcast %20 : vector<1x64x32xf32> to vector<2x64x32xf32>
    "tpu.trace_start"() <{level = 10 : i32, message = "gok,gkp->gop"}> : () -> ()
    %cst_15 = arith.constant dense<0.000000e+00> : vector<2x64x64xf32>
    %22 = tpu.matmul %21, %18, %cst_15 {dimension_numbers = #tpu.dot_dimension_numbers<[2], [1], [1], [2], [0, 0, 0, 1, 1, 2], [0], [0]>} : vector<2x64x32xf32>, vector<2x32x64xf32>, vector<2x64x64xf32> -> vector<2x64x64xf32>
    "tpu.trace_stop"() : () -> ()
    %23 = arith.subf %2, %22 : vector<2x64x64xf32>
    %24 = math.absf %23 : vector<2x64x64xf32>
    %25 = vector.shape_cast %24 : vector<2x64x64xf32> to vector<1x2x64x64xf32>
    %cst_16 = arith.constant dense<0.000000e+00> : vector<1xf32>
    %26 = vector.multi_reduction <add>, %25, %cst_16 [1, 2, 3] : vector<1x2x64x64xf32> to vector<1xf32>
    %27 = vector.shape_cast %26 : vector<1xf32> to vector<1x1x1x1xf32>
    %28 = vector.extract %27[0, 0, 0, 0] : f32 from vector<1x1x1x1xf32>
    %cst_17 = arith.constant 2.44140625E-4 : f32
    %29 = arith.mulf %cst_17, %28 : f32
    %cst_18 = arith.constant 0.000000e+00 : f32
    %30 = arith.addf %cst_18, %29 : f32
    %c0_19 = arith.constant 0 : index
    %c0_20 = arith.constant 0 : index
    %31 = vector.load %arg5[%c0_19, %c0_20] : memref<16x32xf32, #tpu.memory_space<vmem>>, vector<16x32xf32>
    %c0_21 = arith.constant 0 : index
    %c0_22 = arith.constant 0 : index
    %32 = vector.load %arg6[%c0_21, %c0_22] : memref<32x16xf32, #tpu.memory_space<vmem>>, vector<32x16xf32>
    %c0_23 = arith.constant 0 : index
    %c0_24 = arith.constant 0 : index
    %33 = vector.load %arg7[%c0_23, %c0_24] : memref<32x16xf32, #tpu.memory_space<vmem>>, vector<32x16xf32>
    %c0_25 = arith.constant 0 : index
    %c0_26 = arith.constant 0 : index
    %34 = vector.load %arg8[%c0_25, %c0_26] : memref<16x32xf32, #tpu.memory_space<vmem>>, vector<16x32xf32>
    %35 = vector.shape_cast %32 : vector<32x16xf32> to vector<1x32x16xf32>
    %36 = vector.shape_cast %35 : vector<1x32x16xf32> to vector<1x32x16xf32>
    %37 = vector.broadcast %36 : vector<1x32x16xf32> to vector<2x32x16xf32>
    "tpu.trace_start"() <{level = 10 : i32, message = "gkm,gmp->gkp"}> : () -> ()
    %cst_27 = arith.constant dense<0.000000e+00> : vector<2x32x16xf32>
    %38 = tpu.matmul %14, %37, %cst_27 {dimension_numbers = #tpu.dot_dimension_numbers<[2], [1], [1], [2], [0, 0, 0, 1, 1, 2], [0], [0]>} : vector<2x32x32xf32>, vector<2x32x16xf32>, vector<2x32x16xf32> -> vector<2x32x16xf32>
    "tpu.trace_stop"() : () -> ()
    %39 = vector.shape_cast %31 : vector<16x32xf32> to vector<1x16x32xf32>
    %40 = vector.shape_cast %39 : vector<1x16x32xf32> to vector<1x16x32xf32>
    %41 = vector.broadcast %40 : vector<1x16x32xf32> to vector<2x16x32xf32>
    "tpu.trace_start"() <{level = 10 : i32, message = "gok,gkp->gop"}> : () -> ()
    %cst_28 = arith.constant dense<0.000000e+00> : vector<2x16x16xf32>
    %42 = tpu.matmul %41, %38, %cst_28 {dimension_numbers = #tpu.dot_dimension_numbers<[2], [1], [1], [2], [0, 0, 0, 1, 1, 2], [0], [0]>} : vector<2x16x32xf32>, vector<2x32x16xf32>, vector<2x16x16xf32> -> vector<2x16x16xf32>
    "tpu.trace_stop"() : () -> ()
    %43 = vector.shape_cast %34 : vector<16x32xf32> to vector<1x16x32xf32>
    %44 = vector.shape_cast %43 : vector<1x16x32xf32> to vector<1x16x32xf32>
    %45 = vector.broadcast %44 : vector<1x16x32xf32> to vector<2x16x32xf32>
    "tpu.trace_start"() <{level = 10 : i32, message = "gkm,gmp->gkp"}> : () -> ()
    %cst_29 = arith.constant dense<0.000000e+00> : vector<2x16x32xf32>
    %46 = tpu.matmul %42, %45, %cst_29 {dimension_numbers = #tpu.dot_dimension_numbers<[2], [1], [1], [2], [0, 0, 0, 1, 1, 2], [0], [0]>} : vector<2x16x16xf32>, vector<2x16x32xf32>, vector<2x16x32xf32> -> vector<2x16x32xf32>
    "tpu.trace_stop"() : () -> ()
    %47 = vector.shape_cast %33 : vector<32x16xf32> to vector<1x32x16xf32>
    %48 = vector.shape_cast %47 : vector<1x32x16xf32> to vector<1x32x16xf32>
    %49 = vector.broadcast %48 : vector<1x32x16xf32> to vector<2x32x16xf32>
    "tpu.trace_start"() <{level = 10 : i32, message = "gok,gkp->gop"}> : () -> ()
    %cst_30 = arith.constant dense<0.000000e+00> : vector<2x32x32xf32>
    %50 = tpu.matmul %49, %46, %cst_30 {dimension_numbers = #tpu.dot_dimension_numbers<[2], [1], [1], [2], [0, 0, 0, 1, 1, 2], [0], [0]>} : vector<2x32x16xf32>, vector<2x16x32xf32>, vector<2x32x32xf32> -> vector<2x32x32xf32>
    "tpu.trace_stop"() : () -> ()
    %51 = arith.subf %14, %50 : vector<2x32x32xf32>
    %52 = math.absf %51 : vector<2x32x32xf32>
    %53 = vector.shape_cast %52 : vector<2x32x32xf32> to vector<1x2x32x32xf32>
    %cst_31 = arith.constant dense<0.000000e+00> : vector<1xf32>
    %54 = vector.multi_reduction <add>, %53, %cst_31 [1, 2, 3] : vector<1x2x32x32xf32> to vector<1xf32>
    %55 = vector.shape_cast %54 : vector<1xf32> to vector<1x1x1x1xf32>
    %56 = vector.extract %55[0, 0, 0, 0] : f32 from vector<1x1x1x1xf32>
    %cst_32 = arith.constant 0.001953125 : f32
    %57 = arith.mulf %cst_32, %56 : f32
    %58 = arith.addf %30, %57 : f32
    %c0_33 = arith.constant 0 : index
    %c0_34 = arith.constant 0 : index
    %59 = vector.load %arg9[%c0_33, %c0_34] : memref<8x16xf32, #tpu.memory_space<vmem>>, vector<8x16xf32>
    %c0_35 = arith.constant 0 : index
    %c0_36 = arith.constant 0 : index
    %60 = vector.load %arg10[%c0_35, %c0_36] : memref<16x8xf32, #tpu.memory_space<vmem>>, vector<16x8xf32>
    %c0_37 = arith.constant 0 : index
    %c0_38 = arith.constant 0 : index
    %61 = vector.load %arg11[%c0_37, %c0_38] : memref<16x8xf32, #tpu.memory_space<vmem>>, vector<16x8xf32>
    %c0_39 = arith.constant 0 : index
    %c0_40 = arith.constant 0 : index
    %62 = vector.load %arg12[%c0_39, %c0_40] : memref<8x16xf32, #tpu.memory_space<vmem>>, vector<8x16xf32>
    %63 = vector.shape_cast %60 : vector<16x8xf32> to vector<1x16x8xf32>
    %64 = vector.shape_cast %63 : vector<1x16x8xf32> to vector<1x16x8xf32>
    %65 = vector.broadcast %64 : vector<1x16x8xf32> to vector<2x16x8xf32>
    "tpu.trace_start"() <{level = 10 : i32, message = "gkm,gmp->gkp"}> : () -> ()
    %cst_41 = arith.constant dense<0.000000e+00> : vector<2x16x8xf32>
    %66 = tpu.matmul %42, %65, %cst_41 {dimension_numbers = #tpu.dot_dimension_numbers<[2], [1], [1], [2], [0, 0, 0, 1, 1, 2], [0], [0]>} : vector<2x16x16xf32>, vector<2x16x8xf32>, vector<2x16x8xf32> -> vector<2x16x8xf32>
    "tpu.trace_stop"() : () -> ()
    %67 = vector.shape_cast %59 : vector<8x16xf32> to vector<1x8x16xf32>
    %68 = vector.shape_cast %67 : vector<1x8x16xf32> to vector<1x8x16xf32>
    %69 = vector.broadcast %68 : vector<1x8x16xf32> to vector<2x8x16xf32>
    "tpu.trace_start"() <{level = 10 : i32, message = "gok,gkp->gop"}> : () -> ()
    %cst_42 = arith.constant dense<0.000000e+00> : vector<2x8x8xf32>
    %70 = tpu.matmul %69, %66, %cst_42 {dimension_numbers = #tpu.dot_dimension_numbers<[2], [1], [1], [2], [0, 0, 0, 1, 1, 2], [0], [0]>} : vector<2x8x16xf32>, vector<2x16x8xf32>, vector<2x8x8xf32> -> vector<2x8x8xf32>
    "tpu.trace_stop"() : () -> ()
    %71 = vector.shape_cast %62 : vector<8x16xf32> to vector<1x8x16xf32>
    %72 = vector.shape_cast %71 : vector<1x8x16xf32> to vector<1x8x16xf32>
    %73 = vector.broadcast %72 : vector<1x8x16xf32> to vector<2x8x16xf32>
    "tpu.trace_start"() <{level = 10 : i32, message = "gkm,gmp->gkp"}> : () -> ()
    %cst_43 = arith.constant dense<0.000000e+00> : vector<2x8x16xf32>
    %74 = tpu.matmul %70, %73, %cst_43 {dimension_numbers = #tpu.dot_dimension_numbers<[2], [1], [1], [2], [0, 0, 0, 1, 1, 2], [0], [0]>} : vector<2x8x8xf32>, vector<2x8x16xf32>, vector<2x8x16xf32> -> vector<2x8x16xf32>
    "tpu.trace_stop"() : () -> ()
    %75 = vector.shape_cast %61 : vector<16x8xf32> to vector<1x16x8xf32>
    %76 = vector.shape_cast %75 : vector<1x16x8xf32> to vector<1x16x8xf32>
    %77 = vector.broadcast %76 : vector<1x16x8xf32> to vector<2x16x8xf32>
    "tpu.trace_start"() <{level = 10 : i32, message = "gok,gkp->gop"}> : () -> ()
    %cst_44 = arith.constant dense<0.000000e+00> : vector<2x16x16xf32>
    %78 = tpu.matmul %77, %74, %cst_44 {dimension_numbers = #tpu.dot_dimension_numbers<[2], [1], [1], [2], [0, 0, 0, 1, 1, 2], [0], [0]>} : vector<2x16x8xf32>, vector<2x8x16xf32>, vector<2x16x16xf32> -> vector<2x16x16xf32>
    "tpu.trace_stop"() : () -> ()
    %79 = arith.subf %42, %78 : vector<2x16x16xf32>
    %80 = math.absf %79 : vector<2x16x16xf32>
    %81 = vector.shape_cast %80 : vector<2x16x16xf32> to vector<1x2x16x16xf32>
    %cst_45 = arith.constant dense<0.000000e+00> : vector<1xf32>
    %82 = vector.multi_reduction <add>, %81, %cst_45 [1, 2, 3] : vector<1x2x16x16xf32> to vector<1xf32>
    %83 = vector.shape_cast %82 : vector<1xf32> to vector<1x1x1x1xf32>
    %84 = vector.extract %83[0, 0, 0, 0] : f32 from vector<1x1x1x1xf32>
    %cst_46 = arith.constant 1.562500e-02 : f32
    %85 = arith.mulf %cst_46, %84 : f32
    %86 = arith.addf %58, %85 : f32
    %c0_47 = arith.constant 0 : index
    %c0_48 = arith.constant 0 : index
    %87 = vector.load %arg13[%c0_47, %c0_48] : memref<4x8xf32, #tpu.memory_space<vmem>>, vector<4x8xf32>
    %c0_49 = arith.constant 0 : index
    %c0_50 = arith.constant 0 : index
    %88 = vector.load %arg14[%c0_49, %c0_50] : memref<8x4xf32, #tpu.memory_space<vmem>>, vector<8x4xf32>
    %c0_51 = arith.constant 0 : index
    %c0_52 = arith.constant 0 : index
    %89 = vector.load %arg15[%c0_51, %c0_52] : memref<8x4xf32, #tpu.memory_space<vmem>>, vector<8x4xf32>
    %c0_53 = arith.constant 0 : index
    %c0_54 = arith.constant 0 : index
    %90 = vector.load %arg16[%c0_53, %c0_54] : memref<4x8xf32, #tpu.memory_space<vmem>>, vector<4x8xf32>
    %91 = vector.shape_cast %88 : vector<8x4xf32> to vector<1x8x4xf32>
    %92 = vector.shape_cast %91 : vector<1x8x4xf32> to vector<1x8x4xf32>
    %93 = vector.broadcast %92 : vector<1x8x4xf32> to vector<2x8x4xf32>
    "tpu.trace_start"() <{level = 10 : i32, message = "gkm,gmp->gkp"}> : () -> ()
    %cst_55 = arith.constant dense<0.000000e+00> : vector<2x8x4xf32>
    %94 = tpu.matmul %70, %93, %cst_55 {dimension_numbers = #tpu.dot_dimension_numbers<[2], [1], [1], [2], [0, 0, 0, 1, 1, 2], [0], [0]>} : vector<2x8x8xf32>, vector<2x8x4xf32>, vector<2x8x4xf32> -> vector<2x8x4xf32>
    "tpu.trace_stop"() : () -> ()
    %95 = vector.shape_cast %87 : vector<4x8xf32> to vector<1x4x8xf32>
    %96 = vector.shape_cast %95 : vector<1x4x8xf32> to vector<1x4x8xf32>
    %97 = vector.broadcast %96 : vector<1x4x8xf32> to vector<2x4x8xf32>
    "tpu.trace_start"() <{level = 10 : i32, message = "gok,gkp->gop"}> : () -> ()
    %cst_56 = arith.constant dense<0.000000e+00> : vector<2x4x4xf32>
    %98 = tpu.matmul %97, %94, %cst_56 {dimension_numbers = #tpu.dot_dimension_numbers<[2], [1], [1], [2], [0, 0, 0, 1, 1, 2], [0], [0]>} : vector<2x4x8xf32>, vector<2x8x4xf32>, vector<2x4x4xf32> -> vector<2x4x4xf32>
    "tpu.trace_stop"() : () -> ()
    %99 = vector.shape_cast %90 : vector<4x8xf32> to vector<1x4x8xf32>
    %100 = vector.shape_cast %99 : vector<1x4x8xf32> to vector<1x4x8xf32>
    %101 = vector.broadcast %100 : vector<1x4x8xf32> to vector<2x4x8xf32>
    "tpu.trace_start"() <{level = 10 : i32, message = "gkm,gmp->gkp"}> : () -> ()
    %cst_57 = arith.constant dense<0.000000e+00> : vector<2x4x8xf32>
    %102 = tpu.matmul %98, %101, %cst_57 {dimension_numbers = #tpu.dot_dimension_numbers<[2], [1], [1], [2], [0, 0, 0, 1, 1, 2], [0], [0]>} : vector<2x4x4xf32>, vector<2x4x8xf32>, vector<2x4x8xf32> -> vector<2x4x8xf32>
    "tpu.trace_stop"() : () -> ()
    %103 = vector.shape_cast %89 : vector<8x4xf32> to vector<1x8x4xf32>
    %104 = vector.shape_cast %103 : vector<1x8x4xf32> to vector<1x8x4xf32>
    %105 = vector.broadcast %104 : vector<1x8x4xf32> to vector<2x8x4xf32>
    "tpu.trace_start"() <{level = 10 : i32, message = "gok,gkp->gop"}> : () -> ()
    %cst_58 = arith.constant dense<0.000000e+00> : vector<2x8x8xf32>
    %106 = tpu.matmul %105, %102, %cst_58 {dimension_numbers = #tpu.dot_dimension_numbers<[2], [1], [1], [2], [0, 0, 0, 1, 1, 2], [0], [0]>} : vector<2x8x4xf32>, vector<2x4x8xf32>, vector<2x8x8xf32> -> vector<2x8x8xf32>
    "tpu.trace_stop"() : () -> ()
    %107 = arith.subf %70, %106 : vector<2x8x8xf32>
    %108 = math.absf %107 : vector<2x8x8xf32>
    %109 = vector.shape_cast %108 : vector<2x8x8xf32> to vector<1x2x8x8xf32>
    %cst_59 = arith.constant dense<0.000000e+00> : vector<1xf32>
    %110 = vector.multi_reduction <add>, %109, %cst_59 [1, 2, 3] : vector<1x2x8x8xf32> to vector<1xf32>
    %111 = vector.shape_cast %110 : vector<1xf32> to vector<1x1x1x1xf32>
    %112 = vector.extract %111[0, 0, 0, 0] : f32 from vector<1x1x1x1xf32>
    %cst_60 = arith.constant 1.250000e-01 : f32
    %113 = arith.mulf %cst_60, %112 : f32
    %114 = arith.addf %86, %113 : f32
    %c0_61 = arith.constant 0 : index
    %c0_62 = arith.constant 0 : index
    %115 = vector.load %arg17[%c0_61, %c0_62] : memref<2x4xf32, #tpu.memory_space<vmem>>, vector<2x4xf32>
    %c0_63 = arith.constant 0 : index
    %c0_64 = arith.constant 0 : index
    %116 = vector.load %arg18[%c0_63, %c0_64] : memref<4x2xf32, #tpu.memory_space<vmem>>, vector<4x2xf32>
    %c0_65 = arith.constant 0 : index
    %c0_66 = arith.constant 0 : index
    %117 = vector.load %arg19[%c0_65, %c0_66] : memref<4x2xf32, #tpu.memory_space<vmem>>, vector<4x2xf32>
    %c0_67 = arith.constant 0 : index
    %c0_68 = arith.constant 0 : index
    %118 = vector.load %arg20[%c0_67, %c0_68] : memref<2x4xf32, #tpu.memory_space<vmem>>, vector<2x4xf32>
    %119 = vector.shape_cast %116 : vector<4x2xf32> to vector<1x4x2xf32>
    %120 = vector.shape_cast %119 : vector<1x4x2xf32> to vector<1x4x2xf32>
    %121 = vector.broadcast %120 : vector<1x4x2xf32> to vector<2x4x2xf32>
    "tpu.trace_start"() <{level = 10 : i32, message = "gkm,gmp->gkp"}> : () -> ()
    %cst_69 = arith.constant dense<0.000000e+00> : vector<2x4x2xf32>
    %122 = tpu.matmul %98, %121, %cst_69 {dimension_numbers = #tpu.dot_dimension_numbers<[2], [1], [1], [2], [0, 0, 0, 1, 1, 2], [0], [0]>} : vector<2x4x4xf32>, vector<2x4x2xf32>, vector<2x4x2xf32> -> vector<2x4x2xf32>
    "tpu.trace_stop"() : () -> ()
    %123 = vector.shape_cast %115 : vector<2x4xf32> to vector<1x2x4xf32>
    %124 = vector.shape_cast %123 : vector<1x2x4xf32> to vector<1x2x4xf32>
    %125 = vector.broadcast %124 : vector<1x2x4xf32> to vector<2x2x4xf32>
    "tpu.trace_start"() <{level = 10 : i32, message = "gok,gkp->gop"}> : () -> ()
    %cst_70 = arith.constant dense<0.000000e+00> : vector<2x2x2xf32>
    %126 = tpu.matmul %125, %122, %cst_70 {dimension_numbers = #tpu.dot_dimension_numbers<[2], [1], [1], [2], [0, 0, 0, 1, 1, 2], [0], [0]>} : vector<2x2x4xf32>, vector<2x4x2xf32>, vector<2x2x2xf32> -> vector<2x2x2xf32>
    "tpu.trace_stop"() : () -> ()
    %127 = vector.shape_cast %118 : vector<2x4xf32> to vector<1x2x4xf32>
    %128 = vector.shape_cast %127 : vector<1x2x4xf32> to vector<1x2x4xf32>
    %129 = vector.broadcast %128 : vector<1x2x4xf32> to vector<2x2x4xf32>
    "tpu.trace_start"() <{level = 10 : i32, message = "gkm,gmp->gkp"}> : () -> ()
    %cst_71 = arith.constant dense<0.000000e+00> : vector<2x2x4xf32>
    %130 = tpu.matmul %126, %129, %cst_71 {dimension_numbers = #tpu.dot_dimension_numbers<[2], [1], [1], [2], [0, 0, 0, 1, 1, 2], [0], [0]>} : vector<2x2x2xf32>, vector<2x2x4xf32>, vector<2x2x4xf32> -> vector<2x2x4xf32>
    "tpu.trace_stop"() : () -> ()
    %131 = vector.shape_cast %117 : vector<4x2xf32> to vector<1x4x2xf32>
    %132 = vector.shape_cast %131 : vector<1x4x2xf32> to vector<1x4x2xf32>
    %133 = vector.broadcast %132 : vector<1x4x2xf32> to vector<2x4x2xf32>
    "tpu.trace_start"() <{level = 10 : i32, message = "gok,gkp->gop"}> : () -> ()
    %cst_72 = arith.constant dense<0.000000e+00> : vector<2x4x4xf32>
    %134 = tpu.matmul %133, %130, %cst_72 {dimension_numbers = #tpu.dot_dimension_numbers<[2], [1], [1], [2], [0, 0, 0, 1, 1, 2], [0], [0]>} : vector<2x4x2xf32>, vector<2x2x4xf32>, vector<2x4x4xf32> -> vector<2x4x4xf32>
    "tpu.trace_stop"() : () -> ()
    %135 = arith.subf %98, %134 : vector<2x4x4xf32>
    %136 = math.absf %135 : vector<2x4x4xf32>
    %137 = vector.shape_cast %136 : vector<2x4x4xf32> to vector<1x2x4x4xf32>
    %cst_73 = arith.constant dense<0.000000e+00> : vector<1xf32>
    %138 = vector.multi_reduction <add>, %137, %cst_73 [1, 2, 3] : vector<1x2x4x4xf32> to vector<1xf32>
    %139 = vector.shape_cast %138 : vector<1xf32> to vector<1x1x1x1xf32>
    %140 = vector.extract %139[0, 0, 0, 0] : f32 from vector<1x1x1x1xf32>
    %cst_74 = arith.constant 1.000000e+00 : f32
    %141 = arith.mulf %cst_74, %140 : f32
    %142 = arith.addf %114, %141 : f32
    %c0_75 = arith.constant 0 : index
    %c0_76 = arith.constant 0 : index
    %143 = memref.load %arg23[%c0_75, %c0_76] : memref<1x1xf32, #tpu.memory_space<smem>>
    memref.store %142, %arg23[%c0_75, %c0_76] : memref<1x1xf32, #tpu.memory_space<smem>>
    return
  }
  func.func @transform_0(%arg0: i32) -> (i32, i32) {
    %c0_i32 = arith.constant 0 : i32
    %c0_i32_0 = arith.constant 0 : i32
    %c0_i32_1 = arith.constant 0 : i32
    return %c0_i32, %c0_i32_0 : i32, i32
  }
  func.func @transform_1(%arg0: i32) -> (i32, i32) {
    %c0_i32 = arith.constant 0 : i32
    %c0_i32_0 = arith.constant 0 : i32
    %c0_i32_1 = arith.constant 0 : i32
    return %c0_i32, %c0_i32_0 : i32, i32
  }
  func.func @transform_2(%arg0: i32) -> (i32, i32) {
    %c0_i32 = arith.constant 0 : i32
    %c0_i32_0 = arith.constant 0 : i32
    %c0_i32_1 = arith.constant 0 : i32
    return %c0_i32, %c0_i32_0 : i32, i32
  }
  func.func @transform_3(%arg0: i32) -> (i32, i32) {
    %c0_i32 = arith.constant 0 : i32
    %c0_i32_0 = arith.constant 0 : i32
    %c0_i32_1 = arith.constant 0 : i32
    return %c0_i32, %c0_i32_0 : i32, i32
  }
  func.func @transform_4(%arg0: i32) -> (i32, i32) {
    %c0_i32 = arith.constant 0 : i32
    %c0_i32_0 = arith.constant 0 : i32
    %c0_i32_1 = arith.constant 0 : i32
    return %c0_i32, %c0_i32_0 : i32, i32
  }
  func.func @transform_5(%arg0: i32) -> (i32, i32) {
    %c0_i32 = arith.constant 0 : i32
    %c0_i32_0 = arith.constant 0 : i32
    %c0_i32_1 = arith.constant 0 : i32
    return %c0_i32, %c0_i32_0 : i32, i32
  }
  func.func @transform_6(%arg0: i32) -> (i32, i32) {
    %c0_i32 = arith.constant 0 : i32
    %c0_i32_0 = arith.constant 0 : i32
    %c0_i32_1 = arith.constant 0 : i32
    return %c0_i32, %c0_i32_0 : i32, i32
  }
  func.func @transform_7(%arg0: i32) -> (i32, i32) {
    %c0_i32 = arith.constant 0 : i32
    %c0_i32_0 = arith.constant 0 : i32
    %c0_i32_1 = arith.constant 0 : i32
    return %c0_i32, %c0_i32_0 : i32, i32
  }
  func.func @transform_8(%arg0: i32) -> (i32, i32) {
    %c0_i32 = arith.constant 0 : i32
    %c0_i32_0 = arith.constant 0 : i32
    %c0_i32_1 = arith.constant 0 : i32
    return %c0_i32, %c0_i32_0 : i32, i32
  }
  func.func @transform_9(%arg0: i32) -> (i32, i32) {
    %c0_i32 = arith.constant 0 : i32
    %c0_i32_0 = arith.constant 0 : i32
    %c0_i32_1 = arith.constant 0 : i32
    return %c0_i32, %c0_i32_0 : i32, i32
  }
  func.func @transform_10(%arg0: i32) -> (i32, i32) {
    %c0_i32 = arith.constant 0 : i32
    %c0_i32_0 = arith.constant 0 : i32
    %c0_i32_1 = arith.constant 0 : i32
    return %c0_i32, %c0_i32_0 : i32, i32
  }
  func.func @transform_11(%arg0: i32) -> (i32, i32) {
    %c0_i32 = arith.constant 0 : i32
    %c0_i32_0 = arith.constant 0 : i32
    %c0_i32_1 = arith.constant 0 : i32
    return %c0_i32, %c0_i32_0 : i32, i32
  }
  func.func @transform_12(%arg0: i32) -> (i32, i32) {
    %c0_i32 = arith.constant 0 : i32
    %c0_i32_0 = arith.constant 0 : i32
    %c0_i32_1 = arith.constant 0 : i32
    return %c0_i32, %c0_i32_0 : i32, i32
  }
  func.func @transform_13(%arg0: i32) -> (i32, i32) {
    %c0_i32 = arith.constant 0 : i32
    %c0_i32_0 = arith.constant 0 : i32
    %c0_i32_1 = arith.constant 0 : i32
    return %c0_i32, %c0_i32_0 : i32, i32
  }
  func.func @transform_14(%arg0: i32) -> (i32, i32) {
    %c0_i32 = arith.constant 0 : i32
    %c0_i32_0 = arith.constant 0 : i32
    %c0_i32_1 = arith.constant 0 : i32
    return %c0_i32, %c0_i32_0 : i32, i32
  }
  func.func @transform_15(%arg0: i32) -> (i32, i32) {
    %c0_i32 = arith.constant 0 : i32
    %c0_i32_0 = arith.constant 0 : i32
    %c0_i32_1 = arith.constant 0 : i32
    return %c0_i32, %c0_i32_0 : i32, i32
  }
  func.func @transform_16(%arg0: i32) -> (i32, i32) {
    %c0_i32 = arith.constant 0 : i32
    %c0_i32_0 = arith.constant 0 : i32
    %c0_i32_1 = arith.constant 0 : i32
    return %c0_i32, %c0_i32_0 : i32, i32
  }
  func.func @transform_17(%arg0: i32) -> (i32, i32) {
    %c0_i32 = arith.constant 0 : i32
    %c0_i32_0 = arith.constant 0 : i32
    %c0_i32_1 = arith.constant 0 : i32
    return %c0_i32, %c0_i32_0 : i32, i32
  }
  func.func @transform_18(%arg0: i32) -> (i32, i32) {
    %c0_i32 = arith.constant 0 : i32
    %c0_i32_0 = arith.constant 0 : i32
    %c0_i32_1 = arith.constant 0 : i32
    return %c0_i32, %c0_i32_0 : i32, i32
  }
  func.func @transform_19(%arg0: i32) -> (i32, i32) {
    %c0_i32 = arith.constant 0 : i32
    %c0_i32_0 = arith.constant 0 : i32
    %c0_i32_1 = arith.constant 0 : i32
    return %c0_i32, %c0_i32_0 : i32, i32
  }
  func.func @transform_20(%arg0: i32) -> (i32, i32, i32) {
    %c0_i32 = arith.constant 0 : i32
    %c0_i32_0 = arith.constant 0 : i32
    %c0_i32_1 = arith.constant 0 : i32
    return %arg0, %c0_i32, %c0_i32_0 : i32, i32, i32
  }
  func.func @transform_21(%arg0: i32) -> (i32, i32, i32) {
    %c0_i32 = arith.constant 0 : i32
    %c0_i32_0 = arith.constant 0 : i32
    %c0_i32_1 = arith.constant 0 : i32
    return %arg0, %c0_i32, %c0_i32_0 : i32, i32, i32
  }
  func.func @transform_22(%arg0: i32) -> (i32, i32) {
    %c0_i32 = arith.constant 0 : i32
    %c0_i32_0 = arith.constant 0 : i32
    return %arg0, %c0_i32 : i32, i32
  }
}

</mosaic_0001>

<llo_original>
// kernel: lap_loss.1
$region0: #{lap_loss.1}
  #allocation0 [shape = 'u32[]', space=smem, size = 0x4, offset = 0x4, fixed_abs, tag = 'smem constant byte address 0x4 - core index']
  #allocation1 [shape = 'u32[144,128]{1,0:T(1,128)}', space=vmem, size = 0x12000, scoped, tag = 'internal scratch']
  %s0 = inlined_call_operand.hbm [shape: f32[32,64], index: 0, kind: input, shape index: {}]
  %s1 = inlined_call_operand.hbm [shape: f32[64,32], index: 1, kind: input, shape index: {}]
  %s2 = inlined_call_operand.hbm [shape: f32[64,32], index: 2, kind: input, shape index: {}]
  %s3 = inlined_call_operand.hbm [shape: f32[32,64], index: 3, kind: input, shape index: {}]
  %s4 = inlined_call_operand.hbm [shape: f32[16,32], index: 4, kind: input, shape index: {}]
  %s5 = inlined_call_operand.hbm [shape: f32[32,16], index: 5, kind: input, shape index: {}]
  %s6 = inlined_call_operand.vmem [shape: f32[32,16], index: 6, kind: input, shape index: {}]
  %s7 = inlined_call_operand.hbm [shape: f32[16,32], index: 7, kind: input, shape index: {}]
  %s8 = inlined_call_operand.hbm [shape: f32[8,16], index: 8, kind: input, shape index: {}]
  %s9 = inlined_call_operand.hbm [shape: f32[16,8], index: 9, kind: input, shape index: {}]
  %s10 = inlined_call_operand.vmem [shape: f32[16,8], index: 10, kind: input, shape index: {}]
  %s11 = inlined_call_operand.hbm [shape: f32[8,16], index: 11, kind: input, shape index: {}]
  %s12 = inlined_call_operand.hbm [shape: f32[4,8], index: 12, kind: input, shape index: {}]
  %s13 = inlined_call_operand.vmem [shape: f32[8,4], index: 13, kind: input, shape index: {}]
  %s14 = inlined_call_operand.vmem [shape: f32[8,4], index: 14, kind: input, shape index: {}]
  %s15 = inlined_call_operand.hbm [shape: f32[4,8], index: 15, kind: input, shape index: {}]
  %s16 = inlined_call_operand.vmem [shape: f32[2,4], index: 16, kind: input, shape index: {}]
  %s17 = inlined_call_operand.vmem [shape: f32[4,2], index: 17, kind: input, shape index: {}]
  %s18 = inlined_call_operand.vmem [shape: f32[4,2], index: 18, kind: input, shape index: {}]
  %s19 = inlined_call_operand.vmem [shape: f32[2,4], index: 19, kind: input, shape index: {}]
  %s20 = inlined_call_operand.hbm [shape: f32[2,64,64], index: 20, kind: input, shape index: {}]
  %s21 = inlined_call_operand.hbm [shape: f32[2,64,64], index: 21, kind: input, shape index: {}]
  %s22 = inlined_call_operand.hbm [shape: f32[1,1], index: 22, kind: output, shape index: {}]
  %s23 = sld [smem:[#allocation0]]
  $region154: #{lap_loss.1} parent=0
    _
  %s25 = ssub.s32 1, %s23
  %s26 = scalar_select 0, %s25, %s23
  $region1: #{lap_loss.1} parent=0
    #allocation2 [shape = 'u8[16384]{0}', space=vmem, size = 0x4000, scoped, tag = 'input window, operand 0, single buffered']
    #allocation3 [shape = 's32[1]{0}', space=sflag, size = 0x4, scoped, tag = 'scoped memory for lap_loss.1']
    #allocation4 [shape = 's32[1]{0}', space=sflag, size = 0x4, scoped, tag = 'scoped memory for lap_loss.1']
    #allocation5 [shape = 'u8[32768]{0}', space=vmem, size = 0x8000, scoped, tag = 'input window, operand 1, single buffered']
    #allocation6 [shape = 's32[1]{0}', space=sflag, size = 0x4, scoped, tag = 'scoped memory for lap_loss.1']
    #allocation7 [shape = 'u8[32768]{0}', space=vmem, size = 0x8000, scoped, tag = 'input window, operand 2, single buffered']
    #allocation8 [shape = 'u8[16384]{0}', space=vmem, size = 0x4000, scoped, tag = 'input window, operand 3, single buffered']
    #allocation9 [shape = 's32[1]{0}', space=sflag, size = 0x4, scoped, tag = 'scoped memory for lap_loss.1']
    #allocation10 [shape = 'u8[8192]{0}', space=vmem, size = 0x2000, scoped, tag = 'input window, operand 4, single buffered']
    #allocation11 [shape = 'u8[16384]{0}', space=vmem, size = 0x4000, scoped, tag = 'input window, operand 5, single buffered']
    #allocation12 [shape = 's32[1]{0}', space=sflag, size = 0x4, scoped, tag = 'scoped memory for lap_loss.1']
    #allocation13 [shape = 'u8[8192]{0}', space=vmem, size = 0x2000, scoped, tag = 'input window, operand 7, single buffered']
    #allocation14 [shape = 'u8[4096]{0}', space=vmem, size = 0x1000, scoped, tag = 'input window, operand 8, single buffered']
    #allocation15 [shape = 's32[1]{0}', space=sflag, size = 0x4, scoped, tag = 'scoped memory for lap_loss.1']
    #allocation16 [shape = 'u8[8192]{0}', space=vmem, size = 0x2000, scoped, tag = 'input window, operand 9, single buffered']
    #allocation17 [shape = 'u8[4096]{0}', space=vmem, size = 0x1000, scoped, tag = 'input window, operand 11, single buffered']
    #allocation18 [shape = 's32[1]{0}', space=sflag, size = 0x4, scoped, tag = 'scoped memory for lap_loss.1']
    #allocation19 [shape = 'u8[2048]{0}', space=vmem, size = 0x800, scoped, tag = 'input window, operand 12, single buffered']
    #allocation20 [shape = 'u8[2048]{0}', space=vmem, size = 0x800, scoped, tag = 'input window, operand 15, single buffered']
    #allocation21 [shape = 's32[1]{0}', space=sflag, size = 0x4, scoped, tag = 'scoped memory for lap_loss.1']
    #allocation22 [shape = 'u8[65536]{0}', space=vmem, size = 0x10000, scoped, tag = 'input window, operand 20, single buffered']
    #allocation23 [shape = 'u8[65536]{0}', space=vmem, size = 0x10000, scoped, tag = 'input window, operand 21, single buffered']
    #allocation24 [shape = 's32[1]{0}', space=sflag, size = 0x4, scoped, tag = 'scoped memory for lap_loss.1']
    #allocation25 [shape = 'u8[512]{0}', space=smem, size = 0x200, scoped, tag = 'output window, operand 0, single buffered']
    %27 = vsyncpa [#allocation3], 0
    %28 = vsyncpa [#allocation6], 0
    %29 = vsyncpa [#allocation9], 0
    %30 = vsyncpa [#allocation12], 0
    %31 = vsyncpa [#allocation15], 0
    %32 = vsyncpa [#allocation18], 0
    %33 = vsyncpa [#allocation21], 0
    %34 = vsyncpa [#allocation24], 0
    %35 = vsyncpa [#allocation4], 0
    // Predicated region
    $region2: #{lap_loss.1} parent=1 // pred_check
      _
    $region3: #{lap_loss.1} parent=1 // pred_check_branch
      %37 = sbr.rel (0) target = $region5
    $region4: #{lap_loss.1} parent=1 // pred_region
      %s39 = ssub.s32 512, 512
      %40 = vsyncadd [#allocation3], %s39
      %s41 = sshll.u32 [#allocation2], 4
      %s42 = int_to_ptr.vmem [resolvable:$true] %s41
      %47 = dma.hbm_to_vmem [thread:$0]  %s0, 512, %s42, [#allocation3], 128, 128, 8
    $region5: #{lap_loss.1} parent=1 // pred_fallthru
      _
    // Predicated region
    $region6: #{lap_loss.1} parent=1 // pred_check
      _
    $region7: #{lap_loss.1} parent=1 // pred_check_branch
      %49 = sbr.rel (0) target = $region9
    $region8: #{lap_loss.1} parent=1 // pred_region
      %s51 = ssub.s32 1024, 1024
      %52 = vsyncadd [#allocation6], %s51
      %s53 = sshll.u32 [#allocation5], 4
      %s54 = int_to_ptr.vmem [resolvable:$true] %s53
      %59 = dma.hbm_to_vmem [thread:$0]  %s1, 1024, %s54, [#allocation6], 128, 128, 8
    $region9: #{lap_loss.1} parent=1 // pred_fallthru
      _
    // Predicated region
    $region10: #{lap_loss.1} parent=1 // pred_check
      _
    $region11: #{lap_loss.1} parent=1 // pred_check_branch
      %61 = sbr.rel (0) target = $region13
    $region12: #{lap_loss.1} parent=1 // pred_region
      %s63 = ssub.s32 1024, 1024
      %64 = vsyncadd [#allocation6], %s63
      %s65 = sshll.u32 [#allocation7], 4
      %s66 = int_to_ptr.vmem [resolvable:$true] %s65
      %71 = dma.hbm_to_vmem [thread:$0]  %s2, 1024, %s66, [#allocation6], 128, 128, 8
    $region13: #{lap_loss.1} parent=1 // pred_fallthru
      _
    // Predicated region
    $region14: #{lap_loss.1} parent=1 // pred_check
      _
    $region15: #{lap_loss.1} parent=1 // pred_check_branch
      %73 = sbr.rel (0) target = $region17
    $region16: #{lap_loss.1} parent=1 // pred_region
      %s75 = ssub.s32 512, 512
      %76 = vsyncadd [#allocation9], %s75
      %s77 = sshll.u32 [#allocation8], 4
      %s78 = int_to_ptr.vmem [resolvable:$true] %s77
      %83 = dma.hbm_to_vmem [thread:$0]  %s3, 512, %s78, [#allocation9], 128, 128, 8
    $region17: #{lap_loss.1} parent=1 // pred_fallthru
      _
    // Predicated region
    $region18: #{lap_loss.1} parent=1 // pred_check
      _
    $region19: #{lap_loss.1} parent=1 // pred_check_branch
      %85 = sbr.rel (0) target = $region21
    $region20: #{lap_loss.1} parent=1 // pred_region
      %s87 = ssub.s32 256, 256
      %88 = vsyncadd [#allocation9], %s87
      %s89 = sshll.u32 [#allocation10], 4
      %s90 = int_to_ptr.vmem [resolvable:$true] %s89
      %95 = dma.hbm_to_vmem [thread:$0]  %s4, 256, %s90, [#allocation9], 128, 128, 8
    $region21: #{lap_loss.1} parent=1 // pred_fallthru
      _
    // Predicated region
    $region22: #{lap_loss.1} parent=1 // pred_check
      _
    $region23: #{lap_loss.1} parent=1 // pred_check_branch
      %97 = sbr.rel (0) target = $region25
    $region24: #{lap_loss.1} parent=1 // pred_region
      %s99 = ssub.s32 512, 512
      %100 = vsyncadd [#allocation12], %s99
      %s101 = sshll.u32 [#allocation11], 4
      %s102 = int_to_ptr.vmem [resolvable:$true] %s101
      %107 = dma.hbm_to_vmem [thread:$0]  %s5, 512, %s102, [#allocation12], 128, 128, 8
    $region25: #{lap_loss.1} parent=1 // pred_fallthru
      _
    // Predicated region
    $region26: #{lap_loss.1} parent=1 // pred_check
      _
    $region27: #{lap_loss.1} parent=1 // pred_check_branch
      %109 = sbr.rel (0) target = $region29
    $region28: #{lap_loss.1} parent=1 // pred_region
      _
    $region29: #{lap_loss.1} parent=1 // pred_fallthru
      _
    // Predicated region
    $region30: #{lap_loss.1} parent=1 // pred_check
      _
    $region31: #{lap_loss.1} parent=1 // pred_check_branch
      %111 = sbr.rel (0) target = $region33
    $region32: #{lap_loss.1} parent=1 // pred_region
      %s113 = ssub.s32 256, 256
      %114 = vsyncadd [#allocation12], %s113
      %s115 = sshll.u32 [#allocation13], 4
      %s116 = int_to_ptr.vmem [resolvable:$true] %s115
      %121 = dma.hbm_to_vmem [thread:$0]  %s7, 256, %s116, [#allocation12], 128, 128, 8
    $region33: #{lap_loss.1} parent=1 // pred_fallthru
      _
    // Predicated region
    $region34: #{lap_loss.1} parent=1 // pred_check
      _
    $region35: #{lap_loss.1} parent=1 // pred_check_branch
      %123 = sbr.rel (0) target = $region37
    $region36: #{lap_loss.1} parent=1 // pred_region
      %s125 = ssub.s32 128, 128
      %126 = vsyncadd [#allocation15], %s125
      %s128 = sshll.u32 [#allocation14], 4
      %s129 = int_to_ptr.vmem [resolvable:$true] %s128
      %131 = dma.hbm_to_vmem [thread:$0]  %s8, 128, %s129, [#allocation15]
    $region37: #{lap_loss.1} parent=1 // pred_fallthru
      _
    // Predicated region
    $region38: #{lap_loss.1} parent=1 // pred_check
      _
    $region39: #{lap_loss.1} parent=1 // pred_check_branch
      %133 = sbr.rel (0) target = $region41
    $region40: #{lap_loss.1} parent=1 // pred_region
      %s135 = ssub.s32 256, 256
      %136 = vsyncadd [#allocation15], %s135
      %s137 = sshll.u32 [#allocation16], 4
      %s138 = int_to_ptr.vmem [resolvable:$true] %s137
      %143 = dma.hbm_to_vmem [thread:$0]  %s9, 256, %s138, [#allocation15], 128, 128, 8
    $region41: #{lap_loss.1} parent=1 // pred_fallthru
      _
    // Predicated region
    $region42: #{lap_loss.1} parent=1 // pred_check
      _
    $region43: #{lap_loss.1} parent=1 // pred_check_branch
      %145 = sbr.rel (0) target = $region45
    $region44: #{lap_loss.1} parent=1 // pred_region
      _
    $region45: #{lap_loss.1} parent=1 // pred_fallthru
      _
    // Predicated region
    $region46: #{lap_loss.1} parent=1 // pred_check
      _
    $region47: #{lap_loss.1} parent=1 // pred_check_branch
      %147 = sbr.rel (0) target = $region49
    $region48: #{lap_loss.1} parent=1 // pred_region
      %s149 = ssub.s32 128, 128
      %150 = vsyncadd [#allocation18], %s149
      %s152 = sshll.u32 [#allocation17], 4
      %s153 = int_to_ptr.vmem [resolvable:$true] %s152
      %155 = dma.hbm_to_vmem [thread:$0]  %s11, 128, %s153, [#allocation18]
    $region49: #{lap_loss.1} parent=1 // pred_fallthru
      _
    // Predicated region
    $region50: #{lap_loss.1} parent=1 // pred_check
      _
    $region51: #{lap_loss.1} parent=1 // pred_check_branch
      %157 = sbr.rel (0) target = $region53
    $region52: #{lap_loss.1} parent=1 // pred_region
      %s159 = ssub.s32 64, 64
      %160 = vsyncadd [#allocation18], %s159
      %s162 = sshll.u32 [#allocation19], 4
      %s163 = int_to_ptr.vmem [resolvable:$true] %s162
      %165 = dma.hbm_to_vmem [thread:$0]  %s12, 64, %s163, [#allocation18]
    $region53: #{lap_loss.1} parent=1 // pred_fallthru
      _
    // Predicated region
    $region54: #{lap_loss.1} parent=1 // pred_check
      _
    $region55: #{lap_loss.1} parent=1 // pred_check_branch
      %167 = sbr.rel (0) target = $region57
    $region56: #{lap_loss.1} parent=1 // pred_region
      _
    $region57: #{lap_loss.1} parent=1 // pred_fallthru
      _
    // Predicated region
    $region58: #{lap_loss.1} parent=1 // pred_check
      _
    $region59: #{lap_loss.1} parent=1 // pred_check_branch
      %169 = sbr.rel (0) target = $region61
    $region60: #{lap_loss.1} parent=1 // pred_region
      _
    $region61: #{lap_loss.1} parent=1 // pred_fallthru
      _
    // Predicated region
    $region62: #{lap_loss.1} parent=1 // pred_check
      _
    $region63: #{lap_loss.1} parent=1 // pred_check_branch
      %171 = sbr.rel (0) target = $region65
    $region64: #{lap_loss.1} parent=1 // pred_region
      %s173 = ssub.s32 64, 64
      %174 = vsyncadd [#allocation21], %s173
      %s176 = sshll.u32 [#allocation20], 4
      %s177 = int_to_ptr.vmem [resolvable:$true] %s176
      %179 = dma.hbm_to_vmem [thread:$0]  %s15, 64, %s177, [#allocation21]
    $region65: #{lap_loss.1} parent=1 // pred_fallthru
      _
    // Predicated region
    $region66: #{lap_loss.1} parent=1 // pred_check
      _
    $region67: #{lap_loss.1} parent=1 // pred_check_branch
      %181 = sbr.rel (0) target = $region69
    $region68: #{lap_loss.1} parent=1 // pred_region
      _
    $region69: #{lap_loss.1} parent=1 // pred_fallthru
      _
    // Predicated region
    $region70: #{lap_loss.1} parent=1 // pred_check
      _
    $region71: #{lap_loss.1} parent=1 // pred_check_branch
      %183 = sbr.rel (0) target = $region73
    $region72: #{lap_loss.1} parent=1 // pred_region
      _
    $region73: #{lap_loss.1} parent=1 // pred_fallthru
      _
    // Predicated region
    $region74: #{lap_loss.1} parent=1 // pred_check
      _
    $region75: #{lap_loss.1} parent=1 // pred_check_branch
      %185 = sbr.rel (0) target = $region77
    $region76: #{lap_loss.1} parent=1 // pred_region
      _
    $region77: #{lap_loss.1} parent=1 // pred_fallthru
      _
    // Predicated region
    $region78: #{lap_loss.1} parent=1 // pred_check
      _
    $region79: #{lap_loss.1} parent=1 // pred_check_branch
      %187 = sbr.rel (0) target = $region81
    $region80: #{lap_loss.1} parent=1 // pred_region
      _
    $region81: #{lap_loss.1} parent=1 // pred_fallthru
      _
    // Predicated region
    $region82: #{lap_loss.1} parent=1 // pred_check
      _
    $region83: #{lap_loss.1} parent=1 // pred_check_branch
      %189 = sbr.rel (0) target = $region85
    $region84: #{lap_loss.1} parent=1 // pred_region
      %s191 = ssub.s32 2048, 2048
      %192 = vsyncadd [#allocation21], %s191
      %s193 = sshll.u32 [#allocation22], 4
      %s194 = int_to_ptr.vmem [resolvable:$true] %s193
      %199 = dma.hbm_to_vmem [thread:$0]  %s20, 2048, %s194, [#allocation21], 128, 128, 8
    $region85: #{lap_loss.1} parent=1 // pred_fallthru
      _
    // Predicated region
    $region86: #{lap_loss.1} parent=1 // pred_check
      _
    $region87: #{lap_loss.1} parent=1 // pred_check_branch
      %201 = sbr.rel (0) target = $region89
    $region88: #{lap_loss.1} parent=1 // pred_region
      %s203 = ssub.s32 2048, 2048
      %204 = vsyncadd [#allocation24], %s203
      %s205 = sshll.u32 [#allocation23], 4
      %s206 = int_to_ptr.vmem [resolvable:$true] %s205
      %211 = dma.hbm_to_vmem [thread:$0]  %s21, 2048, %s206, [#allocation24], 128, 128, 8
    $region89: #{lap_loss.1} parent=1 // pred_fallthru
      _
    // Predicated region
    $region90: #{lap_loss.1} parent=1 // pred_check
      _
    $region91: #{lap_loss.1} parent=1 // pred_check_branch
      %213 = sbr.rel (0) target = $region93
    $region92: #{lap_loss.1} parent=1 // pred_region
      %214 = dma.done [#allocation3], 512
    $region93: #{lap_loss.1} parent=1 // pred_fallthru
      _
    // Predicated region
    $region94: #{lap_loss.1} parent=1 // pred_check
      _
    $region95: #{lap_loss.1} parent=1 // pred_check_branch
      %216 = sbr.rel (0) target = $region97
    $region96: #{lap_loss.1} parent=1 // pred_region
      %217 = dma.done [#allocation6], 1024
    $region97: #{lap_loss.1} parent=1 // pred_fallthru
      _
    // Predicated region
    $region98: #{lap_loss.1} parent=1 // pred_check
      _
    $region99: #{lap_loss.1} parent=1 // pred_check_branch
      %219 = sbr.rel (0) target = $region101
    $region100: #{lap_loss.1} parent=1 // pred_region
      %220 = dma.done [#allocation6], 1024
    $region101: #{lap_loss.1} parent=1 // pred_fallthru
      _
    // Predicated region
    $region102: #{lap_loss.1} parent=1 // pred_check
      _
    $region103: #{lap_loss.1} parent=1 // pred_check_branch
      %222 = sbr.rel (0) target = $region105
    $region104: #{lap_loss.1} parent=1 // pred_region
      %223 = dma.done [#allocation9], 512
    $region105: #{lap_loss.1} parent=1 // pred_fallthru
      _
    // Predicated region
    $region106: #{lap_loss.1} parent=1 // pred_check
      _
    $region107: #{lap_loss.1} parent=1 // pred_check_branch
      %225 = sbr.rel (0) target = $region109
    $region108: #{lap_loss.1} parent=1 // pred_region
      %226 = dma.done [#allocation9], 256
    $region109: #{lap_loss.1} parent=1 // pred_fallthru
      _
    // Predicated region
    $region110: #{lap_loss.1} parent=1 // pred_check
      _
    $region111: #{lap_loss.1} parent=1 // pred_check_branch
      %228 = sbr.rel (0) target = $region113
    $region112: #{lap_loss.1} parent=1 // pred_region
      %229 = dma.done [#allocation12], 512
    $region113: #{lap_loss.1} parent=1 // pred_fallthru
      _
    // Predicated region
    $region114: #{lap_loss.1} parent=1 // pred_check
      _
    $region115: #{lap_loss.1} parent=1 // pred_check_branch
      %231 = sbr.rel (0) target = $region117
    $region116: #{lap_loss.1} parent=1 // pred_region
      %232 = dma.done [#allocation12], 256
    $region117: #{lap_loss.1} parent=1 // pred_fallthru
      _
    // Predicated region
    $region118: #{lap_loss.1} parent=1 // pred_check
      _
    $region119: #{lap_loss.1} parent=1 // pred_check_branch
      %234 = sbr.rel (0) target = $region121
    $region120: #{lap_loss.1} parent=1 // pred_region
      %235 = dma.done [#allocation15], 128
    $region121: #{lap_loss.1} parent=1 // pred_fallthru
      _
    // Predicated region
    $region122: #{lap_loss.1} parent=1 // pred_check
      _
    $region123: #{lap_loss.1} parent=1 // pred_check_branch
      %237 = sbr.rel (0) target = $region125
    $region124: #{lap_loss.1} parent=1 // pred_region
      %238 = dma.done [#allocation15], 256
    $region125: #{lap_loss.1} parent=1 // pred_fallthru
      _
    // Predicated region
    $region126: #{lap_loss.1} parent=1 // pred_check
      _
    $region127: #{lap_loss.1} parent=1 // pred_check_branch
      %240 = sbr.rel (0) target = $region129
    $region128: #{lap_loss.1} parent=1 // pred_region
      %241 = dma.done [#allocation18], 128
    $region129: #{lap_loss.1} parent=1 // pred_fallthru
      _
    // Predicated region
    $region130: #{lap_loss.1} parent=1 // pred_check
      _
    $region131: #{lap_loss.1} parent=1 // pred_check_branch
      %243 = sbr.rel (0) target = $region133
    $region132: #{lap_loss.1} parent=1 // pred_region
      %244 = dma.done [#allocation18], 64
    $region133: #{lap_loss.1} parent=1 // pred_fallthru
      _
    // Predicated region
    $region134: #{lap_loss.1} parent=1 // pred_check
      _
    $region135: #{lap_loss.1} parent=1 // pred_check_branch
      %246 = sbr.rel (0) target = $region137
    $region136: #{lap_loss.1} parent=1 // pred_region
      %247 = dma.done [#allocation21], 64
    $region137: #{lap_loss.1} parent=1 // pred_fallthru
      _
    // Predicated region
    $region138: #{lap_loss.1} parent=1 // pred_check
      _
    $region139: #{lap_loss.1} parent=1 // pred_check_branch
      %249 = sbr.rel (0) target = $region141
    $region140: #{lap_loss.1} parent=1 // pred_region
      %250 = dma.done [#allocation21], 2048
    $region141: #{lap_loss.1} parent=1 // pred_fallthru
      _
    // Predicated region
    $region142: #{lap_loss.1} parent=1 // pred_check
      _
    $region143: #{lap_loss.1} parent=1 // pred_check_branch
      %252 = sbr.rel (0) target = $region145
    $region144: #{lap_loss.1} parent=1 // pred_region
      %253 = dma.done [#allocation24], 2048
    $region145: #{lap_loss.1} parent=1 // pred_fallthru
      _
    %v254 = vld [vmem:[#allocation22] sm:$0xff]
    %v255 = vld [vmem:[#allocation22 + $0x8] sm:$0xff]
    %v256 = vld [vmem:[#allocation22 + $0x10] sm:$0xff]
    %v257 = vld [vmem:[#allocation22 + $0x18] sm:$0xff]
    %v258 = vld [vmem:[#allocation22 + $0x20] sm:$0xff]
    %v259 = vld [vmem:[#allocation22 + $0x28] sm:$0xff]
    %v260 = vld [vmem:[#allocation22 + $0x30] sm:$0xff]
    %v261 = vld [vmem:[#allocation22 + $0x38] sm:$0xff]
    %v262 = vld [vmem:[#allocation22 + $0x40] sm:$0xff]
    %v263 = vld [vmem:[#allocation22 + $0x48] sm:$0xff]
    %v264 = vld [vmem:[#allocation22 + $0x50] sm:$0xff]
    %v265 = vld [vmem:[#allocation22 + $0x58] sm:$0xff]
    %v266 = vld [vmem:[#allocation22 + $0x60] sm:$0xff]
    %v267 = vld [vmem:[#allocation22 + $0x68] sm:$0xff]
    %v268 = vld [vmem:[#allocation22 + $0x70] sm:$0xff]
    %v269 = vld [vmem:[#allocation22 + $0x78] sm:$0xff]
    %v270 = vld [vmem:[#allocation23] sm:$0xff]
    %v271 = vld [vmem:[#allocation23 + $0x8] sm:$0xff]
    %v272 = vld [vmem:[#allocation23 + $0x10] sm:$0xff]
    %v273 = vld [vmem:[#allocation23 + $0x18] sm:$0xff]
    %v274 = vld [vmem:[#allocation23 + $0x20] sm:$0xff]
    %v275 = vld [vmem:[#allocation23 + $0x28] sm:$0xff]
    %v276 = vld [vmem:[#allocation23 + $0x30] sm:$0xff]
    %v277 = vld [vmem:[#allocation23 + $0x38] sm:$0xff]
    %v278 = vld [vmem:[#allocation23 + $0x40] sm:$0xff]
    %v279 = vld [vmem:[#allocation23 + $0x48] sm:$0xff]
    %v280 = vld [vmem:[#allocation23 + $0x50] sm:$0xff]
    %v281 = vld [vmem:[#allocation23 + $0x58] sm:$0xff]
    %v282 = vld [vmem:[#allocation23 + $0x60] sm:$0xff]
    %v283 = vld [vmem:[#allocation23 + $0x68] sm:$0xff]
    %v284 = vld [vmem:[#allocation23 + $0x70] sm:$0xff]
    %v285 = vld [vmem:[#allocation23 + $0x78] sm:$0xff]
    %v286 = vsub.f32 %v254, %v270
    %v287 = vsub.f32 %v255, %v271
    %v288 = vsub.f32 %v256, %v272
    %v289 = vsub.f32 %v257, %v273
    %v290 = vsub.f32 %v258, %v274
    %v291 = vsub.f32 %v259, %v275
    %v292 = vsub.f32 %v260, %v276
    %v293 = vsub.f32 %v261, %v277
    %v294 = vsub.f32 %v262, %v278
    %v295 = vsub.f32 %v263, %v279
    %v296 = vsub.f32 %v264, %v280
    %v297 = vsub.f32 %v265, %v281
    %v298 = vsub.f32 %v266, %v282
    %v299 = vsub.f32 %v267, %v283
    %v300 = vsub.f32 %v268, %v284
    %v301 = vsub.f32 %v269, %v285
    %v302 = vld [vmem:[#allocation2] sm:$0xff]
    %v303 = vld [vmem:[#allocation2 + $0x8] sm:$0xff]
    %v304 = vld [vmem:[#allocation2 + $0x10] sm:$0xff]
    %v305 = vld [vmem:[#allocation2 + $0x18] sm:$0xff]
    %v306 = vld [vmem:[#allocation5] sm:$0xff]
    %v307 = vld [vmem:[#allocation5 + $0x8] sm:$0xff]
    %v308 = vld [vmem:[#allocation5 + $0x10] sm:$0xff]
    %v309 = vld [vmem:[#allocation5 + $0x18] sm:$0xff]
    %v310 = vld [vmem:[#allocation5 + $0x20] sm:$0xff]
    %v311 = vld [vmem:[#allocation5 + $0x28] sm:$0xff]
    %v312 = vld [vmem:[#allocation5 + $0x30] sm:$0xff]
    %v313 = vld [vmem:[#allocation5 + $0x38] sm:$0xff]
    %v314 = vld [vmem:[#allocation7] sm:$0xff]
    %v315 = vld [vmem:[#allocation7 + $0x8] sm:$0xff]
    %v316 = vld [vmem:[#allocation7 + $0x10] sm:$0xff]
    %v317 = vld [vmem:[#allocation7 + $0x18] sm:$0xff]
    %v318 = vld [vmem:[#allocation7 + $0x20] sm:$0xff]
    %v319 = vld [vmem:[#allocation7 + $0x28] sm:$0xff]
    %v320 = vld [vmem:[#allocation7 + $0x30] sm:$0xff]
    %v321 = vld [vmem:[#allocation7 + $0x38] sm:$0xff]
    %v322 = vld [vmem:[#allocation8] sm:$0xff]
    %v323 = vld [vmem:[#allocation8 + $0x8] sm:$0xff]
    %v324 = vld [vmem:[#allocation8 + $0x10] sm:$0xff]
    %v325 = vld [vmem:[#allocation8 + $0x18] sm:$0xff]
    %vm326 = vcmask 523264
    %v328 = vsel %vm326, %v286, 0
    %v331 = vsel %vm326, %v287, 0
    %v334 = vsel %vm326, %v288, 0
    %v337 = vsel %vm326, %v289, 0
    %v340 = vsel %vm326, %v290, 0
    %v343 = vsel %vm326, %v291, 0
    %v346 = vsel %vm326, %v292, 0
    %v349 = vsel %vm326, %v293, 0
    %351 = vmatprep.subr.mxu0 0.0
    %352 = vmatpush1.msra.mxu0 %v306
    %353 = vmatprep.subr.mxu0 0.0
    %354 = vmatpush1.msra.mxu0 %v307
    %355 = vmatprep.subr.mxu0 0.0
    %356 = vmatpush1.msra.mxu0 %v308
    %357 = vmatprep.subr.mxu0 0.0
    %358 = vmatpush1.msra.mxu0 %v309
    %359 = vmatprep.subr.mxu0 0.0
    %360 = vmatpush1.msra.mxu0 %v310
    %361 = vmatprep.subr.mxu0 0.0
    %362 = vmatpush1.msra.mxu0 %v311
    %363 = vmatprep.subr.mxu0 0.0
    %364 = vmatpush1.msra.mxu0 %v312
    %365 = vmatprep.subr.mxu0 0.0
    %366 = vmatpush1.msra.mxu0 %v313
    %367 = vmatprep.subr.mxu0 0.0
    %368 = vmatpush1.msra.mxu0 0.0
    %369 = vmatprep.subr.mxu0 0.0
    %370 = vmatpush1.msra.mxu0 0.0
    %371 = vmatprep.subr.mxu0 0.0
    %372 = vmatpush1.msra.mxu0 0.0
    %373 = vmatprep.subr.mxu0 0.0
    %374 = vmatpush1.msra.mxu0 0.0
    %375 = vmatprep.subr.mxu0 0.0
    %376 = vmatpush1.msra.mxu0 0.0
    %377 = vmatprep.subr.mxu0 0.0
    %378 = vmatpush1.msra.mxu0 0.0
    %379 = vmatprep.subr.mxu0 0.0
    %380 = vmatpush1.msra.mxu0 0.0
    %381 = vmatprep.subr.mxu0 0.0
    %382 = vmatpush1.msra.mxu0 0.0
    %383 = vmatprep.subr.mxu0 0.0
    %384 = vmatpush1.msra.mxu0 0.0
    %385 = vmatprep.subr.mxu0 0.0
    %386 = vmatpush1.msra.mxu0 0.0
    %387 = vmatprep.subr.mxu0 0.0
    %388 = vmatpush1.msra.mxu0 0.0
    %389 = vmatprep.subr.mxu0 0.0
    %390 = vmatpush1.msra.mxu0 0.0
    %391 = vmatprep.subr.mxu0 0.0
    %392 = vmatpush1.msra.mxu0 0.0
    %393 = vmatprep.subr.mxu0 0.0
    %394 = vmatpush1.msra.mxu0 0.0
    %395 = vmatprep.subr.mxu0 0.0
    %396 = vmatpush1.msra.mxu0 0.0
    %397 = vmatprep.subr.mxu0 0.0
    %398 = vmatpush1.msra.mxu0 0.0
    %399 = vmatprep.subr.mxu0 0.0
    %400 = vmatpush1.msra.mxu0 0.0
    %401 = vmatprep.subr.mxu0 0.0
    %402 = vmatpush1.msra.mxu0 0.0
    %403 = vmatprep.subr.mxu0 0.0
    %404 = vmatpush1.msra.mxu0 0.0
    %405 = vmatprep.subr.mxu0 0.0
    %406 = vmatpush1.msra.mxu0 0.0
    %407 = vmatprep.subr.mxu0 0.0
    %408 = vmatpush1.msra.mxu0 0.0
    %409 = vmatprep.subr.mxu0 0.0
    %410 = vmatpush1.msra.mxu0 0.0
    %411 = vmatprep.subr.mxu0 0.0
    %412 = vmatpush1.msra.mxu0 0.0
    %413 = vmatprep.subr.mxu0 0.0
    %414 = vmatpush1.msra.mxu0 0.0
    %415 = vmatprep.mubr.f32.mxu0 0.0
    %416 = vmatmul.mubr.f32.gmra.mrb[0].mxu0 %v328
    %v417 = vpop.f32.mrb[0].mxu0
    %v418 = vadd.f32 0.0, %v417
    %v419 = vpop.f32.mrb[0].mxu0
    %420 = vmatprep.mubr.f32.mxu0 0.0
    %421 = vmatmul.mubr.f32.gmra.mrb[0].mxu0 %v331
    %v422 = vpop.f32.mrb[0].mxu0
    %v423 = vadd.f32 0.0, %v422
    %v424 = vpop.f32.mrb[0].mxu0
    %425 = vmatprep.mubr.f32.mxu0 0.0
    %426 = vmatmul.mubr.f32.gmra.mrb[0].mxu0 %v334
    %v427 = vpop.f32.mrb[0].mxu0
    %v428 = vadd.f32 0.0, %v427
    %v429 = vpop.f32.mrb[0].mxu0
    %430 = vmatprep.mubr.f32.mxu0 0.0
    %431 = vmatmul.mubr.f32.gmra.mrb[0].mxu0 %v337
    %v432 = vpop.f32.mrb[0].mxu0
    %v433 = vadd.f32 0.0, %v432
    %v434 = vpop.f32.mrb[0].mxu0
    %435 = vmatprep.mubr.f32.mxu0 0.0
    %436 = vmatmul.mubr.f32.gmra.mrb[0].mxu0 %v340
    %v437 = vpop.f32.mrb[0].mxu0
    %v438 = vadd.f32 0.0, %v437
    %v439 = vpop.f32.mrb[0].mxu0
    %440 = vmatprep.mubr.f32.mxu0 0.0
    %441 = vmatmul.mubr.f32.gmra.mrb[0].mxu0 %v343
    %v442 = vpop.f32.mrb[0].mxu0
    %v443 = vadd.f32 0.0, %v442
    %v444 = vpop.f32.mrb[0].mxu0
    %445 = vmatprep.mubr.f32.mxu0 0.0
    %446 = vmatmul.mubr.f32.gmra.mrb[0].mxu0 %v346
    %v447 = vpop.f32.mrb[0].mxu0
    %v448 = vadd.f32 0.0, %v447
    %v449 = vpop.f32.mrb[0].mxu0
    %450 = vmatprep.mubr.f32.mxu0 0.0
    %451 = vmatmul.mubr.f32.gmra.mrb[0].mxu0 %v349
    %v452 = vpop.f32.mrb[0].mxu0
    %v453 = vadd.f32 0.0, %v452
    %v454 = vpop.f32.mrb[0].mxu0
    %455 = vdwg.mxu0
    %v457 = vsel %vm326, %v294, 0
    %v460 = vsel %vm326, %v295, 0
    %v463 = vsel %vm326, %v296, 0
    %v466 = vsel %vm326, %v297, 0
    %v469 = vsel %vm326, %v298, 0
    %v472 = vsel %vm326, %v299, 0
    %v475 = vsel %vm326, %v300, 0
    %v478 = vsel %vm326, %v301, 0
    %480 = vmatprep.subr.mxu0 0.0
    %481 = vmatpush1.msra.mxu0 %v306
    %482 = vmatprep.subr.mxu0 0.0
    %483 = vmatpush1.msra.mxu0 %v307
    %484 = vmatprep.subr.mxu0 0.0
    %485 = vmatpush1.msra.mxu0 %v308
    %486 = vmatprep.subr.mxu0 0.0
    %487 = vmatpush1.msra.mxu0 %v309
    %488 = vmatprep.subr.mxu0 0.0
    %489 = vmatpush1.msra.mxu0 %v310
    %490 = vmatprep.subr.mxu0 0.0
    %491 = vmatpush1.msra.mxu0 %v311
    %492 = vmatprep.subr.mxu0 0.0
    %493 = vmatpush1.msra.mxu0 %v312
    %494 = vmatprep.subr.mxu0 0.0
    %495 = vmatpush1.msra.mxu0 %v313
    %496 = vmatprep.subr.mxu0 0.0
    %497 = vmatpush1.msra.mxu0 0.0
    %498 = vmatprep.subr.mxu0 0.0
    %499 = vmatpush1.msra.mxu0 0.0
    %500 = vmatprep.subr.mxu0 0.0
    %501 = vmatpush1.msra.mxu0 0.0
    %502 = vmatprep.subr.mxu0 0.0
    %503 = vmatpush1.msra.mxu0 0.0
    %504 = vmatprep.subr.mxu0 0.0
    %505 = vmatpush1.msra.mxu0 0.0
    %506 = vmatprep.subr.mxu0 0.0
    %507 = vmatpush1.msra.mxu0 0.0
    %508 = vmatprep.subr.mxu0 0.0
    %509 = vmatpush1.msra.mxu0 0.0
    %510 = vmatprep.subr.mxu0 0.0
    %511 = vmatpush1.msra.mxu0 0.0
    %512 = vmatprep.subr.mxu0 0.0
    %513 = vmatpush1.msra.mxu0 0.0
    %514 = vmatprep.subr.mxu0 0.0
    %515 = vmatpush1.msra.mxu0 0.0
    %516 = vmatprep.subr.mxu0 0.0
    %517 = vmatpush1.msra.mxu0 0.0
    %518 = vmatprep.subr.mxu0 0.0
    %519 = vmatpush1.msra.mxu0 0.0
    %520 = vmatprep.subr.mxu0 0.0
    %521 = vmatpush1.msra.mxu0 0.0
    %522 = vmatprep.subr.mxu0 0.0
    %523 = vmatpush1.msra.mxu0 0.0
    %524 = vmatprep.subr.mxu0 0.0
    %525 = vmatpush1.msra.mxu0 0.0
    %526 = vmatprep.subr.mxu0 0.0
    %527 = vmatpush1.msra.mxu0 0.0
    %528 = vmatprep.subr.mxu0 0.0
    %529 = vmatpush1.msra.mxu0 0.0
    %530 = vmatprep.subr.mxu0 0.0
    %531 = vmatpush1.msra.mxu0 0.0
    %532 = vmatprep.subr.mxu0 0.0
    %533 = vmatpush1.msra.mxu0 0.0
    %534 = vmatprep.subr.mxu0 0.0
    %535 = vmatpush1.msra.mxu0 0.0
    %536 = vmatprep.subr.mxu0 0.0
    %537 = vmatpush1.msra.mxu0 0.0
    %538 = vmatprep.subr.mxu0 0.0
    %539 = vmatpush1.msra.mxu0 0.0
    %540 = vmatprep.subr.mxu0 0.0
    %541 = vmatpush1.msra.mxu0 0.0
    %542 = vmatprep.subr.mxu0 0.0
    %543 = vmatpush1.msra.mxu0 0.0
    %544 = vmatprep.mubr.f32.mxu0 0.0
    %545 = vmatmul.mubr.f32.gmra.mrb[0].mxu0 %v457
    %v546 = vpop.f32.mrb[0].mxu0
    %v547 = vadd.f32 0.0, %v546
    %v548 = vpop.f32.mrb[0].mxu0
    %549 = vmatprep.mubr.f32.mxu0 0.0
    %550 = vmatmul.mubr.f32.gmra.mrb[0].mxu0 %v460
    %v551 = vpop.f32.mrb[0].mxu0
    %v552 = vadd.f32 0.0, %v551
    %v553 = vpop.f32.mrb[0].mxu0
    %554 = vmatprep.mubr.f32.mxu0 0.0
    %555 = vmatmul.mubr.f32.gmra.mrb[0].mxu0 %v463
    %v556 = vpop.f32.mrb[0].mxu0
    %v557 = vadd.f32 0.0, %v556
    %v558 = vpop.f32.mrb[0].mxu0
    %559 = vmatprep.mubr.f32.mxu0 0.0
    %560 = vmatmul.mubr.f32.gmra.mrb[0].mxu0 %v466
    %v561 = vpop.f32.mrb[0].mxu0
    %v562 = vadd.f32 0.0, %v561
    %v563 = vpop.f32.mrb[0].mxu0
    %564 = vmatprep.mubr.f32.mxu0 0.0
    %565 = vmatmul.mubr.f32.gmra.mrb[0].mxu0 %v469
    %v566 = vpop.f32.mrb[0].mxu0
    %v567 = vadd.f32 0.0, %v566
    %v568 = vpop.f32.mrb[0].mxu0
    %569 = vmatprep.mubr.f32.mxu0 0.0
    %570 = vmatmul.mubr.f32.gmra.mrb[0].mxu0 %v472
    %v571 = vpop.f32.mrb[0].mxu0
    %v572 = vadd.f32 0.0, %v571
    %v573 = vpop.f32.mrb[0].mxu0
    %574 = vmatprep.mubr.f32.mxu0 0.0
    %575 = vmatmul.mubr.f32.gmra.mrb[0].mxu0 %v475
    %v576 = vpop.f32.mrb[0].mxu0
    %v577 = vadd.f32 0.0, %v576
    %v578 = vpop.f32.mrb[0].mxu0
    %579 = vmatprep.mubr.f32.mxu0 0.0
    %580 = vmatmul.mubr.f32.gmra.mrb[0].mxu0 %v478
    %v581 = vpop.f32.mrb[0].mxu0
    %v582 = vadd.f32 0.0, %v581
    %v583 = vpop.f32.mrb[0].mxu0
    %584 = vdwg.mxu0
    %v586 = vsel %vm326, %v302, 0
    %v589 = vsel %vm326, %v303, 0
    %v592 = vsel %vm326, %v304, 0
    %v595 = vsel %vm326, %v305, 0
    %597 = vmatprep.subr.mxu0 0.0
    %598 = vmatpush1.msra.mxu0 %v418
    %599 = vmatprep.subr.mxu0 0.0
    %600 = vmatpush1.msra.mxu0 %v423
    %601 = vmatprep.subr.mxu0 0.0
    %602 = vmatpush1.msra.mxu0 %v428
    %603 = vmatprep.subr.mxu0 0.0
    %604 = vmatpush1.msra.mxu0 %v433
    %605 = vmatprep.subr.mxu0 0.0
    %606 = vmatpush1.msra.mxu0 %v438
    %607 = vmatprep.subr.mxu0 0.0
    %608 = vmatpush1.msra.mxu0 %v443
    %609 = vmatprep.subr.mxu0 0.0
    %610 = vmatpush1.msra.mxu0 %v448
    %611 = vmatprep.subr.mxu0 0.0
    %612 = vmatpush1.msra.mxu0 %v453
    %613 = vmatprep.subr.mxu0 0.0
    %614 = vmatpush1.msra.mxu0 0.0
    %615 = vmatprep.subr.mxu0 0.0
    %616 = vmatpush1.msra.mxu0 0.0
    %617 = vmatprep.subr.mxu0 0.0
    %618 = vmatpush1.msra.mxu0 0.0
    %619 = vmatprep.subr.mxu0 0.0
    %620 = vmatpush1.msra.mxu0 0.0
    %621 = vmatprep.subr.mxu0 0.0
    %622 = vmatpush1.msra.mxu0 0.0
    %623 = vmatprep.subr.mxu0 0.0
    %624 = vmatpush1.msra.mxu0 0.0
    %625 = vmatprep.subr.mxu0 0.0
    %626 = vmatpush1.msra.mxu0 0.0
    %627 = vmatprep.subr.mxu0 0.0
    %628 = vmatpush1.msra.mxu0 0.0
    %629 = vmatprep.subr.mxu0 0.0
    %630 = vmatpush1.msra.mxu0 0.0
    %631 = vmatprep.subr.mxu0 0.0
    %632 = vmatpush1.msra.mxu0 0.0
    %633 = vmatprep.subr.mxu0 0.0
    %634 = vmatpush1.msra.mxu0 0.0
    %635 = vmatprep.subr.mxu0 0.0
    %636 = vmatpush1.msra.mxu0 0.0
    %637 = vmatprep.subr.mxu0 0.0
    %638 = vmatpush1.msra.mxu0 0.0
    %639 = vmatprep.subr.mxu0 0.0
    %640 = vmatpush1.msra.mxu0 0.0
    %641 = vmatprep.subr.mxu0 0.0
    %642 = vmatpush1.msra.mxu0 0.0
    %643 = vmatprep.subr.mxu0 0.0
    %644 = vmatpush1.msra.mxu0 0.0
    %645 = vmatprep.subr.mxu0 0.0
    %646 = vmatpush1.msra.mxu0 0.0
    %647 = vmatprep.subr.mxu0 0.0
    %648 = vmatpush1.msra.mxu0 0.0
    %649 = vmatprep.subr.mxu0 0.0
    %650 = vmatpush1.msra.mxu0 0.0
    %651 = vmatprep.subr.mxu0 0.0
    %652 = vmatpush1.msra.mxu0 0.0
    %653 = vmatprep.subr.mxu0 0.0
    %654 = vmatpush1.msra.mxu0 0.0
    %655 = vmatprep.subr.mxu0 0.0
    %656 = vmatpush1.msra.mxu0 0.0
    %657 = vmatprep.subr.mxu0 0.0
    %658 = vmatpush1.msra.mxu0 0.0
    %659 = vmatprep.subr.mxu0 0.0
    %660 = vmatpush1.msra.mxu0 0.0
    %661 = vmatprep.mubr.f32.mxu0 0.0
    %662 = vmatmul.mubr.f32.gmra.mrb[0].mxu0 %v586
    %v663 = vpop.f32.mrb[0].mxu0
    %v664 = vadd.f32 0.0, %v663
    %v665 = vpop.f32.mrb[0].mxu0
    %666 = vmatprep.mubr.f32.mxu0 0.0
    %667 = vmatmul.mubr.f32.gmra.mrb[0].mxu0 %v589
    %v668 = vpop.f32.mrb[0].mxu0
    %v669 = vadd.f32 0.0, %v668
    %v670 = vpop.f32.mrb[0].mxu0
    %671 = vmatprep.mubr.f32.mxu0 0.0
    %672 = vmatmul.mubr.f32.gmra.mrb[0].mxu0 %v592
    %v673 = vpop.f32.mrb[0].mxu0
    %v674 = vadd.f32 0.0, %v673
    %v675 = vpop.f32.mrb[0].mxu0
    %676 = vmatprep.mubr.f32.mxu0 0.0
    %677 = vmatmul.mubr.f32.gmra.mrb[0].mxu0 %v595
    %v678 = vpop.f32.mrb[0].mxu0
    %v679 = vadd.f32 0.0, %v678
    %v680 = vpop.f32.mrb[0].mxu0
    %681 = vdwg.mxu0
    %682 = vmatprep.subr.mxu0 0.0
    %683 = vmatpush1.msra.mxu0 %v547
    %684 = vmatprep.subr.mxu0 0.0
    %685 = vmatpush1.msra.mxu0 %v552
    %686 = vmatprep.subr.mxu0 0.0
    %687 = vmatpush1.msra.mxu0 %v557
    %688 = vmatprep.subr.mxu0 0.0
    %689 = vmatpush1.msra.mxu0 %v562
    %690 = vmatprep.subr.mxu0 0.0
    %691 = vmatpush1.msra.mxu0 %v567
    %692 = vmatprep.subr.mxu0 0.0
    %693 = vmatpush1.msra.mxu0 %v572
    %694 = vmatprep.subr.mxu0 0.0
    %695 = vmatpush1.msra.mxu0 %v577
    %696 = vmatprep.subr.mxu0 0.0
    %697 = vmatpush1.msra.mxu0 %v582
    %698 = vmatprep.subr.mxu0 0.0
    %699 = vmatpush1.msra.mxu0 0.0
    %700 = vmatprep.subr.mxu0 0.0
    %701 = vmatpush1.msra.mxu0 0.0
    %702 = vmatprep.subr.mxu0 0.0
    %703 = vmatpush1.msra.mxu0 0.0
    %704 = vmatprep.subr.mxu0 0.0
    %705 = vmatpush1.msra.mxu0 0.0
    %706 = vmatprep.subr.mxu0 0.0
    %707 = vmatpush1.msra.mxu0 0.0
    %708 = vmatprep.subr.mxu0 0.0
    %709 = vmatpush1.msra.mxu0 0.0
    %710 = vmatprep.subr.mxu0 0.0
    %711 = vmatpush1.msra.mxu0 0.0
    %712 = vmatprep.subr.mxu0 0.0
    %713 = vmatpush1.msra.mxu0 0.0
    %714 = vmatprep.subr.mxu0 0.0
    %715 = vmatpush1.msra.mxu0 0.0
    %716 = vmatprep.subr.mxu0 0.0
    %717 = vmatpush1.msra.mxu0 0.0
    %718 = vmatprep.subr.mxu0 0.0
    %719 = vmatpush1.msra.mxu0 0.0
    %720 = vmatprep.subr.mxu0 0.0
    %721 = vmatpush1.msra.mxu0 0.0
    %722 = vmatprep.subr.mxu0 0.0
    %723 = vmatpush1.msra.mxu0 0.0
    %724 = vmatprep.subr.mxu0 0.0
    %725 = vmatpush1.msra.mxu0 0.0
    %726 = vmatprep.subr.mxu0 0.0
    %727 = vmatpush1.msra.mxu0 0.0
    %728 = vmatprep.subr.mxu0 0.0
    %729 = vmatpush1.msra.mxu0 0.0
    %730 = vmatprep.subr.mxu0 0.0
    %731 = vmatpush1.msra.mxu0 0.0
    %732 = vmatprep.subr.mxu0 0.0
    %733 = vmatpush1.msra.mxu0 0.0
    %734 = vmatprep.subr.mxu0 0.0
    %735 = vmatpush1.msra.mxu0 0.0
    %736 = vmatprep.subr.mxu0 0.0
    %737 = vmatpush1.msra.mxu0 0.0
    %738 = vmatprep.subr.mxu0 0.0
    %739 = vmatpush1.msra.mxu0 0.0
    %740 = vmatprep.subr.mxu0 0.0
    %741 = vmatpush1.msra.mxu0 0.0
    %742 = vmatprep.subr.mxu0 0.0
    %743 = vmatpush1.msra.mxu0 0.0
    %744 = vmatprep.subr.mxu0 0.0
    %745 = vmatpush1.msra.mxu0 0.0
    %746 = vmatprep.mubr.f32.mxu0 0.0
    %747 = vmatmul.mubr.f32.gmra.mrb[0].mxu0 %v586
    %v748 = vpop.f32.mrb[0].mxu0
    %v749 = vadd.f32 0.0, %v748
    %v750 = vpop.f32.mrb[0].mxu0
    %751 = vmatprep.mubr.f32.mxu0 0.0
    %752 = vmatmul.mubr.f32.gmra.mrb[0].mxu0 %v589
    %v753 = vpop.f32.mrb[0].mxu0
    %v754 = vadd.f32 0.0, %v753
    %v755 = vpop.f32.mrb[0].mxu0
    %756 = vmatprep.mubr.f32.mxu0 0.0
    %757 = vmatmul.mubr.f32.gmra.mrb[0].mxu0 %v592
    %v758 = vpop.f32.mrb[0].mxu0
    %v759 = vadd.f32 0.0, %v758
    %v760 = vpop.f32.mrb[0].mxu0
    %761 = vmatprep.mubr.f32.mxu0 0.0
    %762 = vmatmul.mubr.f32.gmra.mrb[0].mxu0 %v595
    %v763 = vpop.f32.mrb[0].mxu0
    %v764 = vadd.f32 0.0, %v763
    %v765 = vpop.f32.mrb[0].mxu0
    %766 = vdwg.mxu0
    %vm767 = vcmask 261120
    %v769 = vsel %vm767, %v664, 0
    %v772 = vsel %vm767, %v669, 0
    %v775 = vsel %vm767, %v674, 0
    %v778 = vsel %vm767, %v679, 0
    %780 = vmatprep.subr.mxu0 0.0
    %781 = vmatpush1.msra.mxu0 %v322
    %782 = vmatprep.subr.mxu0 0.0
    %783 = vmatpush1.msra.mxu0 %v323
    %784 = vmatprep.subr.mxu0 0.0
    %785 = vmatpush1.msra.mxu0 %v324
    %786 = vmatprep.subr.mxu0 0.0
    %787 = vmatpush1.msra.mxu0 %v325
    %788 = vmatprep.subr.mxu0 0.0
    %789 = vmatpush1.msra.mxu0 0.0
    %790 = vmatprep.subr.mxu0 0.0
    %791 = vmatpush1.msra.mxu0 0.0
    %792 = vmatprep.subr.mxu0 0.0
    %793 = vmatpush1.msra.mxu0 0.0
    %794 = vmatprep.subr.mxu0 0.0
    %795 = vmatpush1.msra.mxu0 0.0
    %796 = vmatprep.subr.mxu0 0.0
    %797 = vmatpush1.msra.mxu0 0.0
    %798 = vmatprep.subr.mxu0 0.0
    %799 = vmatpush1.msra.mxu0 0.0
    %800 = vmatprep.subr.mxu0 0.0
    %801 = vmatpush1.msra.mxu0 0.0
    %802 = vmatprep.subr.mxu0 0.0
    %803 = vmatpush1.msra.mxu0 0.0
    %804 = vmatprep.subr.mxu0 0.0
    %805 = vmatpush1.msra.mxu0 0.0
    %806 = vmatprep.subr.mxu0 0.0
    %807 = vmatpush1.msra.mxu0 0.0
    %808 = vmatprep.subr.mxu0 0.0
    %809 = vmatpush1.msra.mxu0 0.0
    %810 = vmatprep.subr.mxu0 0.0
    %811 = vmatpush1.msra.mxu0 0.0
    %812 = vmatprep.subr.mxu0 0.0
    %813 = vmatpush1.msra.mxu0 0.0
    %814 = vmatprep.subr.mxu0 0.0
    %815 = vmatpush1.msra.mxu0 0.0
    %816 = vmatprep.subr.mxu0 0.0
    %817 = vmatpush1.msra.mxu0 0.0
    %818 = vmatprep.subr.mxu0 0.0
    %819 = vmatpush1.msra.mxu0 0.0
    %820 = vmatprep.subr.mxu0 0.0
    %821 = vmatpush1.msra.mxu0 0.0
    %822 = vmatprep.subr.mxu0 0.0
    %823 = vmatpush1.msra.mxu0 0.0
    %824 = vmatprep.subr.mxu0 0.0
    %825 = vmatpush1.msra.mxu0 0.0
    %826 = vmatprep.subr.mxu0 0.0
    %827 = vmatpush1.msra.mxu0 0.0
    %828 = vmatprep.subr.mxu0 0.0
    %829 = vmatpush1.msra.mxu0 0.0
    %830 = vmatprep.subr.mxu0 0.0
    %831 = vmatpush1.msra.mxu0 0.0
    %832 = vmatprep.subr.mxu0 0.0
    %833 = vmatpush1.msra.mxu0 0.0
    %834 = vmatprep.subr.mxu0 0.0
    %835 = vmatpush1.msra.mxu0 0.0
    %836 = vmatprep.subr.mxu0 0.0
    %837 = vmatpush1.msra.mxu0 0.0
    %838 = vmatprep.subr.mxu0 0.0
    %839 = vmatpush1.msra.mxu0 0.0
    %840 = vmatprep.subr.mxu0 0.0
    %841 = vmatpush1.msra.mxu0 0.0
    %842 = vmatprep.subr.mxu0 0.0
    %843 = vmatpush1.msra.mxu0 0.0
    %844 = vmatprep.mubr.f32.mxu0 0.0
    %845 = vmatmul.mubr.f32.gmra.mrb[0].mxu0 %v769
    %v846 = vpop.f32.mrb[0].mxu0
    %v847 = vadd.f32 0.0, %v846
    %v848 = vpop.f32.mrb[0].mxu0
    %849 = vmatprep.mubr.f32.mxu0 0.0
    %850 = vmatmul.mubr.f32.gmra.mrb[0].mxu0 %v772
    %v851 = vpop.f32.mrb[0].mxu0
    %v852 = vadd.f32 0.0, %v851
    %v853 = vpop.f32.mrb[0].mxu0
    %854 = vmatprep.mubr.f32.mxu0 0.0
    %855 = vmatmul.mubr.f32.gmra.mrb[0].mxu0 %v775
    %v856 = vpop.f32.mrb[0].mxu0
    %v857 = vadd.f32 0.0, %v856
    %v858 = vpop.f32.mrb[0].mxu0
    %859 = vmatprep.mubr.f32.mxu0 0.0
    %860 = vmatmul.mubr.f32.gmra.mrb[0].mxu0 %v778
    %v861 = vpop.f32.mrb[0].mxu0
    %v862 = vadd.f32 0.0, %v861
    %v863 = vpop.f32.mrb[0].mxu0
    %864 = vdwg.mxu0
    %v866 = vsel %vm767, %v749, 0
    %v869 = vsel %vm767, %v754, 0
    %v872 = vsel %vm767, %v759, 0
    %v875 = vsel %vm767, %v764, 0
    %877 = vmatprep.subr.mxu0 0.0
    %878 = vmatpush1.msra.mxu0 %v322
    %879 = vmatprep.subr.mxu0 0.0
    %880 = vmatpush1.msra.mxu0 %v323
    %881 = vmatprep.subr.mxu0 0.0
    %882 = vmatpush1.msra.mxu0 %v324
    %883 = vmatprep.subr.mxu0 0.0
    %884 = vmatpush1.msra.mxu0 %v325
    %885 = vmatprep.subr.mxu0 0.0
    %886 = vmatpush1.msra.mxu0 0.0
    %887 = vmatprep.subr.mxu0 0.0
    %888 = vmatpush1.msra.mxu0 0.0
    %889 = vmatprep.subr.mxu0 0.0
    %890 = vmatpush1.msra.mxu0 0.0
    %891 = vmatprep.subr.mxu0 0.0
    %892 = vmatpush1.msra.mxu0 0.0
    %893 = vmatprep.subr.mxu0 0.0
    %894 = vmatpush1.msra.mxu0 0.0
    %895 = vmatprep.subr.mxu0 0.0
    %896 = vmatpush1.msra.mxu0 0.0
    %897 = vmatprep.subr.mxu0 0.0
    %898 = vmatpush1.msra.mxu0 0.0
    %899 = vmatprep.subr.mxu0 0.0
    %900 = vmatpush1.msra.mxu0 0.0
    %901 = vmatprep.subr.mxu0 0.0
    %902 = vmatpush1.msra.mxu0 0.0
    %903 = vmatprep.subr.mxu0 0.0
    %904 = vmatpush1.msra.mxu0 0.0
    %905 = vmatprep.subr.mxu0 0.0
    %906 = vmatpush1.msra.mxu0 0.0
    %907 = vmatprep.subr.mxu0 0.0
    %908 = vmatpush1.msra.mxu0 0.0
    %909 = vmatprep.subr.mxu0 0.0
    %910 = vmatpush1.msra.mxu0 0.0
    %911 = vmatprep.subr.mxu0 0.0
    %912 = vmatpush1.msra.mxu0 0.0
    %913 = vmatprep.subr.mxu0 0.0
    %914 = vmatpush1.msra.mxu0 0.0
    %915 = vmatprep.subr.mxu0 0.0
    %916 = vmatpush1.msra.mxu0 0.0
    %917 = vmatprep.subr.mxu0 0.0
    %918 = vmatpush1.msra.mxu0 0.0
    %919 = vmatprep.subr.mxu0 0.0
    %920 = vmatpush1.msra.mxu0 0.0
    %921 = vmatprep.subr.mxu0 0.0
    %922 = vmatpush1.msra.mxu0 0.0
    %923 = vmatprep.subr.mxu0 0.0
    %924 = vmatpush1.msra.mxu0 0.0
    %925 = vmatprep.subr.mxu0 0.0
    %926 = vmatpush1.msra.mxu0 0.0
    %927 = vmatprep.subr.mxu0 0.0
    %928 = vmatpush1.msra.mxu0 0.0
    %929 = vmatprep.subr.mxu0 0.0
    %930 = vmatpush1.msra.mxu0 0.0
    %931 = vmatprep.subr.mxu0 0.0
    %932 = vmatpush1.msra.mxu0 0.0
    %933 = vmatprep.subr.mxu0 0.0
    %934 = vmatpush1.msra.mxu0 0.0
    %935 = vmatprep.subr.mxu0 0.0
    %936 = vmatpush1.msra.mxu0 0.0
    %937 = vmatprep.subr.mxu0 0.0
    %938 = vmatpush1.msra.mxu0 0.0
    %939 = vmatprep.subr.mxu0 0.0
    %940 = vmatpush1.msra.mxu0 0.0
    %941 = vmatprep.mubr.f32.mxu0 0.0
    %942 = vmatmul.mubr.f32.gmra.mrb[0].mxu0 %v866
    %v943 = vpop.f32.mrb[0].mxu0
    %v944 = vadd.f32 0.0, %v943
    %v945 = vpop.f32.mrb[0].mxu0
    %946 = vmatprep.mubr.f32.mxu0 0.0
    %947 = vmatmul.mubr.f32.gmra.mrb[0].mxu0 %v869
    %v948 = vpop.f32.mrb[0].mxu0
    %v949 = vadd.f32 0.0, %v948
    %v950 = vpop.f32.mrb[0].mxu0
    %951 = vmatprep.mubr.f32.mxu0 0.0
    %952 = vmatmul.mubr.f32.gmra.mrb[0].mxu0 %v872
    %v953 = vpop.f32.mrb[0].mxu0
    %v954 = vadd.f32 0.0, %v953
    %v955 = vpop.f32.mrb[0].mxu0
    %956 = vmatprep.mubr.f32.mxu0 0.0
    %957 = vmatmul.mubr.f32.gmra.mrb[0].mxu0 %v875
    %v958 = vpop.f32.mrb[0].mxu0
    %v959 = vadd.f32 0.0, %v958
    %v960 = vpop.f32.mrb[0].mxu0
    %961 = vdwg.mxu0
    %v963 = vsel %vm767, %v314, 0
    %v966 = vsel %vm767, %v315, 0
    %v969 = vsel %vm767, %v316, 0
    %v972 = vsel %vm767, %v317, 0
    %v975 = vsel %vm767, %v318, 0
    %v978 = vsel %vm767, %v319, 0
    %v981 = vsel %vm767, %v320, 0
    %v984 = vsel %vm767, %v321, 0
    %986 = vmatprep.subr.mxu0 0.0
    %987 = vmatpush1.msra.mxu0 %v847
    %988 = vmatprep.subr.mxu0 0.0
    %989 = vmatpush1.msra.mxu0 %v852
    %990 = vmatprep.subr.mxu0 0.0
    %991 = vmatpush1.msra.mxu0 %v857
    %992 = vmatprep.subr.mxu0 0.0
    %993 = vmatpush1.msra.mxu0 %v862
    %994 = vmatprep.subr.mxu0 0.0
    %995 = vmatpush1.msra.mxu0 0.0
    %996 = vmatprep.subr.mxu0 0.0
    %997 = vmatpush1.msra.mxu0 0.0
    %998 = vmatprep.subr.mxu0 0.0
    %999 = vmatpush1.msra.mxu0 0.0
    %1000 = vmatprep.subr.mxu0 0.0
    %1001 = vmatpush1.msra.mxu0 0.0
    %1002 = vmatprep.subr.mxu0 0.0
    %1003 = vmatpush1.msra.mxu0 0.0
    %1004 = vmatprep.subr.mxu0 0.0
    %1005 = vmatpush1.msra.mxu0 0.0
    %1006 = vmatprep.subr.mxu0 0.0
    %1007 = vmatpush1.msra.mxu0 0.0
    %1008 = vmatprep.subr.mxu0 0.0
    %1009 = vmatpush1.msra.mxu0 0.0
    %1010 = vmatprep.subr.mxu0 0.0
    %1011 = vmatpush1.msra.mxu0 0.0
    %1012 = vmatprep.subr.mxu0 0.0
    %1013 = vmatpush1.msra.mxu0 0.0
    %1014 = vmatprep.subr.mxu0 0.0
    %1015 = vmatpush1.msra.mxu0 0.0
    %1016 = vmatprep.subr.mxu0 0.0
    %1017 = vmatpush1.msra.mxu0 0.0
    %1018 = vmatprep.subr.mxu0 0.0
    %1019 = vmatpush1.msra.mxu0 0.0
    %1020 = vmatprep.subr.mxu0 0.0
    %1021 = vmatpush1.msra.mxu0 0.0
    %1022 = vmatprep.subr.mxu0 0.0
    %1023 = vmatpush1.msra.mxu0 0.0
    %1024 = vmatprep.subr.mxu0 0.0
    %1025 = vmatpush1.msra.mxu0 0.0
    %1026 = vmatprep.subr.mxu0 0.0
    %1027 = vmatpush1.msra.mxu0 0.0
    %1028 = vmatprep.subr.mxu0 0.0
    %1029 = vmatpush1.msra.mxu0 0.0
    %1030 = vmatprep.subr.mxu0 0.0
    %1031 = vmatpush1.msra.mxu0 0.0
    %1032 = vmatprep.subr.mxu0 0.0
    %1033 = vmatpush1.msra.mxu0 0.0
    %1034 = vmatprep.subr.mxu0 0.0
    %1035 = vmatpush1.msra.mxu0 0.0
    %1036 = vmatprep.subr.mxu0 0.0
    %1037 = vmatpush1.msra.mxu0 0.0
    %1038 = vmatprep.subr.mxu0 0.0
    %1039 = vmatpush1.msra.mxu0 0.0
    %1040 = vmatprep.subr.mxu0 0.0
    %1041 = vmatpush1.msra.mxu0 0.0
    %1042 = vmatprep.subr.mxu0 0.0
    %1043 = vmatpush1.msra.mxu0 0.0
    %1044 = vmatprep.subr.mxu0 0.0
    %1045 = vmatpush1.msra.mxu0 0.0
    %1046 = vmatprep.subr.mxu0 0.0
    %1047 = vmatpush1.msra.mxu0 0.0
    %1048 = vmatprep.subr.mxu0 0.0
    %1049 = vmatpush1.msra.mxu0 0.0
    %1050 = vmatprep.mubr.f32.mxu0 0.0
    %1051 = vmatmul.mubr.f32.gmra.mrb[0].mxu0 %v963
    %v1052 = vpop.f32.mrb[0].mxu0
    %v1053 = vadd.f32 0.0, %v1052
    %v1054 = vpop.f32.mrb[0].mxu0
    %1055 = vmatprep.mubr.f32.mxu0 0.0
    %1056 = vmatmul.mubr.f32.gmra.mrb[0].mxu0 %v966
    %v1057 = vpop.f32.mrb[0].mxu0
    %v1058 = vadd.f32 0.0, %v1057
    %v1059 = vpop.f32.mrb[0].mxu0
    %1060 = vmatprep.mubr.f32.mxu0 0.0
    %1061 = vmatmul.mubr.f32.gmra.mrb[0].mxu0 %v969
    %v1062 = vpop.f32.mrb[0].mxu0
    %v1063 = vadd.f32 0.0, %v1062
    %v1064 = vpop.f32.mrb[0].mxu0
    %1065 = vmatprep.mubr.f32.mxu0 0.0
    %1066 = vmatmul.mubr.f32.gmra.mrb[0].mxu0 %v972
    %v1067 = vpop.f32.mrb[0].mxu0
    %v1068 = vadd.f32 0.0, %v1067
    %v1069 = vpop.f32.mrb[0].mxu0
    %1070 = vmatprep.mubr.f32.mxu0 0.0
    %1071 = vmatmul.mubr.f32.gmra.mrb[0].mxu0 %v975
    %v1072 = vpop.f32.mrb[0].mxu0
    %v1073 = vadd.f32 0.0, %v1072
    %v1074 = vpop.f32.mrb[0].mxu0
    %1075 = vmatprep.mubr.f32.mxu0 0.0
    %1076 = vmatmul.mubr.f32.gmra.mrb[0].mxu0 %v978
    %v1077 = vpop.f32.mrb[0].mxu0
    %v1078 = vadd.f32 0.0, %v1077
    %v1079 = vpop.f32.mrb[0].mxu0
    %1080 = vmatprep.mubr.f32.mxu0 0.0
    %1081 = vmatmul.mubr.f32.gmra.mrb[0].mxu0 %v981
    %v1082 = vpop.f32.mrb[0].mxu0
    %v1083 = vadd.f32 0.0, %v1082
    %v1084 = vpop.f32.mrb[0].mxu0
    %1085 = vmatprep.mubr.f32.mxu0 0.0
    %1086 = vmatmul.mubr.f32.gmra.mrb[0].mxu0 %v984
    %v1087 = vpop.f32.mrb[0].mxu0
    %v1088 = vadd.f32 0.0, %v1087
    %v1089 = vpop.f32.mrb[0].mxu0
    %1090 = vdwg.mxu0
    %1091 = vmatprep.subr.mxu0 0.0
    %1092 = vmatpush1.msra.mxu0 %v944
    %1093 = vmatprep.subr.mxu0 0.0
    %1094 = vmatpush1.msra.mxu0 %v949
    %1095 = vmatprep.subr.mxu0 0.0
    %1096 = vmatpush1.msra.mxu0 %v954
    %1097 = vmatprep.subr.mxu0 0.0
    %1098 = vmatpush1.msra.mxu0 %v959
    %1099 = vmatprep.subr.mxu0 0.0
    %1100 = vmatpush1.msra.mxu0 0.0
    %1101 = vmatprep.subr.mxu0 0.0
    %1102 = vmatpush1.msra.mxu0 0.0
    %1103 = vmatprep.subr.mxu0 0.0
    %1104 = vmatpush1.msra.mxu0 0.0
    %1105 = vmatprep.subr.mxu0 0.0
    %1106 = vmatpush1.msra.mxu0 0.0
    %1107 = vmatprep.subr.mxu0 0.0
    %1108 = vmatpush1.msra.mxu0 0.0
    %1109 = vmatprep.subr.mxu0 0.0
    %1110 = vmatpush1.msra.mxu0 0.0
    %1111 = vmatprep.subr.mxu0 0.0
    %1112 = vmatpush1.msra.mxu0 0.0
    %1113 = vmatprep.subr.mxu0 0.0
    %1114 = vmatpush1.msra.mxu0 0.0
    %1115 = vmatprep.subr.mxu0 0.0
    %1116 = vmatpush1.msra.mxu0 0.0
    %1117 = vmatprep.subr.mxu0 0.0
    %1118 = vmatpush1.msra.mxu0 0.0
    %1119 = vmatprep.subr.mxu0 0.0
    %1120 = vmatpush1.msra.mxu0 0.0
    %1121 = vmatprep.subr.mxu0 0.0
    %1122 = vmatpush1.msra.mxu0 0.0
    %1123 = vmatprep.subr.mxu0 0.0
    %1124 = vmatpush1.msra.mxu0 0.0
    %1125 = vmatprep.subr.mxu0 0.0
    %1126 = vmatpush1.msra.mxu0 0.0
    %1127 = vmatprep.subr.mxu0 0.0
    %1128 = vmatpush1.msra.mxu0 0.0
    %1129 = vmatprep.subr.mxu0 0.0
    %1130 = vmatpush1.msra.mxu0 0.0
    %1131 = vmatprep.subr.mxu0 0.0
    %1132 = vmatpush1.msra.mxu0 0.0
    %1133 = vmatprep.subr.mxu0 0.0
    %1134 = vmatpush1.msra.mxu0 0.0
    %1135 = vmatprep.subr.mxu0 0.0
    %1136 = vmatpush1.msra.mxu0 0.0
    %1137 = vmatprep.subr.mxu0 0.0
    %1138 = vmatpush1.msra.mxu0 0.0
    %1139 = vmatprep.subr.mxu0 0.0
    %1140 = vmatpush1.msra.mxu0 0.0
    %1141 = vmatprep.subr.mxu0 0.0
    %1142 = vmatpush1.msra.mxu0 0.0
    %1143 = vmatprep.subr.mxu0 0.0
    %1144 = vmatpush1.msra.mxu0 0.0
    %1145 = vmatprep.subr.mxu0 0.0
    %1146 = vmatpush1.msra.mxu0 0.0
    %1147 = vmatprep.subr.mxu0 0.0
    %1148 = vmatpush1.msra.mxu0 0.0
    %1149 = vmatprep.subr.mxu0 0.0
    %1150 = vmatpush1.msra.mxu0 0.0
    %1151 = vmatprep.subr.mxu0 0.0
    %1152 = vmatpush1.msra.mxu0 0.0
    %1153 = vmatprep.subr.mxu0 0.0
    %1154 = vmatpush1.msra.mxu0 0.0
    %1155 = vmatprep.mubr.f32.mxu0 0.0
    %1156 = vmatmul.mubr.f32.gmra.mrb[0].mxu0 %v963
    %v1157 = vpop.f32.mrb[0].mxu0
    %v1158 = vadd.f32 0.0, %v1157
    %v1159 = vpop.f32.mrb[0].mxu0
    %1160 = vmatprep.mubr.f32.mxu0 0.0
    %1161 = vmatmul.mubr.f32.gmra.mrb[0].mxu0 %v966
    %v1162 = vpop.f32.mrb[0].mxu0
    %v1163 = vadd.f32 0.0, %v1162
    %v1164 = vpop.f32.mrb[0].mxu0
    %1165 = vmatprep.mubr.f32.mxu0 0.0
    %1166 = vmatmul.mubr.f32.gmra.mrb[0].mxu0 %v969
    %v1167 = vpop.f32.mrb[0].mxu0
    %v1168 = vadd.f32 0.0, %v1167
    %v1169 = vpop.f32.mrb[0].mxu0
    %1170 = vmatprep.mubr.f32.mxu0 0.0
    %1171 = vmatmul.mubr.f32.gmra.mrb[0].mxu0 %v972
    %v1172 = vpop.f32.mrb[0].mxu0
    %v1173 = vadd.f32 0.0, %v1172
    %v1174 = vpop.f32.mrb[0].mxu0
    %1175 = vmatprep.mubr.f32.mxu0 0.0
    %1176 = vmatmul.mubr.f32.gmra.mrb[0].mxu0 %v975
    %v1177 = vpop.f32.mrb[0].mxu0
    %v1178 = vadd.f32 0.0, %v1177
    %v1179 = vpop.f32.mrb[0].mxu0
    %1180 = vmatprep.mubr.f32.mxu0 0.0
    %1181 = vmatmul.mubr.f32.gmra.mrb[0].mxu0 %v978
    %v1182 = vpop.f32.mrb[0].mxu0
    %v1183 = vadd.f32 0.0, %v1182
    %v1184 = vpop.f32.mrb[0].mxu0
    %1185 = vmatprep.mubr.f32.mxu0 0.0
    %1186 = vmatmul.mubr.f32.gmra.mrb[0].mxu0 %v981
    %v1187 = vpop.f32.mrb[0].mxu0
    %v1188 = vadd.f32 0.0, %v1187
    %v1189 = vpop.f32.mrb[0].mxu0
    %1190 = vmatprep.mubr.f32.mxu0 0.0
    %1191 = vmatmul.mubr.f32.gmra.mrb[0].mxu0 %v984
    %v1192 = vpop.f32.mrb[0].mxu0
    %v1193 = vadd.f32 0.0, %v1192
    %v1194 = vpop.f32.mrb[0].mxu0
    %1195 = vdwg.mxu0
    %v1196 = vsub.f32 %v286, %v1053
    %v1197 = vsub.f32 %v287, %v1058
    %v1198 = vsub.f32 %v288, %v1063
    %v1199 = vsub.f32 %v289, %v1068
    %v1200 = vsub.f32 %v290, %v1073
    %v1201 = vsub.f32 %v291, %v1078
    %v1202 = vsub.f32 %v292, %v1083
    %v1203 = vsub.f32 %v293, %v1088
    %v1204 = vsub.f32 %v294, %v1158
    %v1205 = vsub.f32 %v295, %v1163
    %v1206 = vsub.f32 %v296, %v1168
    %v1207 = vsub.f32 %v297, %v1173
    %v1208 = vsub.f32 %v298, %v1178
    %v1209 = vsub.f32 %v299, %v1183
    %v1210 = vsub.f32 %v300, %v1188
    %v1211 = vsub.f32 %v301, %v1193
    %v1212 = vand.u32 2147483647, %v1196
    %v1213 = vand.u32 2147483647, %v1197
    %v1214 = vand.u32 2147483647, %v1198
    %v1215 = vand.u32 2147483647, %v1199
    %v1216 = vand.u32 2147483647, %v1200
    %v1217 = vand.u32 2147483647, %v1201
    %v1218 = vand.u32 2147483647, %v1202
    %v1219 = vand.u32 2147483647, %v1203
    %v1220 = vand.u32 2147483647, %v1204
    %v1221 = vand.u32 2147483647, %v1205
    %v1222 = vand.u32 2147483647, %v1206
    %v1223 = vand.u32 2147483647, %v1207
    %v1224 = vand.u32 2147483647, %v1208
    %v1225 = vand.u32 2147483647, %v1209
    %v1226 = vand.u32 2147483647, %v1210
    %v1227 = vand.u32 2147483647, %v1211
    %v1228 = vsel %vm326, %v1212, 0.0
    %v1229 = vsel %vm326, %v1213, 0.0
    %v1230 = vadd.f32 %v1228, %v1229
    %v1231 = vsel %vm326, %v1214, 0.0
    %v1232 = vadd.f32 %v1230, %v1231
    %v1233 = vsel %vm326, %v1215, 0.0
    %v1234 = vadd.f32 %v1232, %v1233
    %v1235 = vsel %vm326, %v1216, 0.0
    %v1236 = vadd.f32 %v1234, %v1235
    %v1237 = vsel %vm326, %v1217, 0.0
    %v1238 = vadd.f32 %v1236, %v1237
    %v1239 = vsel %vm326, %v1218, 0.0
    %v1240 = vadd.f32 %v1238, %v1239
    %v1241 = vsel %vm326, %v1219, 0.0
    %v1242 = vadd.f32 %v1240, %v1241
    %v1243 = vsel %vm326, %v1220, 0.0
    %v1244 = vadd.f32 %v1242, %v1243
    %v1245 = vsel %vm326, %v1221, 0.0
    %v1246 = vadd.f32 %v1244, %v1245
    %v1247 = vsel %vm326, %v1222, 0.0
    %v1248 = vadd.f32 %v1246, %v1247
    %v1249 = vsel %vm326, %v1223, 0.0
    %v1250 = vadd.f32 %v1248, %v1249
    %v1251 = vsel %vm326, %v1224, 0.0
    %v1252 = vadd.f32 %v1250, %v1251
    %v1253 = vsel %vm326, %v1225, 0.0
    %v1254 = vadd.f32 %v1252, %v1253
    %v1255 = vsel %vm326, %v1226, 0.0
    %v1256 = vadd.f32 %v1254, %v1255
    %v1257 = vsel %vm326, %v1227, 0.0
    %v1258 = vadd.f32 %v1256, %v1257
    %1259 = vadd.xlane.f32.xlu0 %v1258
    %v1260 = vpop.xlane.xlu0 %1259
    %v1261 = vrot.slane %v1260, 4
    %v1262 = vadd.f32 %v1260, %v1261
    %v1263 = vrot.slane %v1262, 2
    %v1264 = vadd.f32 %v1262, %v1263
    %v1265 = vrot.slane %v1264, 1
    %v1266 = vadd.f32 %v1264, %v1265
    %s1267 = vtos %v1266
    %s1268 = smul.f32 %s1267, 0.00024414063
    %s1269 = sadd.f32 %s1268, 0.0
    %v1270 = vld [vmem:[#allocation10] sm:$0xff]
    %v1271 = vld [vmem:[#allocation10 + $0x8] sm:$0xff]
    %v1272 = vld [vmem:[#allocation11] sm:$0xff]
    %v1273 = vld [vmem:[#allocation11 + $0x8] sm:$0xff]
    %v1274 = vld [vmem:[#allocation11 + $0x10] sm:$0xff]
    %v1275 = vld [vmem:[#allocation11 + $0x18] sm:$0xff]
    %v1276 = vld [vmem:[%s6] sm:$0xff]
    %v1277 = vld [vmem:[%s6 + $0x8] sm:$0xff]
    %v1278 = vld [vmem:[%s6 + $0x10] sm:$0xff]
    %v1279 = vld [vmem:[%s6 + $0x18] sm:$0xff]
    %v1280 = vld [vmem:[#allocation13] sm:$0xff]
    %v1281 = vld [vmem:[#allocation13 + $0x8] sm:$0xff]
    %1282 = vmatprep.subr.mxu0 0.0
    %1283 = vmatpush1.msra.mxu0 %v1272
    %1284 = vmatprep.subr.mxu0 0.0
    %1285 = vmatpush1.msra.mxu0 %v1273
    %1286 = vmatprep.subr.mxu0 0.0
    %1287 = vmatpush1.msra.mxu0 %v1274
    %1288 = vmatprep.subr.mxu0 0.0
    %1289 = vmatpush1.msra.mxu0 %v1275
    %1290 = vmatprep.subr.mxu0 0.0
    %1291 = vmatpush1.msra.mxu0 0.0
    %1292 = vmatprep.subr.mxu0 0.0
    %1293 = vmatpush1.msra.mxu0 0.0
    %1294 = vmatprep.subr.mxu0 0.0
    %1295 = vmatpush1.msra.mxu0 0.0
    %1296 = vmatprep.subr.mxu0 0.0
    %1297 = vmatpush1.msra.mxu0 0.0
    %1298 = vmatprep.subr.mxu0 0.0
    %1299 = vmatpush1.msra.mxu0 0.0
    %1300 = vmatprep.subr.mxu0 0.0
    %1301 = vmatpush1.msra.mxu0 0.0
    %1302 = vmatprep.subr.mxu0 0.0
    %1303 = vmatpush1.msra.mxu0 0.0
    %1304 = vmatprep.subr.mxu0 0.0
    %1305 = vmatpush1.msra.mxu0 0.0
    %1306 = vmatprep.subr.mxu0 0.0
    %1307 = vmatpush1.msra.mxu0 0.0
    %1308 = vmatprep.subr.mxu0 0.0
    %1309 = vmatpush1.msra.mxu0 0.0
    %1310 = vmatprep.subr.mxu0 0.0
    %1311 = vmatpush1.msra.mxu0 0.0
    %1312 = vmatprep.subr.mxu0 0.0
    %1313 = vmatpush1.msra.mxu0 0.0
    %1314 = vmatprep.subr.mxu0 0.0
    %1315 = vmatpush1.msra.mxu0 0.0
    %1316 = vmatprep.subr.mxu0 0.0
    %1317 = vmatpush1.msra.mxu0 0.0
    %1318 = vmatprep.subr.mxu0 0.0
    %1319 = vmatpush1.msra.mxu0 0.0
    %1320 = vmatprep.subr.mxu0 0.0
    %1321 = vmatpush1.msra.mxu0 0.0
    %1322 = vmatprep.subr.mxu0 0.0
    %1323 = vmatpush1.msra.mxu0 0.0
    %1324 = vmatprep.subr.mxu0 0.0
    %1325 = vmatpush1.msra.mxu0 0.0
    %1326 = vmatprep.subr.mxu0 0.0
    %1327 = vmatpush1.msra.mxu0 0.0
    %1328 = vmatprep.subr.mxu0 0.0
    %1329 = vmatpush1.msra.mxu0 0.0
    %1330 = vmatprep.subr.mxu0 0.0
    %1331 = vmatpush1.msra.mxu0 0.0
    %1332 = vmatprep.subr.mxu0 0.0
    %1333 = vmatpush1.msra.mxu0 0.0
    %1334 = vmatprep.subr.mxu0 0.0
    %1335 = vmatpush1.msra.mxu0 0.0
    %1336 = vmatprep.subr.mxu0 0.0
    %1337 = vmatpush1.msra.mxu0 0.0
    %1338 = vmatprep.subr.mxu0 0.0
    %1339 = vmatpush1.msra.mxu0 0.0
    %1340 = vmatprep.subr.mxu0 0.0
    %1341 = vmatpush1.msra.mxu0 0.0
    %1342 = vmatprep.subr.mxu0 0.0
    %1343 = vmatpush1.msra.mxu0 0.0
    %1344 = vmatprep.subr.mxu0 0.0
    %1345 = vmatpush1.msra.mxu0 0.0
    %1346 = vmatprep.mubr.f32.mxu0 0.0
    %1347 = vmatmul.mubr.f32.gmra.mrb[0].mxu0 %v769
    %v1348 = vpop.f32.mrb[0].mxu0
    %v1349 = vadd.f32 0.0, %v1348
    %v1350 = vpop.f32.mrb[0].mxu0
    %1351 = vmatprep.mubr.f32.mxu0 0.0
    %1352 = vmatmul.mubr.f32.gmra.mrb[0].mxu0 %v772
    %v1353 = vpop.f32.mrb[0].mxu0
    %v1354 = vadd.f32 0.0, %v1353
    %v1355 = vpop.f32.mrb[0].mxu0
    %1356 = vmatprep.mubr.f32.mxu0 0.0
    %1357 = vmatmul.mubr.f32.gmra.mrb[0].mxu0 %v775
    %v1358 = vpop.f32.mrb[0].mxu0
    %v1359 = vadd.f32 0.0, %v1358
    %v1360 = vpop.f32.mrb[0].mxu0
    %1361 = vmatprep.mubr.f32.mxu0 0.0
    %1362 = vmatmul.mubr.f32.gmra.mrb[0].mxu0 %v778
    %v1363 = vpop.f32.mrb[0].mxu0
    %v1364 = vadd.f32 0.0, %v1363
    %v1365 = vpop.f32.mrb[0].mxu0
    %1366 = vdwg.mxu0
    %1367 = vmatprep.subr.mxu0 0.0
    %1368 = vmatpush1.msra.mxu0 %v1272
    %1369 = vmatprep.subr.mxu0 0.0
    %1370 = vmatpush1.msra.mxu0 %v1273
    %1371 = vmatprep.subr.mxu0 0.0
    %1372 = vmatpush1.msra.mxu0 %v1274
    %1373 = vmatprep.subr.mxu0 0.0
    %1374 = vmatpush1.msra.mxu0 %v1275
    %1375 = vmatprep.subr.mxu0 0.0
    %1376 = vmatpush1.msra.mxu0 0.0
    %1377 = vmatprep.subr.mxu0 0.0
    %1378 = vmatpush1.msra.mxu0 0.0
    %1379 = vmatprep.subr.mxu0 0.0
    %1380 = vmatpush1.msra.mxu0 0.0
    %1381 = vmatprep.subr.mxu0 0.0
    %1382 = vmatpush1.msra.mxu0 0.0
    %1383 = vmatprep.subr.mxu0 0.0
    %1384 = vmatpush1.msra.mxu0 0.0
    %1385 = vmatprep.subr.mxu0 0.0
    %1386 = vmatpush1.msra.mxu0 0.0
    %1387 = vmatprep.subr.mxu0 0.0
    %1388 = vmatpush1.msra.mxu0 0.0
    %1389 = vmatprep.subr.mxu0 0.0
    %1390 = vmatpush1.msra.mxu0 0.0
    %1391 = vmatprep.subr.mxu0 0.0
    %1392 = vmatpush1.msra.mxu0 0.0
    %1393 = vmatprep.subr.mxu0 0.0
    %1394 = vmatpush1.msra.mxu0 0.0
    %1395 = vmatprep.subr.mxu0 0.0
    %1396 = vmatpush1.msra.mxu0 0.0
    %1397 = vmatprep.subr.mxu0 0.0
    %1398 = vmatpush1.msra.mxu0 0.0
    %1399 = vmatprep.subr.mxu0 0.0
    %1400 = vmatpush1.msra.mxu0 0.0
    %1401 = vmatprep.subr.mxu0 0.0
    %1402 = vmatpush1.msra.mxu0 0.0
    %1403 = vmatprep.subr.mxu0 0.0
    %1404 = vmatpush1.msra.mxu0 0.0
    %1405 = vmatprep.subr.mxu0 0.0
    %1406 = vmatpush1.msra.mxu0 0.0
    %1407 = vmatprep.subr.mxu0 0.0
    %1408 = vmatpush1.msra.mxu0 0.0
    %1409 = vmatprep.subr.mxu0 0.0
    %1410 = vmatpush1.msra.mxu0 0.0
    %1411 = vmatprep.subr.mxu0 0.0
    %1412 = vmatpush1.msra.mxu0 0.0
    %1413 = vmatprep.subr.mxu0 0.0
    %1414 = vmatpush1.msra.mxu0 0.0
    %1415 = vmatprep.subr.mxu0 0.0
    %1416 = vmatpush1.msra.mxu0 0.0
    %1417 = vmatprep.subr.mxu0 0.0
    %1418 = vmatpush1.msra.mxu0 0.0
    %1419 = vmatprep.subr.mxu0 0.0
    %1420 = vmatpush1.msra.mxu0 0.0
    %1421 = vmatprep.subr.mxu0 0.0
    %1422 = vmatpush1.msra.mxu0 0.0
    %1423 = vmatprep.subr.mxu0 0.0
    %1424 = vmatpush1.msra.mxu0 0.0
    %1425 = vmatprep.subr.mxu0 0.0
    %1426 = vmatpush1.msra.mxu0 0.0
    %1427 = vmatprep.subr.mxu0 0.0
    %1428 = vmatpush1.msra.mxu0 0.0
    %1429 = vmatprep.subr.mxu0 0.0
    %1430 = vmatpush1.msra.mxu0 0.0
    %1431 = vmatprep.mubr.f32.mxu0 0.0
    %1432 = vmatmul.mubr.f32.gmra.mrb[0].mxu0 %v866
    %v1433 = vpop.f32.mrb[0].mxu0
    %v1434 = vadd.f32 0.0, %v1433
    %v1435 = vpop.f32.mrb[0].mxu0
    %1436 = vmatprep.mubr.f32.mxu0 0.0
    %1437 = vmatmul.mubr.f32.gmra.mrb[0].mxu0 %v869
    %v1438 = vpop.f32.mrb[0].mxu0
    %v1439 = vadd.f32 0.0, %v1438
    %v1440 = vpop.f32.mrb[0].mxu0
    %1441 = vmatprep.mubr.f32.mxu0 0.0
    %1442 = vmatmul.mubr.f32.gmra.mrb[0].mxu0 %v872
    %v1443 = vpop.f32.mrb[0].mxu0
    %v1444 = vadd.f32 0.0, %v1443
    %v1445 = vpop.f32.mrb[0].mxu0
    %1446 = vmatprep.mubr.f32.mxu0 0.0
    %1447 = vmatmul.mubr.f32.gmra.mrb[0].mxu0 %v875
    %v1448 = vpop.f32.mrb[0].mxu0
    %v1449 = vadd.f32 0.0, %v1448
    %v1450 = vpop.f32.mrb[0].mxu0
    %1451 = vdwg.mxu0
    %v1453 = vsel %vm767, %v1270, 0
    %v1456 = vsel %vm767, %v1271, 0
    %1458 = vmatprep.subr.mxu0 0.0
    %1459 = vmatpush1.msra.mxu0 %v1349
    %1460 = vmatprep.subr.mxu0 0.0
    %1461 = vmatpush1.msra.mxu0 %v1354
    %1462 = vmatprep.subr.mxu0 0.0
    %1463 = vmatpush1.msra.mxu0 %v1359
    %1464 = vmatprep.subr.mxu0 0.0
    %1465 = vmatpush1.msra.mxu0 %v1364
    %1466 = vmatprep.subr.mxu0 0.0
    %1467 = vmatpush1.msra.mxu0 0.0
    %1468 = vmatprep.subr.mxu0 0.0
    %1469 = vmatpush1.msra.mxu0 0.0
    %1470 = vmatprep.subr.mxu0 0.0
    %1471 = vmatpush1.msra.mxu0 0.0
    %1472 = vmatprep.subr.mxu0 0.0
    %1473 = vmatpush1.msra.mxu0 0.0
    %1474 = vmatprep.subr.mxu0 0.0
    %1475 = vmatpush1.msra.mxu0 0.0
    %1476 = vmatprep.subr.mxu0 0.0
    %1477 = vmatpush1.msra.mxu0 0.0
    %1478 = vmatprep.subr.mxu0 0.0
    %1479 = vmatpush1.msra.mxu0 0.0
    %1480 = vmatprep.subr.mxu0 0.0
    %1481 = vmatpush1.msra.mxu0 0.0
    %1482 = vmatprep.subr.mxu0 0.0
    %1483 = vmatpush1.msra.mxu0 0.0
    %1484 = vmatprep.subr.mxu0 0.0
    %1485 = vmatpush1.msra.mxu0 0.0
    %1486 = vmatprep.subr.mxu0 0.0
    %1487 = vmatpush1.msra.mxu0 0.0
    %1488 = vmatprep.subr.mxu0 0.0
    %1489 = vmatpush1.msra.mxu0 0.0
    %1490 = vmatprep.subr.mxu0 0.0
    %1491 = vmatpush1.msra.mxu0 0.0
    %1492 = vmatprep.subr.mxu0 0.0
    %1493 = vmatpush1.msra.mxu0 0.0
    %1494 = vmatprep.subr.mxu0 0.0
    %1495 = vmatpush1.msra.mxu0 0.0
    %1496 = vmatprep.subr.mxu0 0.0
    %1497 = vmatpush1.msra.mxu0 0.0
    %1498 = vmatprep.subr.mxu0 0.0
    %1499 = vmatpush1.msra.mxu0 0.0
    %1500 = vmatprep.subr.mxu0 0.0
    %1501 = vmatpush1.msra.mxu0 0.0
    %1502 = vmatprep.subr.mxu0 0.0
    %1503 = vmatpush1.msra.mxu0 0.0
    %1504 = vmatprep.subr.mxu0 0.0
    %1505 = vmatpush1.msra.mxu0 0.0
    %1506 = vmatprep.subr.mxu0 0.0
    %1507 = vmatpush1.msra.mxu0 0.0
    %1508 = vmatprep.subr.mxu0 0.0
    %1509 = vmatpush1.msra.mxu0 0.0
    %1510 = vmatprep.subr.mxu0 0.0
    %1511 = vmatpush1.msra.mxu0 0.0
    %1512 = vmatprep.subr.mxu0 0.0
    %1513 = vmatpush1.msra.mxu0 0.0
    %1514 = vmatprep.subr.mxu0 0.0
    %1515 = vmatpush1.msra.mxu0 0.0
    %1516 = vmatprep.subr.mxu0 0.0
    %1517 = vmatpush1.msra.mxu0 0.0
    %1518 = vmatprep.subr.mxu0 0.0
    %1519 = vmatpush1.msra.mxu0 0.0
    %1520 = vmatprep.subr.mxu0 0.0
    %1521 = vmatpush1.msra.mxu0 0.0
    %1522 = vmatprep.mubr.f32.mxu0 0.0
    %1523 = vmatmul.mubr.f32.gmra.mrb[0].mxu0 %v1453
    %v1524 = vpop.f32.mrb[0].mxu0
    %v1525 = vadd.f32 0.0, %v1524
    %v1526 = vpop.f32.mrb[0].mxu0
    %1527 = vmatprep.mubr.f32.mxu0 0.0
    %1528 = vmatmul.mubr.f32.gmra.mrb[0].mxu0 %v1456
    %v1529 = vpop.f32.mrb[0].mxu0
    %v1530 = vadd.f32 0.0, %v1529
    %v1531 = vpop.f32.mrb[0].mxu0
    %1532 = vdwg.mxu0
    %1533 = vmatprep.subr.mxu0 0.0
    %1534 = vmatpush1.msra.mxu0 %v1434
    %1535 = vmatprep.subr.mxu0 0.0
    %1536 = vmatpush1.msra.mxu0 %v1439
    %1537 = vmatprep.subr.mxu0 0.0
    %1538 = vmatpush1.msra.mxu0 %v1444
    %1539 = vmatprep.subr.mxu0 0.0
    %1540 = vmatpush1.msra.mxu0 %v1449
    %1541 = vmatprep.subr.mxu0 0.0
    %1542 = vmatpush1.msra.mxu0 0.0
    %1543 = vmatprep.subr.mxu0 0.0
    %1544 = vmatpush1.msra.mxu0 0.0
    %1545 = vmatprep.subr.mxu0 0.0
    %1546 = vmatpush1.msra.mxu0 0.0
    %1547 = vmatprep.subr.mxu0 0.0
    %1548 = vmatpush1.msra.mxu0 0.0
    %1549 = vmatprep.subr.mxu0 0.0
    %1550 = vmatpush1.msra.mxu0 0.0
    %1551 = vmatprep.subr.mxu0 0.0
    %1552 = vmatpush1.msra.mxu0 0.0
    %1553 = vmatprep.subr.mxu0 0.0
    %1554 = vmatpush1.msra.mxu0 0.0
    %1555 = vmatprep.subr.mxu0 0.0
    %1556 = vmatpush1.msra.mxu0 0.0
    %1557 = vmatprep.subr.mxu0 0.0
    %1558 = vmatpush1.msra.mxu0 0.0
    %1559 = vmatprep.subr.mxu0 0.0
    %1560 = vmatpush1.msra.mxu0 0.0
    %1561 = vmatprep.subr.mxu0 0.0
    %1562 = vmatpush1.msra.mxu0 0.0
    %1563 = vmatprep.subr.mxu0 0.0
    %1564 = vmatpush1.msra.mxu0 0.0
    %1565 = vmatprep.subr.mxu0 0.0
    %1566 = vmatpush1.msra.mxu0 0.0
    %1567 = vmatprep.subr.mxu0 0.0
    %1568 = vmatpush1.msra.mxu0 0.0
    %1569 = vmatprep.subr.mxu0 0.0
    %1570 = vmatpush1.msra.mxu0 0.0
    %1571 = vmatprep.subr.mxu0 0.0
    %1572 = vmatpush1.msra.mxu0 0.0
    %1573 = vmatprep.subr.mxu0 0.0
    %1574 = vmatpush1.msra.mxu0 0.0
    %1575 = vmatprep.subr.mxu0 0.0
    %1576 = vmatpush1.msra.mxu0 0.0
    %1577 = vmatprep.subr.mxu0 0.0
    %1578 = vmatpush1.msra.mxu0 0.0
    %1579 = vmatprep.subr.mxu0 0.0
    %1580 = vmatpush1.msra.mxu0 0.0
    %1581 = vmatprep.subr.mxu0 0.0
    %1582 = vmatpush1.msra.mxu0 0.0
    %1583 = vmatprep.subr.mxu0 0.0
    %1584 = vmatpush1.msra.mxu0 0.0
    %1585 = vmatprep.subr.mxu0 0.0
    %1586 = vmatpush1.msra.mxu0 0.0
    %1587 = vmatprep.subr.mxu0 0.0
    %1588 = vmatpush1.msra.mxu0 0.0
    %1589 = vmatprep.subr.mxu0 0.0
    %1590 = vmatpush1.msra.mxu0 0.0
    %1591 = vmatprep.subr.mxu0 0.0
    %1592 = vmatpush1.msra.mxu0 0.0
    %1593 = vmatprep.subr.mxu0 0.0
    %1594 = vmatpush1.msra.mxu0 0.0
    %1595 = vmatprep.subr.mxu0 0.0
    %1596 = vmatpush1.msra.mxu0 0.0
    %1597 = vmatprep.mubr.f32.mxu0 0.0
    %1598 = vmatmul.mubr.f32.gmra.mrb[0].mxu0 %v1453
    %v1599 = vpop.f32.mrb[0].mxu0
    %v1600 = vadd.f32 0.0, %v1599
    %v1601 = vpop.f32.mrb[0].mxu0
    %1602 = vmatprep.mubr.f32.mxu0 0.0
    %1603 = vmatmul.mubr.f32.gmra.mrb[0].mxu0 %v1456
    %v1604 = vpop.f32.mrb[0].mxu0
    %v1605 = vadd.f32 0.0, %v1604
    %v1606 = vpop.f32.mrb[0].mxu0
    %1607 = vdwg.mxu0
    %vm1608 = vcmask 130048
    %v1610 = vsel %vm1608, %v1525, 0
    %v1613 = vsel %vm1608, %v1530, 0
    %1615 = vmatprep.subr.mxu0 0.0
    %1616 = vmatpush1.msra.mxu0 %v1280
    %1617 = vmatprep.subr.mxu0 0.0
    %1618 = vmatpush1.msra.mxu0 %v1281
    %1619 = vmatprep.subr.mxu0 0.0
    %1620 = vmatpush1.msra.mxu0 0.0
    %1621 = vmatprep.subr.mxu0 0.0
    %1622 = vmatpush1.msra.mxu0 0.0
    %1623 = vmatprep.subr.mxu0 0.0
    %1624 = vmatpush1.msra.mxu0 0.0
    %1625 = vmatprep.subr.mxu0 0.0
    %1626 = vmatpush1.msra.mxu0 0.0
    %1627 = vmatprep.subr.mxu0 0.0
    %1628 = vmatpush1.msra.mxu0 0.0
    %1629 = vmatprep.subr.mxu0 0.0
    %1630 = vmatpush1.msra.mxu0 0.0
    %1631 = vmatprep.subr.mxu0 0.0
    %1632 = vmatpush1.msra.mxu0 0.0
    %1633 = vmatprep.subr.mxu0 0.0
    %1634 = vmatpush1.msra.mxu0 0.0
    %1635 = vmatprep.subr.mxu0 0.0
    %1636 = vmatpush1.msra.mxu0 0.0
    %1637 = vmatprep.subr.mxu0 0.0
    %1638 = vmatpush1.msra.mxu0 0.0
    %1639 = vmatprep.subr.mxu0 0.0
    %1640 = vmatpush1.msra.mxu0 0.0
    %1641 = vmatprep.subr.mxu0 0.0
    %1642 = vmatpush1.msra.mxu0 0.0
    %1643 = vmatprep.subr.mxu0 0.0
    %1644 = vmatpush1.msra.mxu0 0.0
    %1645 = vmatprep.subr.mxu0 0.0
    %1646 = vmatpush1.msra.mxu0 0.0
    %1647 = vmatprep.subr.mxu0 0.0
    %1648 = vmatpush1.msra.mxu0 0.0
    %1649 = vmatprep.subr.mxu0 0.0
    %1650 = vmatpush1.msra.mxu0 0.0
    %1651 = vmatprep.subr.mxu0 0.0
    %1652 = vmatpush1.msra.mxu0 0.0
    %1653 = vmatprep.subr.mxu0 0.0
    %1654 = vmatpush1.msra.mxu0 0.0
    %1655 = vmatprep.subr.mxu0 0.0
    %1656 = vmatpush1.msra.mxu0 0.0
    %1657 = vmatprep.subr.mxu0 0.0
    %1658 = vmatpush1.msra.mxu0 0.0
    %1659 = vmatprep.subr.mxu0 0.0
    %1660 = vmatpush1.msra.mxu0 0.0
    %1661 = vmatprep.subr.mxu0 0.0
    %1662 = vmatpush1.msra.mxu0 0.0
    %1663 = vmatprep.subr.mxu0 0.0
    %1664 = vmatpush1.msra.mxu0 0.0
    %1665 = vmatprep.subr.mxu0 0.0
    %1666 = vmatpush1.msra.mxu0 0.0
    %1667 = vmatprep.subr.mxu0 0.0
    %1668 = vmatpush1.msra.mxu0 0.0
    %1669 = vmatprep.subr.mxu0 0.0
    %1670 = vmatpush1.msra.mxu0 0.0
    %1671 = vmatprep.subr.mxu0 0.0
    %1672 = vmatpush1.msra.mxu0 0.0
    %1673 = vmatprep.subr.mxu0 0.0
    %1674 = vmatpush1.msra.mxu0 0.0
    %1675 = vmatprep.subr.mxu0 0.0
    %1676 = vmatpush1.msra.mxu0 0.0
    %1677 = vmatprep.subr.mxu0 0.0
    %1678 = vmatpush1.msra.mxu0 0.0
    %1679 = vmatprep.mubr.f32.mxu0 0.0
    %1680 = vmatmul.mubr.f32.gmra.mrb[0].mxu0 %v1610
    %v1681 = vpop.f32.mrb[0].mxu0
    %v1682 = vadd.f32 0.0, %v1681
    %v1683 = vpop.f32.mrb[0].mxu0
    %1684 = vmatprep.mubr.f32.mxu0 0.0
    %1685 = vmatmul.mubr.f32.gmra.mrb[0].mxu0 %v1613
    %v1686 = vpop.f32.mrb[0].mxu0
    %v1687 = vadd.f32 0.0, %v1686
    %v1688 = vpop.f32.mrb[0].mxu0
    %1689 = vdwg.mxu0
    %v1691 = vsel %vm1608, %v1600, 0
    %v1694 = vsel %vm1608, %v1605, 0
    %1696 = vmatprep.subr.mxu0 0.0
    %1697 = vmatpush1.msra.mxu0 %v1280
    %1698 = vmatprep.subr.mxu0 0.0
    %1699 = vmatpush1.msra.mxu0 %v1281
    %1700 = vmatprep.subr.mxu0 0.0
    %1701 = vmatpush1.msra.mxu0 0.0
    %1702 = vmatprep.subr.mxu0 0.0
    %1703 = vmatpush1.msra.mxu0 0.0
    %1704 = vmatprep.subr.mxu0 0.0
    %1705 = vmatpush1.msra.mxu0 0.0
    %1706 = vmatprep.subr.mxu0 0.0
    %1707 = vmatpush1.msra.mxu0 0.0
    %1708 = vmatprep.subr.mxu0 0.0
    %1709 = vmatpush1.msra.mxu0 0.0
    %1710 = vmatprep.subr.mxu0 0.0
    %1711 = vmatpush1.msra.mxu0 0.0
    %1712 = vmatprep.subr.mxu0 0.0
    %1713 = vmatpush1.msra.mxu0 0.0
    %1714 = vmatprep.subr.mxu0 0.0
    %1715 = vmatpush1.msra.mxu0 0.0
    %1716 = vmatprep.subr.mxu0 0.0
    %1717 = vmatpush1.msra.mxu0 0.0
    %1718 = vmatprep.subr.mxu0 0.0
    %1719 = vmatpush1.msra.mxu0 0.0
    %1720 = vmatprep.subr.mxu0 0.0
    %1721 = vmatpush1.msra.mxu0 0.0
    %1722 = vmatprep.subr.mxu0 0.0
    %1723 = vmatpush1.msra.mxu0 0.0
    %1724 = vmatprep.subr.mxu0 0.0
    %1725 = vmatpush1.msra.mxu0 0.0
    %1726 = vmatprep.subr.mxu0 0.0
    %1727 = vmatpush1.msra.mxu0 0.0
    %1728 = vmatprep.subr.mxu0 0.0
    %1729 = vmatpush1.msra.mxu0 0.0
    %1730 = vmatprep.subr.mxu0 0.0
    %1731 = vmatpush1.msra.mxu0 0.0
    %1732 = vmatprep.subr.mxu0 0.0
    %1733 = vmatpush1.msra.mxu0 0.0
    %1734 = vmatprep.subr.mxu0 0.0
    %1735 = vmatpush1.msra.mxu0 0.0
    %1736 = vmatprep.subr.mxu0 0.0
    %1737 = vmatpush1.msra.mxu0 0.0
    %1738 = vmatprep.subr.mxu0 0.0
    %1739 = vmatpush1.msra.mxu0 0.0
    %1740 = vmatprep.subr.mxu0 0.0
    %1741 = vmatpush1.msra.mxu0 0.0
    %1742 = vmatprep.subr.mxu0 0.0
    %1743 = vmatpush1.msra.mxu0 0.0
    %1744 = vmatprep.subr.mxu0 0.0
    %1745 = vmatpush1.msra.mxu0 0.0
    %1746 = vmatprep.subr.mxu0 0.0
    %1747 = vmatpush1.msra.mxu0 0.0
    %1748 = vmatprep.subr.mxu0 0.0
    %1749 = vmatpush1.msra.mxu0 0.0
    %1750 = vmatprep.subr.mxu0 0.0
    %1751 = vmatpush1.msra.mxu0 0.0
    %1752 = vmatprep.subr.mxu0 0.0
    %1753 = vmatpush1.msra.mxu0 0.0
    %1754 = vmatprep.subr.mxu0 0.0
    %1755 = vmatpush1.msra.mxu0 0.0
    %1756 = vmatprep.subr.mxu0 0.0
    %1757 = vmatpush1.msra.mxu0 0.0
    %1758 = vmatprep.subr.mxu0 0.0
    %1759 = vmatpush1.msra.mxu0 0.0
    %1760 = vmatprep.mubr.f32.mxu0 0.0
    %1761 = vmatmul.mubr.f32.gmra.mrb[0].mxu0 %v1691
    %v1762 = vpop.f32.mrb[0].mxu0
    %v1763 = vadd.f32 0.0, %v1762
    %v1764 = vpop.f32.mrb[0].mxu0
    %1765 = vmatprep.mubr.f32.mxu0 0.0
    %1766 = vmatmul.mubr.f32.gmra.mrb[0].mxu0 %v1694
    %v1767 = vpop.f32.mrb[0].mxu0
    %v1768 = vadd.f32 0.0, %v1767
    %v1769 = vpop.f32.mrb[0].mxu0
    %1770 = vdwg.mxu0
    %v1772 = vsel %vm1608, %v1276, 0
    %v1775 = vsel %vm1608, %v1277, 0
    %v1778 = vsel %vm1608, %v1278, 0
    %v1781 = vsel %vm1608, %v1279, 0
    %1783 = vmatprep.subr.mxu0 0.0
    %1784 = vmatpush1.msra.mxu0 %v1682
    %1785 = vmatprep.subr.mxu0 0.0
    %1786 = vmatpush1.msra.mxu0 %v1687
    %1787 = vmatprep.subr.mxu0 0.0
    %1788 = vmatpush1.msra.mxu0 0.0
    %1789 = vmatprep.subr.mxu0 0.0
    %1790 = vmatpush1.msra.mxu0 0.0
    %1791 = vmatprep.subr.mxu0 0.0
    %1792 = vmatpush1.msra.mxu0 0.0
    %1793 = vmatprep.subr.mxu0 0.0
    %1794 = vmatpush1.msra.mxu0 0.0
    %1795 = vmatprep.subr.mxu0 0.0
    %1796 = vmatpush1.msra.mxu0 0.0
    %1797 = vmatprep.subr.mxu0 0.0
    %1798 = vmatpush1.msra.mxu0 0.0
    %1799 = vmatprep.subr.mxu0 0.0
    %1800 = vmatpush1.msra.mxu0 0.0
    %1801 = vmatprep.subr.mxu0 0.0
    %1802 = vmatpush1.msra.mxu0 0.0
    %1803 = vmatprep.subr.mxu0 0.0
    %1804 = vmatpush1.msra.mxu0 0.0
    %1805 = vmatprep.subr.mxu0 0.0
    %1806 = vmatpush1.msra.mxu0 0.0
    %1807 = vmatprep.subr.mxu0 0.0
    %1808 = vmatpush1.msra.mxu0 0.0
    %1809 = vmatprep.subr.mxu0 0.0
    %1810 = vmatpush1.msra.mxu0 0.0
    %1811 = vmatprep.subr.mxu0 0.0
    %1812 = vmatpush1.msra.mxu0 0.0
    %1813 = vmatprep.subr.mxu0 0.0
    %1814 = vmatpush1.msra.mxu0 0.0
    %1815 = vmatprep.subr.mxu0 0.0
    %1816 = vmatpush1.msra.mxu0 0.0
    %1817 = vmatprep.subr.mxu0 0.0
    %1818 = vmatpush1.msra.mxu0 0.0
    %1819 = vmatprep.subr.mxu0 0.0
    %1820 = vmatpush1.msra.mxu0 0.0
    %1821 = vmatprep.subr.mxu0 0.0
    %1822 = vmatpush1.msra.mxu0 0.0
    %1823 = vmatprep.subr.mxu0 0.0
    %1824 = vmatpush1.msra.mxu0 0.0
    %1825 = vmatprep.subr.mxu0 0.0
    %1826 = vmatpush1.msra.mxu0 0.0
    %1827 = vmatprep.subr.mxu0 0.0
    %1828 = vmatpush1.msra.mxu0 0.0
    %1829 = vmatprep.subr.mxu0 0.0
    %1830 = vmatpush1.msra.mxu0 0.0
    %1831 = vmatprep.subr.mxu0 0.0
    %1832 = vmatpush1.msra.mxu0 0.0
    %1833 = vmatprep.subr.mxu0 0.0
    %1834 = vmatpush1.msra.mxu0 0.0
    %1835 = vmatprep.subr.mxu0 0.0
    %1836 = vmatpush1.msra.mxu0 0.0
    %1837 = vmatprep.subr.mxu0 0.0
    %1838 = vmatpush1.msra.mxu0 0.0
    %1839 = vmatprep.subr.mxu0 0.0
    %1840 = vmatpush1.msra.mxu0 0.0
    %1841 = vmatprep.subr.mxu0 0.0
    %1842 = vmatpush1.msra.mxu0 0.0
    %1843 = vmatprep.subr.mxu0 0.0
    %1844 = vmatpush1.msra.mxu0 0.0
    %1845 = vmatprep.subr.mxu0 0.0
    %1846 = vmatpush1.msra.mxu0 0.0
    %1847 = vmatprep.mubr.f32.mxu0 0.0
    %1848 = vmatmul.mubr.f32.gmra.mrb[0].mxu0 %v1772
    %v1849 = vpop.f32.mrb[0].mxu0
    %v1850 = vadd.f32 0.0, %v1849
    %v1851 = vpop.f32.mrb[0].mxu0
    %1852 = vmatprep.mubr.f32.mxu0 0.0
    %1853 = vmatmul.mubr.f32.gmra.mrb[0].mxu0 %v1775
    %v1854 = vpop.f32.mrb[0].mxu0
    %v1855 = vadd.f32 0.0, %v1854
    %v1856 = vpop.f32.mrb[0].mxu0
    %1857 = vmatprep.mubr.f32.mxu0 0.0
    %1858 = vmatmul.mubr.f32.gmra.mrb[0].mxu0 %v1778
    %v1859 = vpop.f32.mrb[0].mxu0
    %v1860 = vadd.f32 0.0, %v1859
    %v1861 = vpop.f32.mrb[0].mxu0
    %1862 = vmatprep.mubr.f32.mxu0 0.0
    %1863 = vmatmul.mubr.f32.gmra.mrb[0].mxu0 %v1781
    %v1864 = vpop.f32.mrb[0].mxu0
    %v1865 = vadd.f32 0.0, %v1864
    %v1866 = vpop.f32.mrb[0].mxu0
    %1867 = vdwg.mxu0
    %1868 = vmatprep.subr.mxu0 0.0
    %1869 = vmatpush1.msra.mxu0 %v1763
    %1870 = vmatprep.subr.mxu0 0.0
    %1871 = vmatpush1.msra.mxu0 %v1768
    %1872 = vmatprep.subr.mxu0 0.0
    %1873 = vmatpush1.msra.mxu0 0.0
    %1874 = vmatprep.subr.mxu0 0.0
    %1875 = vmatpush1.msra.mxu0 0.0
    %1876 = vmatprep.subr.mxu0 0.0
    %1877 = vmatpush1.msra.mxu0 0.0
    %1878 = vmatprep.subr.mxu0 0.0
    %1879 = vmatpush1.msra.mxu0 0.0
    %1880 = vmatprep.subr.mxu0 0.0
    %1881 = vmatpush1.msra.mxu0 0.0
    %1882 = vmatprep.subr.mxu0 0.0
    %1883 = vmatpush1.msra.mxu0 0.0
    %1884 = vmatprep.subr.mxu0 0.0
    %1885 = vmatpush1.msra.mxu0 0.0
    %1886 = vmatprep.subr.mxu0 0.0
    %1887 = vmatpush1.msra.mxu0 0.0
    %1888 = vmatprep.subr.mxu0 0.0
    %1889 = vmatpush1.msra.mxu0 0.0
    %1890 = vmatprep.subr.mxu0 0.0
    %1891 = vmatpush1.msra.mxu0 0.0
    %1892 = vmatprep.subr.mxu0 0.0
    %1893 = vmatpush1.msra.mxu0 0.0
    %1894 = vmatprep.subr.mxu0 0.0
    %1895 = vmatpush1.msra.mxu0 0.0
    %1896 = vmatprep.subr.mxu0 0.0
    %1897 = vmatpush1.msra.mxu0 0.0
    %1898 = vmatprep.subr.mxu0 0.0
    %1899 = vmatpush1.msra.mxu0 0.0
    %1900 = vmatprep.subr.mxu0 0.0
    %1901 = vmatpush1.msra.mxu0 0.0
    %1902 = vmatprep.subr.mxu0 0.0
    %1903 = vmatpush1.msra.mxu0 0.0
    %1904 = vmatprep.subr.mxu0 0.0
    %1905 = vmatpush1.msra.mxu0 0.0
    %1906 = vmatprep.subr.mxu0 0.0
    %1907 = vmatpush1.msra.mxu0 0.0
    %1908 = vmatprep.subr.mxu0 0.0
    %1909 = vmatpush1.msra.mxu0 0.0
    %1910 = vmatprep.subr.mxu0 0.0
    %1911 = vmatpush1.msra.mxu0 0.0
    %1912 = vmatprep.subr.mxu0 0.0
    %1913 = vmatpush1.msra.mxu0 0.0
    %1914 = vmatprep.subr.mxu0 0.0
    %1915 = vmatpush1.msra.mxu0 0.0
    %1916 = vmatprep.subr.mxu0 0.0
    %1917 = vmatpush1.msra.mxu0 0.0
    %1918 = vmatprep.subr.mxu0 0.0
    %1919 = vmatpush1.msra.mxu0 0.0
    %1920 = vmatprep.subr.mxu0 0.0
    %1921 = vmatpush1.msra.mxu0 0.0
    %1922 = vmatprep.subr.mxu0 0.0
    %1923 = vmatpush1.msra.mxu0 0.0
    %1924 = vmatprep.subr.mxu0 0.0
    %1925 = vmatpush1.msra.mxu0 0.0
    %1926 = vmatprep.subr.mxu0 0.0
    %1927 = vmatpush1.msra.mxu0 0.0
    %1928 = vmatprep.subr.mxu0 0.0
    %1929 = vmatpush1.msra.mxu0 0.0
    %1930 = vmatprep.subr.mxu0 0.0
    %1931 = vmatpush1.msra.mxu0 0.0
    %1932 = vmatprep.mubr.f32.mxu0 0.0
    %1933 = vmatmul.mubr.f32.gmra.mrb[0].mxu0 %v1772
    %v1934 = vpop.f32.mrb[0].mxu0
    %v1935 = vadd.f32 0.0, %v1934
    %v1936 = vpop.f32.mrb[0].mxu0
    %1937 = vmatprep.mubr.f32.mxu0 0.0
    %1938 = vmatmul.mubr.f32.gmra.mrb[0].mxu0 %v1775
    %v1939 = vpop.f32.mrb[0].mxu0
    %v1940 = vadd.f32 0.0, %v1939
    %v1941 = vpop.f32.mrb[0].mxu0
    %1942 = vmatprep.mubr.f32.mxu0 0.0
    %1943 = vmatmul.mubr.f32.gmra.mrb[0].mxu0 %v1778
    %v1944 = vpop.f32.mrb[0].mxu0
    %v1945 = vadd.f32 0.0, %v1944
    %v1946 = vpop.f32.mrb[0].mxu0
    %1947 = vmatprep.mubr.f32.mxu0 0.0
    %1948 = vmatmul.mubr.f32.gmra.mrb[0].mxu0 %v1781
    %v1949 = vpop.f32.mrb[0].mxu0
    %v1950 = vadd.f32 0.0, %v1949
    %v1951 = vpop.f32.mrb[0].mxu0
    %1952 = vdwg.mxu0
    %v1953 = vsub.f32 %v664, %v1850
    %v1954 = vsub.f32 %v669, %v1855
    %v1955 = vsub.f32 %v674, %v1860
    %v1956 = vsub.f32 %v679, %v1865
    %v1957 = vsub.f32 %v749, %v1935
    %v1958 = vsub.f32 %v754, %v1940
    %v1959 = vsub.f32 %v759, %v1945
    %v1960 = vsub.f32 %v764, %v1950
    %v1961 = vand.u32 2147483647, %v1953
    %v1962 = vand.u32 2147483647, %v1954
    %v1963 = vand.u32 2147483647, %v1955
    %v1964 = vand.u32 2147483647, %v1956
    %v1965 = vand.u32 2147483647, %v1957
    %v1966 = vand.u32 2147483647, %v1958
    %v1967 = vand.u32 2147483647, %v1959
    %v1968 = vand.u32 2147483647, %v1960
    %v1969 = vsel %vm767, %v1961, 0.0
    %v1970 = vsel %vm767, %v1962, 0.0
    %v1971 = vadd.f32 %v1969, %v1970
    %v1972 = vsel %vm767, %v1963, 0.0
    %v1973 = vadd.f32 %v1971, %v1972
    %v1974 = vsel %vm767, %v1964, 0.0
    %v1975 = vadd.f32 %v1973, %v1974
    %v1976 = vsel %vm767, %v1965, 0.0
    %v1977 = vadd.f32 %v1975, %v1976
    %v1978 = vsel %vm767, %v1966, 0.0
    %v1979 = vadd.f32 %v1977, %v1978
    %v1980 = vsel %vm767, %v1967, 0.0
    %v1981 = vadd.f32 %v1979, %v1980
    %v1982 = vsel %vm767, %v1968, 0.0
    %v1983 = vadd.f32 %v1981, %v1982
    %1984 = vadd.xlane.f32.xlu0 %v1983
    %v1985 = vpop.xlane.xlu0 %1984
    %v1986 = vrot.slane %v1985, 4
    %v1987 = vadd.f32 %v1985, %v1986
    %v1988 = vrot.slane %v1987, 2
    %v1989 = vadd.f32 %v1987, %v1988
    %v1990 = vrot.slane %v1989, 1
    %v1991 = vadd.f32 %v1989, %v1990
    %s1992 = vtos %v1991
    %s1993 = smul.f32 %s1992, 0.001953125
    %s1994 = sadd.f32 %s1269, %s1993
    %v1995 = vld [vmem:[#allocation14] sm:$0xff]
    %v1996 = vld [vmem:[#allocation16] sm:$0xff]
    %v1997 = vld [vmem:[#allocation16 + $0x8] sm:$0xff]
    %v1998 = vld [vmem:[%s10] sm:$0xff]
    %v1999 = vld [vmem:[%s10 + $0x8] sm:$0xff]
    %v2000 = vld [vmem:[#allocation17] sm:$0xff]
    %2001 = vmatprep.subr.mxu0 0.0
    %2002 = vmatpush1.msra.mxu0 %v1996
    %2003 = vmatprep.subr.mxu0 0.0
    %2004 = vmatpush1.msra.mxu0 %v1997
    %2005 = vmatprep.subr.mxu0 0.0
    %2006 = vmatpush1.msra.mxu0 0.0
    %2007 = vmatprep.subr.mxu0 0.0
    %2008 = vmatpush1.msra.mxu0 0.0
    %2009 = vmatprep.subr.mxu0 0.0
    %2010 = vmatpush1.msra.mxu0 0.0
    %2011 = vmatprep.subr.mxu0 0.0
    %2012 = vmatpush1.msra.mxu0 0.0
    %2013 = vmatprep.subr.mxu0 0.0
    %2014 = vmatpush1.msra.mxu0 0.0
    %2015 = vmatprep.subr.mxu0 0.0
    %2016 = vmatpush1.msra.mxu0 0.0
    %2017 = vmatprep.subr.mxu0 0.0
    %2018 = vmatpush1.msra.mxu0 0.0
    %2019 = vmatprep.subr.mxu0 0.0
    %2020 = vmatpush1.msra.mxu0 0.0
    %2021 = vmatprep.subr.mxu0 0.0
    %2022 = vmatpush1.msra.mxu0 0.0
    %2023 = vmatprep.subr.mxu0 0.0
    %2024 = vmatpush1.msra.mxu0 0.0
    %2025 = vmatprep.subr.mxu0 0.0
    %2026 = vmatpush1.msra.mxu0 0.0
    %2027 = vmatprep.subr.mxu0 0.0
    %2028 = vmatpush1.msra.mxu0 0.0
    %2029 = vmatprep.subr.mxu0 0.0
    %2030 = vmatpush1.msra.mxu0 0.0
    %2031 = vmatprep.subr.mxu0 0.0
    %2032 = vmatpush1.msra.mxu0 0.0
    %2033 = vmatprep.subr.mxu0 0.0
    %2034 = vmatpush1.msra.mxu0 0.0
    %2035 = vmatprep.subr.mxu0 0.0
    %2036 = vmatpush1.msra.mxu0 0.0
    %2037 = vmatprep.subr.mxu0 0.0
    %2038 = vmatpush1.msra.mxu0 0.0
    %2039 = vmatprep.subr.mxu0 0.0
    %2040 = vmatpush1.msra.mxu0 0.0
    %2041 = vmatprep.subr.mxu0 0.0
    %2042 = vmatpush1.msra.mxu0 0.0
    %2043 = vmatprep.subr.mxu0 0.0
    %2044 = vmatpush1.msra.mxu0 0.0
    %2045 = vmatprep.subr.mxu0 0.0
    %2046 = vmatpush1.msra.mxu0 0.0
    %2047 = vmatprep.subr.mxu0 0.0
    %2048 = vmatpush1.msra.mxu0 0.0
    %2049 = vmatprep.subr.mxu0 0.0
    %2050 = vmatpush1.msra.mxu0 0.0
    %2051 = vmatprep.subr.mxu0 0.0
    %2052 = vmatpush1.msra.mxu0 0.0
    %2053 = vmatprep.subr.mxu0 0.0
    %2054 = vmatpush1.msra.mxu0 0.0
    %2055 = vmatprep.subr.mxu0 0.0
    %2056 = vmatpush1.msra.mxu0 0.0
    %2057 = vmatprep.subr.mxu0 0.0
    %2058 = vmatpush1.msra.mxu0 0.0
    %2059 = vmatprep.subr.mxu0 0.0
    %2060 = vmatpush1.msra.mxu0 0.0
    %2061 = vmatprep.subr.mxu0 0.0
    %2062 = vmatpush1.msra.mxu0 0.0
    %2063 = vmatprep.subr.mxu0 0.0
    %2064 = vmatpush1.msra.mxu0 0.0
    %2065 = vmatprep.mubr.f32.mxu0 0.0
    %2066 = vmatmul.mubr.f32.gmra.mrb[0].mxu0 %v1610
    %v2067 = vpop.f32.mrb[0].mxu0
    %v2068 = vadd.f32 0.0, %v2067
    %v2069 = vpop.f32.mrb[0].mxu0
    %2070 = vmatprep.mubr.f32.mxu0 0.0
    %2071 = vmatmul.mubr.f32.gmra.mrb[0].mxu0 %v1613
    %v2072 = vpop.f32.mrb[0].mxu0
    %v2073 = vadd.f32 0.0, %v2072
    %v2074 = vpop.f32.mrb[0].mxu0
    %2075 = vdwg.mxu0
    %2076 = vmatprep.subr.mxu0 0.0
    %2077 = vmatpush1.msra.mxu0 %v1996
    %2078 = vmatprep.subr.mxu0 0.0
    %2079 = vmatpush1.msra.mxu0 %v1997
    %2080 = vmatprep.subr.mxu0 0.0
    %2081 = vmatpush1.msra.mxu0 0.0
    %2082 = vmatprep.subr.mxu0 0.0
    %2083 = vmatpush1.msra.mxu0 0.0
    %2084 = vmatprep.subr.mxu0 0.0
    %2085 = vmatpush1.msra.mxu0 0.0
    %2086 = vmatprep.subr.mxu0 0.0
    %2087 = vmatpush1.msra.mxu0 0.0
    %2088 = vmatprep.subr.mxu0 0.0
    %2089 = vmatpush1.msra.mxu0 0.0
    %2090 = vmatprep.subr.mxu0 0.0
    %2091 = vmatpush1.msra.mxu0 0.0
    %2092 = vmatprep.subr.mxu0 0.0
    %2093 = vmatpush1.msra.mxu0 0.0
    %2094 = vmatprep.subr.mxu0 0.0
    %2095 = vmatpush1.msra.mxu0 0.0
    %2096 = vmatprep.subr.mxu0 0.0
    %2097 = vmatpush1.msra.mxu0 0.0
    %2098 = vmatprep.subr.mxu0 0.0
    %2099 = vmatpush1.msra.mxu0 0.0
    %2100 = vmatprep.subr.mxu0 0.0
    %2101 = vmatpush1.msra.mxu0 0.0
    %2102 = vmatprep.subr.mxu0 0.0
    %2103 = vmatpush1.msra.mxu0 0.0
    %2104 = vmatprep.subr.mxu0 0.0
    %2105 = vmatpush1.msra.mxu0 0.0
    %2106 = vmatprep.subr.mxu0 0.0
    %2107 = vmatpush1.msra.mxu0 0.0
    %2108 = vmatprep.subr.mxu0 0.0
    %2109 = vmatpush1.msra.mxu0 0.0
    %2110 = vmatprep.subr.mxu0 0.0
    %2111 = vmatpush1.msra.mxu0 0.0
    %2112 = vmatprep.subr.mxu0 0.0
    %2113 = vmatpush1.msra.mxu0 0.0
    %2114 = vmatprep.subr.mxu0 0.0
    %2115 = vmatpush1.msra.mxu0 0.0
    %2116 = vmatprep.subr.mxu0 0.0
    %2117 = vmatpush1.msra.mxu0 0.0
    %2118 = vmatprep.subr.mxu0 0.0
    %2119 = vmatpush1.msra.mxu0 0.0
    %2120 = vmatprep.subr.mxu0 0.0
    %2121 = vmatpush1.msra.mxu0 0.0
    %2122 = vmatprep.subr.mxu0 0.0
    %2123 = vmatpush1.msra.mxu0 0.0
    %2124 = vmatprep.subr.mxu0 0.0
    %2125 = vmatpush1.msra.mxu0 0.0
    %2126 = vmatprep.subr.mxu0 0.0
    %2127 = vmatpush1.msra.mxu0 0.0
    %2128 = vmatprep.subr.mxu0 0.0
    %2129 = vmatpush1.msra.mxu0 0.0
    %2130 = vmatprep.subr.mxu0 0.0
    %2131 = vmatpush1.msra.mxu0 0.0
    %2132 = vmatprep.subr.mxu0 0.0
    %2133 = vmatpush1.msra.mxu0 0.0
    %2134 = vmatprep.subr.mxu0 0.0
    %2135 = vmatpush1.msra.mxu0 0.0
    %2136 = vmatprep.subr.mxu0 0.0
    %2137 = vmatpush1.msra.mxu0 0.0
    %2138 = vmatprep.subr.mxu0 0.0
    %2139 = vmatpush1.msra.mxu0 0.0
    %2140 = vmatprep.mubr.f32.mxu0 0.0
    %2141 = vmatmul.mubr.f32.gmra.mrb[0].mxu0 %v1691
    %v2142 = vpop.f32.mrb[0].mxu0
    %v2143 = vadd.f32 0.0, %v2142
    %v2144 = vpop.f32.mrb[0].mxu0
    %2145 = vmatprep.mubr.f32.mxu0 0.0
    %2146 = vmatmul.mubr.f32.gmra.mrb[0].mxu0 %v1694
    %v2147 = vpop.f32.mrb[0].mxu0
    %v2148 = vadd.f32 0.0, %v2147
    %v2149 = vpop.f32.mrb[0].mxu0
    %2150 = vdwg.mxu0
    %v2152 = vsel %vm1608, %v1995, 0
    %2154 = vmatprep.subr.mxu0 0.0
    %2155 = vmatpush1.msra.mxu0 %v2068
    %2156 = vmatprep.subr.mxu0 0.0
    %2157 = vmatpush1.msra.mxu0 %v2073
    %2158 = vmatprep.subr.mxu0 0.0
    %2159 = vmatpush1.msra.mxu0 0.0
    %2160 = vmatprep.subr.mxu0 0.0
    %2161 = vmatpush1.msra.mxu0 0.0
    %2162 = vmatprep.subr.mxu0 0.0
    %2163 = vmatpush1.msra.mxu0 0.0
    %2164 = vmatprep.subr.mxu0 0.0
    %2165 = vmatpush1.msra.mxu0 0.0
    %2166 = vmatprep.subr.mxu0 0.0
    %2167 = vmatpush1.msra.mxu0 0.0
    %2168 = vmatprep.subr.mxu0 0.0
    %2169 = vmatpush1.msra.mxu0 0.0
    %2170 = vmatprep.subr.mxu0 0.0
    %2171 = vmatpush1.msra.mxu0 0.0
    %2172 = vmatprep.subr.mxu0 0.0
    %2173 = vmatpush1.msra.mxu0 0.0
    %2174 = vmatprep.subr.mxu0 0.0
    %2175 = vmatpush1.msra.mxu0 0.0
    %2176 = vmatprep.subr.mxu0 0.0
    %2177 = vmatpush1.msra.mxu0 0.0
    %2178 = vmatprep.subr.mxu0 0.0
    %2179 = vmatpush1.msra.mxu0 0.0
    %2180 = vmatprep.subr.mxu0 0.0
    %2181 = vmatpush1.msra.mxu0 0.0
    %2182 = vmatprep.subr.mxu0 0.0
    %2183 = vmatpush1.msra.mxu0 0.0
    %2184 = vmatprep.subr.mxu0 0.0
    %2185 = vmatpush1.msra.mxu0 0.0
    %2186 = vmatprep.subr.mxu0 0.0
    %2187 = vmatpush1.msra.mxu0 0.0
    %2188 = vmatprep.subr.mxu0 0.0
    %2189 = vmatpush1.msra.mxu0 0.0
    %2190 = vmatprep.subr.mxu0 0.0
    %2191 = vmatpush1.msra.mxu0 0.0
    %2192 = vmatprep.subr.mxu0 0.0
    %2193 = vmatpush1.msra.mxu0 0.0
    %2194 = vmatprep.subr.mxu0 0.0
    %2195 = vmatpush1.msra.mxu0 0.0
    %2196 = vmatprep.subr.mxu0 0.0
    %2197 = vmatpush1.msra.mxu0 0.0
    %2198 = vmatprep.subr.mxu0 0.0
    %2199 = vmatpush1.msra.mxu0 0.0
    %2200 = vmatprep.subr.mxu0 0.0
    %2201 = vmatpush1.msra.mxu0 0.0
    %2202 = vmatprep.subr.mxu0 0.0
    %2203 = vmatpush1.msra.mxu0 0.0
    %2204 = vmatprep.subr.mxu0 0.0
    %2205 = vmatpush1.msra.mxu0 0.0
    %2206 = vmatprep.subr.mxu0 0.0
    %2207 = vmatpush1.msra.mxu0 0.0
    %2208 = vmatprep.subr.mxu0 0.0
    %2209 = vmatpush1.msra.mxu0 0.0
    %2210 = vmatprep.subr.mxu0 0.0
    %2211 = vmatpush1.msra.mxu0 0.0
    %2212 = vmatprep.subr.mxu0 0.0
    %2213 = vmatpush1.msra.mxu0 0.0
    %2214 = vmatprep.subr.mxu0 0.0
    %2215 = vmatpush1.msra.mxu0 0.0
    %2216 = vmatprep.subr.mxu0 0.0
    %2217 = vmatpush1.msra.mxu0 0.0
    %2218 = vmatprep.mubr.f32.mxu0 0.0
    %2219 = vmatmul.mubr.f32.gmra.mrb[0].mxu0 %v2152
    %v2220 = vpop.f32.mrb[0].mxu0
    %v2221 = vadd.f32 0.0, %v2220
    %v2222 = vpop.f32.mrb[0].mxu0
    %2223 = vdwg.mxu0
    %2224 = vmatprep.subr.mxu0 0.0
    %2225 = vmatpush1.msra.mxu0 %v2143
    %2226 = vmatprep.subr.mxu0 0.0
    %2227 = vmatpush1.msra.mxu0 %v2148
    %2228 = vmatprep.subr.mxu0 0.0
    %2229 = vmatpush1.msra.mxu0 0.0
    %2230 = vmatprep.subr.mxu0 0.0
    %2231 = vmatpush1.msra.mxu0 0.0
    %2232 = vmatprep.subr.mxu0 0.0
    %2233 = vmatpush1.msra.mxu0 0.0
    %2234 = vmatprep.subr.mxu0 0.0
    %2235 = vmatpush1.msra.mxu0 0.0
    %2236 = vmatprep.subr.mxu0 0.0
    %2237 = vmatpush1.msra.mxu0 0.0
    %2238 = vmatprep.subr.mxu0 0.0
    %2239 = vmatpush1.msra.mxu0 0.0
    %2240 = vmatprep.subr.mxu0 0.0
    %2241 = vmatpush1.msra.mxu0 0.0
    %2242 = vmatprep.subr.mxu0 0.0
    %2243 = vmatpush1.msra.mxu0 0.0
    %2244 = vmatprep.subr.mxu0 0.0
    %2245 = vmatpush1.msra.mxu0 0.0
    %2246 = vmatprep.subr.mxu0 0.0
    %2247 = vmatpush1.msra.mxu0 0.0
    %2248 = vmatprep.subr.mxu0 0.0
    %2249 = vmatpush1.msra.mxu0 0.0
    %2250 = vmatprep.subr.mxu0 0.0
    %2251 = vmatpush1.msra.mxu0 0.0
    %2252 = vmatprep.subr.mxu0 0.0
    %2253 = vmatpush1.msra.mxu0 0.0
    %2254 = vmatprep.subr.mxu0 0.0
    %2255 = vmatpush1.msra.mxu0 0.0
    %2256 = vmatprep.subr.mxu0 0.0
    %2257 = vmatpush1.msra.mxu0 0.0
    %2258 = vmatprep.subr.mxu0 0.0
    %2259 = vmatpush1.msra.mxu0 0.0
    %2260 = vmatprep.subr.mxu0 0.0
    %2261 = vmatpush1.msra.mxu0 0.0
    %2262 = vmatprep.subr.mxu0 0.0
    %2263 = vmatpush1.msra.mxu0 0.0
    %2264 = vmatprep.subr.mxu0 0.0
    %2265 = vmatpush1.msra.mxu0 0.0
    %2266 = vmatprep.subr.mxu0 0.0
    %2267 = vmatpush1.msra.mxu0 0.0
    %2268 = vmatprep.subr.mxu0 0.0
    %2269 = vmatpush1.msra.mxu0 0.0
    %2270 = vmatprep.subr.mxu0 0.0
    %2271 = vmatpush1.msra.mxu0 0.0
    %2272 = vmatprep.subr.mxu0 0.0
    %2273 = vmatpush1.msra.mxu0 0.0
    %2274 = vmatprep.subr.mxu0 0.0
    %2275 = vmatpush1.msra.mxu0 0.0
    %2276 = vmatprep.subr.mxu0 0.0
    %2277 = vmatpush1.msra.mxu0 0.0
    %2278 = vmatprep.subr.mxu0 0.0
    %2279 = vmatpush1.msra.mxu0 0.0
    %2280 = vmatprep.subr.mxu0 0.0
    %2281 = vmatpush1.msra.mxu0 0.0
    %2282 = vmatprep.subr.mxu0 0.0
    %2283 = vmatpush1.msra.mxu0 0.0
    %2284 = vmatprep.subr.mxu0 0.0
    %2285 = vmatpush1.msra.mxu0 0.0
    %2286 = vmatprep.subr.mxu0 0.0
    %2287 = vmatpush1.msra.mxu0 0.0
    %2288 = vmatprep.mubr.f32.mxu0 0.0
    %2289 = vmatmul.mubr.f32.gmra.mrb[0].mxu0 %v2152
    %v2290 = vpop.f32.mrb[0].mxu0
    %v2291 = vadd.f32 0.0, %v2290
    %v2292 = vpop.f32.mrb[0].mxu0
    %2293 = vdwg.mxu0
    %vm2294 = vcmask 64512
    %v2296 = vsel %vm2294, %v2221, 0
    %2298 = vmatprep.subr.mxu0 0.0
    %2299 = vmatpush1.msra.mxu0 %v2000
    %2300 = vmatprep.subr.mxu0 0.0
    %2301 = vmatpush1.msra.mxu0 0.0
    %2302 = vmatprep.subr.mxu0 0.0
    %2303 = vmatpush1.msra.mxu0 0.0
    %2304 = vmatprep.subr.mxu0 0.0
    %2305 = vmatpush1.msra.mxu0 0.0
    %2306 = vmatprep.subr.mxu0 0.0
    %2307 = vmatpush1.msra.mxu0 0.0
    %2308 = vmatprep.subr.mxu0 0.0
    %2309 = vmatpush1.msra.mxu0 0.0
    %2310 = vmatprep.subr.mxu0 0.0
    %2311 = vmatpush1.msra.mxu0 0.0
    %2312 = vmatprep.subr.mxu0 0.0
    %2313 = vmatpush1.msra.mxu0 0.0
    %2314 = vmatprep.subr.mxu0 0.0
    %2315 = vmatpush1.msra.mxu0 0.0
    %2316 = vmatprep.subr.mxu0 0.0
    %2317 = vmatpush1.msra.mxu0 0.0
    %2318 = vmatprep.subr.mxu0 0.0
    %2319 = vmatpush1.msra.mxu0 0.0
    %2320 = vmatprep.subr.mxu0 0.0
    %2321 = vmatpush1.msra.mxu0 0.0
    %2322 = vmatprep.subr.mxu0 0.0
    %2323 = vmatpush1.msra.mxu0 0.0
    %2324 = vmatprep.subr.mxu0 0.0
    %2325 = vmatpush1.msra.mxu0 0.0
    %2326 = vmatprep.subr.mxu0 0.0
    %2327 = vmatpush1.msra.mxu0 0.0
    %2328 = vmatprep.subr.mxu0 0.0
    %2329 = vmatpush1.msra.mxu0 0.0
    %2330 = vmatprep.subr.mxu0 0.0
    %2331 = vmatpush1.msra.mxu0 0.0
    %2332 = vmatprep.subr.mxu0 0.0
    %2333 = vmatpush1.msra.mxu0 0.0
    %2334 = vmatprep.subr.mxu0 0.0
    %2335 = vmatpush1.msra.mxu0 0.0
    %2336 = vmatprep.subr.mxu0 0.0
    %2337 = vmatpush1.msra.mxu0 0.0
    %2338 = vmatprep.subr.mxu0 0.0
    %2339 = vmatpush1.msra.mxu0 0.0
    %2340 = vmatprep.subr.mxu0 0.0
    %2341 = vmatpush1.msra.mxu0 0.0
    %2342 = vmatprep.subr.mxu0 0.0
    %2343 = vmatpush1.msra.mxu0 0.0
    %2344 = vmatprep.subr.mxu0 0.0
    %2345 = vmatpush1.msra.mxu0 0.0
    %2346 = vmatprep.subr.mxu0 0.0
    %2347 = vmatpush1.msra.mxu0 0.0
    %2348 = vmatprep.subr.mxu0 0.0
    %2349 = vmatpush1.msra.mxu0 0.0
    %2350 = vmatprep.subr.mxu0 0.0
    %2351 = vmatpush1.msra.mxu0 0.0
    %2352 = vmatprep.subr.mxu0 0.0
    %2353 = vmatpush1.msra.mxu0 0.0
    %2354 = vmatprep.subr.mxu0 0.0
    %2355 = vmatpush1.msra.mxu0 0.0
    %2356 = vmatprep.subr.mxu0 0.0
    %2357 = vmatpush1.msra.mxu0 0.0
    %2358 = vmatprep.subr.mxu0 0.0
    %2359 = vmatpush1.msra.mxu0 0.0
    %2360 = vmatprep.subr.mxu0 0.0
    %2361 = vmatpush1.msra.mxu0 0.0
    %2362 = vmatprep.mubr.f32.mxu0 0.0
    %2363 = vmatmul.mubr.f32.gmra.mrb[0].mxu0 %v2296
    %v2364 = vpop.f32.mrb[0].mxu0
    %v2365 = vadd.f32 0.0, %v2364
    %v2366 = vpop.f32.mrb[0].mxu0
    %2367 = vdwg.mxu0
    %v2369 = vsel %vm2294, %v2291, 0
    %2371 = vmatprep.subr.mxu0 0.0
    %2372 = vmatpush1.msra.mxu0 %v2000
    %2373 = vmatprep.subr.mxu0 0.0
    %2374 = vmatpush1.msra.mxu0 0.0
    %2375 = vmatprep.subr.mxu0 0.0
    %2376 = vmatpush1.msra.mxu0 0.0
    %2377 = vmatprep.subr.mxu0 0.0
    %2378 = vmatpush1.msra.mxu0 0.0
    %2379 = vmatprep.subr.mxu0 0.0
    %2380 = vmatpush1.msra.mxu0 0.0
    %2381 = vmatprep.subr.mxu0 0.0
    %2382 = vmatpush1.msra.mxu0 0.0
    %2383 = vmatprep.subr.mxu0 0.0
    %2384 = vmatpush1.msra.mxu0 0.0
    %2385 = vmatprep.subr.mxu0 0.0
    %2386 = vmatpush1.msra.mxu0 0.0
    %2387 = vmatprep.subr.mxu0 0.0
    %2388 = vmatpush1.msra.mxu0 0.0
    %2389 = vmatprep.subr.mxu0 0.0
    %2390 = vmatpush1.msra.mxu0 0.0
    %2391 = vmatprep.subr.mxu0 0.0
    %2392 = vmatpush1.msra.mxu0 0.0
    %2393 = vmatprep.subr.mxu0 0.0
    %2394 = vmatpush1.msra.mxu0 0.0
    %2395 = vmatprep.subr.mxu0 0.0
    %2396 = vmatpush1.msra.mxu0 0.0
    %2397 = vmatprep.subr.mxu0 0.0
    %2398 = vmatpush1.msra.mxu0 0.0
    %2399 = vmatprep.subr.mxu0 0.0
    %2400 = vmatpush1.msra.mxu0 0.0
    %2401 = vmatprep.subr.mxu0 0.0
    %2402 = vmatpush1.msra.mxu0 0.0
    %2403 = vmatprep.subr.mxu0 0.0
    %2404 = vmatpush1.msra.mxu0 0.0
    %2405 = vmatprep.subr.mxu0 0.0
    %2406 = vmatpush1.msra.mxu0 0.0
    %2407 = vmatprep.subr.mxu0 0.0
    %2408 = vmatpush1.msra.mxu0 0.0
    %2409 = vmatprep.subr.mxu0 0.0
    %2410 = vmatpush1.msra.mxu0 0.0
    %2411 = vmatprep.subr.mxu0 0.0
    %2412 = vmatpush1.msra.mxu0 0.0
    %2413 = vmatprep.subr.mxu0 0.0
    %2414 = vmatpush1.msra.mxu0 0.0
    %2415 = vmatprep.subr.mxu0 0.0
    %2416 = vmatpush1.msra.mxu0 0.0
    %2417 = vmatprep.subr.mxu0 0.0
    %2418 = vmatpush1.msra.mxu0 0.0
    %2419 = vmatprep.subr.mxu0 0.0
    %2420 = vmatpush1.msra.mxu0 0.0
    %2421 = vmatprep.subr.mxu0 0.0
    %2422 = vmatpush1.msra.mxu0 0.0
    %2423 = vmatprep.subr.mxu0 0.0
    %2424 = vmatpush1.msra.mxu0 0.0
    %2425 = vmatprep.subr.mxu0 0.0
    %2426 = vmatpush1.msra.mxu0 0.0
    %2427 = vmatprep.subr.mxu0 0.0
    %2428 = vmatpush1.msra.mxu0 0.0
    %2429 = vmatprep.subr.mxu0 0.0
    %2430 = vmatpush1.msra.mxu0 0.0
    %2431 = vmatprep.subr.mxu0 0.0
    %2432 = vmatpush1.msra.mxu0 0.0
    %2433 = vmatprep.subr.mxu0 0.0
    %2434 = vmatpush1.msra.mxu0 0.0
    %2435 = vmatprep.mubr.f32.mxu0 0.0
    %2436 = vmatmul.mubr.f32.gmra.mrb[0].mxu0 %v2369
    %v2437 = vpop.f32.mrb[0].mxu0
    %v2438 = vadd.f32 0.0, %v2437
    %v2439 = vpop.f32.mrb[0].mxu0
    %2440 = vdwg.mxu0
    %v2442 = vsel %vm2294, %v1998, 0
    %v2445 = vsel %vm2294, %v1999, 0
    %2447 = vmatprep.subr.mxu0 0.0
    %2448 = vmatpush1.msra.mxu0 %v2365
    %2449 = vmatprep.subr.mxu0 0.0
    %2450 = vmatpush1.msra.mxu0 0.0
    %2451 = vmatprep.subr.mxu0 0.0
    %2452 = vmatpush1.msra.mxu0 0.0
    %2453 = vmatprep.subr.mxu0 0.0
    %2454 = vmatpush1.msra.mxu0 0.0
    %2455 = vmatprep.subr.mxu0 0.0
    %2456 = vmatpush1.msra.mxu0 0.0
    %2457 = vmatprep.subr.mxu0 0.0
    %2458 = vmatpush1.msra.mxu0 0.0
    %2459 = vmatprep.subr.mxu0 0.0
    %2460 = vmatpush1.msra.mxu0 0.0
    %2461 = vmatprep.subr.mxu0 0.0
    %2462 = vmatpush1.msra.mxu0 0.0
    %2463 = vmatprep.subr.mxu0 0.0
    %2464 = vmatpush1.msra.mxu0 0.0
    %2465 = vmatprep.subr.mxu0 0.0
    %2466 = vmatpush1.msra.mxu0 0.0
    %2467 = vmatprep.subr.mxu0 0.0
    %2468 = vmatpush1.msra.mxu0 0.0
    %2469 = vmatprep.subr.mxu0 0.0
    %2470 = vmatpush1.msra.mxu0 0.0
    %2471 = vmatprep.subr.mxu0 0.0
    %2472 = vmatpush1.msra.mxu0 0.0
    %2473 = vmatprep.subr.mxu0 0.0
    %2474 = vmatpush1.msra.mxu0 0.0
    %2475 = vmatprep.subr.mxu0 0.0
    %2476 = vmatpush1.msra.mxu0 0.0
    %2477 = vmatprep.subr.mxu0 0.0
    %2478 = vmatpush1.msra.mxu0 0.0
    %2479 = vmatprep.subr.mxu0 0.0
    %2480 = vmatpush1.msra.mxu0 0.0
    %2481 = vmatprep.subr.mxu0 0.0
    %2482 = vmatpush1.msra.mxu0 0.0
    %2483 = vmatprep.subr.mxu0 0.0
    %2484 = vmatpush1.msra.mxu0 0.0
    %2485 = vmatprep.subr.mxu0 0.0
    %2486 = vmatpush1.msra.mxu0 0.0
    %2487 = vmatprep.subr.mxu0 0.0
    %2488 = vmatpush1.msra.mxu0 0.0
    %2489 = vmatprep.subr.mxu0 0.0
    %2490 = vmatpush1.msra.mxu0 0.0
    %2491 = vmatprep.subr.mxu0 0.0
    %2492 = vmatpush1.msra.mxu0 0.0
    %2493 = vmatprep.subr.mxu0 0.0
    %2494 = vmatpush1.msra.mxu0 0.0
    %2495 = vmatprep.subr.mxu0 0.0
    %2496 = vmatpush1.msra.mxu0 0.0
    %2497 = vmatprep.subr.mxu0 0.0
    %2498 = vmatpush1.msra.mxu0 0.0
    %2499 = vmatprep.subr.mxu0 0.0
    %2500 = vmatpush1.msra.mxu0 0.0
    %2501 = vmatprep.subr.mxu0 0.0
    %2502 = vmatpush1.msra.mxu0 0.0
    %2503 = vmatprep.subr.mxu0 0.0
    %2504 = vmatpush1.msra.mxu0 0.0
    %2505 = vmatprep.subr.mxu0 0.0
    %2506 = vmatpush1.msra.mxu0 0.0
    %2507 = vmatprep.subr.mxu0 0.0
    %2508 = vmatpush1.msra.mxu0 0.0
    %2509 = vmatprep.subr.mxu0 0.0
    %2510 = vmatpush1.msra.mxu0 0.0
    %2511 = vmatprep.mubr.f32.mxu0 0.0
    %2512 = vmatmul.mubr.f32.gmra.mrb[0].mxu0 %v2442
    %v2513 = vpop.f32.mrb[0].mxu0
    %v2514 = vadd.f32 0.0, %v2513
    %v2515 = vpop.f32.mrb[0].mxu0
    %2516 = vmatprep.mubr.f32.mxu0 0.0
    %2517 = vmatmul.mubr.f32.gmra.mrb[0].mxu0 %v2445
    %v2518 = vpop.f32.mrb[0].mxu0
    %v2519 = vadd.f32 0.0, %v2518
    %v2520 = vpop.f32.mrb[0].mxu0
    %2521 = vdwg.mxu0
    %2522 = vmatprep.subr.mxu0 0.0
    %2523 = vmatpush1.msra.mxu0 %v2438
    %2524 = vmatprep.subr.mxu0 0.0
    %2525 = vmatpush1.msra.mxu0 0.0
    %2526 = vmatprep.subr.mxu0 0.0
    %2527 = vmatpush1.msra.mxu0 0.0
    %2528 = vmatprep.subr.mxu0 0.0
    %2529 = vmatpush1.msra.mxu0 0.0
    %2530 = vmatprep.subr.mxu0 0.0
    %2531 = vmatpush1.msra.mxu0 0.0
    %2532 = vmatprep.subr.mxu0 0.0
    %2533 = vmatpush1.msra.mxu0 0.0
    %2534 = vmatprep.subr.mxu0 0.0
    %2535 = vmatpush1.msra.mxu0 0.0
    %2536 = vmatprep.subr.mxu0 0.0
    %2537 = vmatpush1.msra.mxu0 0.0
    %2538 = vmatprep.subr.mxu0 0.0
    %2539 = vmatpush1.msra.mxu0 0.0
    %2540 = vmatprep.subr.mxu0 0.0
    %2541 = vmatpush1.msra.mxu0 0.0
    %2542 = vmatprep.subr.mxu0 0.0
    %2543 = vmatpush1.msra.mxu0 0.0
    %2544 = vmatprep.subr.mxu0 0.0
    %2545 = vmatpush1.msra.mxu0 0.0
    %2546 = vmatprep.subr.mxu0 0.0
    %2547 = vmatpush1.msra.mxu0 0.0
    %2548 = vmatprep.subr.mxu0 0.0
    %2549 = vmatpush1.msra.mxu0 0.0
    %2550 = vmatprep.subr.mxu0 0.0
    %2551 = vmatpush1.msra.mxu0 0.0
    %2552 = vmatprep.subr.mxu0 0.0
    %2553 = vmatpush1.msra.mxu0 0.0
    %2554 = vmatprep.subr.mxu0 0.0
    %2555 = vmatpush1.msra.mxu0 0.0
    %2556 = vmatprep.subr.mxu0 0.0
    %2557 = vmatpush1.msra.mxu0 0.0
    %2558 = vmatprep.subr.mxu0 0.0
    %2559 = vmatpush1.msra.mxu0 0.0
    %2560 = vmatprep.subr.mxu0 0.0
    %2561 = vmatpush1.msra.mxu0 0.0
    %2562 = vmatprep.subr.mxu0 0.0
    %2563 = vmatpush1.msra.mxu0 0.0
    %2564 = vmatprep.subr.mxu0 0.0
    %2565 = vmatpush1.msra.mxu0 0.0
    %2566 = vmatprep.subr.mxu0 0.0
    %2567 = vmatpush1.msra.mxu0 0.0
    %2568 = vmatprep.subr.mxu0 0.0
    %2569 = vmatpush1.msra.mxu0 0.0
    %2570 = vmatprep.subr.mxu0 0.0
    %2571 = vmatpush1.msra.mxu0 0.0
    %2572 = vmatprep.subr.mxu0 0.0
    %2573 = vmatpush1.msra.mxu0 0.0
    %2574 = vmatprep.subr.mxu0 0.0
    %2575 = vmatpush1.msra.mxu0 0.0
    %2576 = vmatprep.subr.mxu0 0.0
    %2577 = vmatpush1.msra.mxu0 0.0
    %2578 = vmatprep.subr.mxu0 0.0
    %2579 = vmatpush1.msra.mxu0 0.0
    %2580 = vmatprep.subr.mxu0 0.0
    %2581 = vmatpush1.msra.mxu0 0.0
    %2582 = vmatprep.subr.mxu0 0.0
    %2583 = vmatpush1.msra.mxu0 0.0
    %2584 = vmatprep.subr.mxu0 0.0
    %2585 = vmatpush1.msra.mxu0 0.0
    %2586 = vmatprep.mubr.f32.mxu0 0.0
    %2587 = vmatmul.mubr.f32.gmra.mrb[0].mxu0 %v2442
    %v2588 = vpop.f32.mrb[0].mxu0
    %v2589 = vadd.f32 0.0, %v2588
    %v2590 = vpop.f32.mrb[0].mxu0
    %2591 = vmatprep.mubr.f32.mxu0 0.0
    %2592 = vmatmul.mubr.f32.gmra.mrb[0].mxu0 %v2445
    %v2593 = vpop.f32.mrb[0].mxu0
    %v2594 = vadd.f32 0.0, %v2593
    %v2595 = vpop.f32.mrb[0].mxu0
    %2596 = vdwg.mxu0
    %v2597 = vsub.f32 %v1525, %v2514
    %v2598 = vsub.f32 %v1530, %v2519
    %v2599 = vsub.f32 %v1600, %v2589
    %v2600 = vsub.f32 %v1605, %v2594
    %v2601 = vand.u32 2147483647, %v2597
    %v2602 = vand.u32 2147483647, %v2598
    %v2603 = vand.u32 2147483647, %v2599
    %v2604 = vand.u32 2147483647, %v2600
    %v2605 = vsel %vm1608, %v2601, 0.0
    %v2606 = vsel %vm1608, %v2602, 0.0
    %v2607 = vadd.f32 %v2605, %v2606
    %v2608 = vsel %vm1608, %v2603, 0.0
    %v2609 = vadd.f32 %v2607, %v2608
    %v2610 = vsel %vm1608, %v2604, 0.0
    %v2611 = vadd.f32 %v2609, %v2610
    %2612 = vadd.xlane.f32.xlu0 %v2611
    %v2613 = vpop.xlane.xlu0 %2612
    %v2614 = vrot.slane %v2613, 4
    %v2615 = vadd.f32 %v2613, %v2614
    %v2616 = vrot.slane %v2615, 2
    %v2617 = vadd.f32 %v2615, %v2616
    %v2618 = vrot.slane %v2617, 1
    %v2619 = vadd.f32 %v2617, %v2618
    %s2620 = vtos %v2619
    %s2621 = smul.f32 %s2620, 0.015625
    %s2622 = sadd.f32 %s1994, %s2621
    %v2623 = vld [vmem:[#allocation19] sm:$0xf]
    %v2624 = vld [vmem:[%s13] sm:$0xff]
    %v2625 = vld [vmem:[%s14] sm:$0xff]
    %v2626 = vld [vmem:[#allocation20] sm:$0xf]
    %2627 = vmatprep.subr.mxu0 0.0
    %2628 = vmatpush1.msra.mxu0 %v2624
    %2629 = vmatprep.subr.mxu0 0.0
    %2630 = vmatpush1.msra.mxu0 0.0
    %2631 = vmatprep.subr.mxu0 0.0
    %2632 = vmatpush1.msra.mxu0 0.0
    %2633 = vmatprep.subr.mxu0 0.0
    %2634 = vmatpush1.msra.mxu0 0.0
    %2635 = vmatprep.subr.mxu0 0.0
    %2636 = vmatpush1.msra.mxu0 0.0
    %2637 = vmatprep.subr.mxu0 0.0
    %2638 = vmatpush1.msra.mxu0 0.0
    %2639 = vmatprep.subr.mxu0 0.0
    %2640 = vmatpush1.msra.mxu0 0.0
    %2641 = vmatprep.subr.mxu0 0.0
    %2642 = vmatpush1.msra.mxu0 0.0
    %2643 = vmatprep.subr.mxu0 0.0
    %2644 = vmatpush1.msra.mxu0 0.0
    %2645 = vmatprep.subr.mxu0 0.0
    %2646 = vmatpush1.msra.mxu0 0.0
    %2647 = vmatprep.subr.mxu0 0.0
    %2648 = vmatpush1.msra.mxu0 0.0
    %2649 = vmatprep.subr.mxu0 0.0
    %2650 = vmatpush1.msra.mxu0 0.0
    %2651 = vmatprep.subr.mxu0 0.0
    %2652 = vmatpush1.msra.mxu0 0.0
    %2653 = vmatprep.subr.mxu0 0.0
    %2654 = vmatpush1.msra.mxu0 0.0
    %2655 = vmatprep.subr.mxu0 0.0
    %2656 = vmatpush1.msra.mxu0 0.0
    %2657 = vmatprep.subr.mxu0 0.0
    %2658 = vmatpush1.msra.mxu0 0.0
    %2659 = vmatprep.subr.mxu0 0.0
    %2660 = vmatpush1.msra.mxu0 0.0
    %2661 = vmatprep.subr.mxu0 0.0
    %2662 = vmatpush1.msra.mxu0 0.0
    %2663 = vmatprep.subr.mxu0 0.0
    %2664 = vmatpush1.msra.mxu0 0.0
    %2665 = vmatprep.subr.mxu0 0.0
    %2666 = vmatpush1.msra.mxu0 0.0
    %2667 = vmatprep.subr.mxu0 0.0
    %2668 = vmatpush1.msra.mxu0 0.0
    %2669 = vmatprep.subr.mxu0 0.0
    %2670 = vmatpush1.msra.mxu0 0.0
    %2671 = vmatprep.subr.mxu0 0.0
    %2672 = vmatpush1.msra.mxu0 0.0
    %2673 = vmatprep.subr.mxu0 0.0
    %2674 = vmatpush1.msra.mxu0 0.0
    %2675 = vmatprep.subr.mxu0 0.0
    %2676 = vmatpush1.msra.mxu0 0.0
    %2677 = vmatprep.subr.mxu0 0.0
    %2678 = vmatpush1.msra.mxu0 0.0
    %2679 = vmatprep.subr.mxu0 0.0
    %2680 = vmatpush1.msra.mxu0 0.0
    %2681 = vmatprep.subr.mxu0 0.0
    %2682 = vmatpush1.msra.mxu0 0.0
    %2683 = vmatprep.subr.mxu0 0.0
    %2684 = vmatpush1.msra.mxu0 0.0
    %2685 = vmatprep.subr.mxu0 0.0
    %2686 = vmatpush1.msra.mxu0 0.0
    %2687 = vmatprep.subr.mxu0 0.0
    %2688 = vmatpush1.msra.mxu0 0.0
    %2689 = vmatprep.subr.mxu0 0.0
    %2690 = vmatpush1.msra.mxu0 0.0
    %2691 = vmatprep.mubr.f32.mxu0 0.0
    %2692 = vmatmul.mubr.f32.gmra.mrb[0].mxu0 %v2296
    %v2693 = vpop.f32.mrb[0].mxu0
    %v2694 = vadd.f32 0.0, %v2693
    %v2695 = vpop.f32.mrb[0].mxu0
    %2696 = vdwg.mxu0
    %2697 = vmatprep.subr.mxu0 0.0
    %2698 = vmatpush1.msra.mxu0 %v2624
    %2699 = vmatprep.subr.mxu0 0.0
    %2700 = vmatpush1.msra.mxu0 0.0
    %2701 = vmatprep.subr.mxu0 0.0
    %2702 = vmatpush1.msra.mxu0 0.0
    %2703 = vmatprep.subr.mxu0 0.0
    %2704 = vmatpush1.msra.mxu0 0.0
    %2705 = vmatprep.subr.mxu0 0.0
    %2706 = vmatpush1.msra.mxu0 0.0
    %2707 = vmatprep.subr.mxu0 0.0
    %2708 = vmatpush1.msra.mxu0 0.0
    %2709 = vmatprep.subr.mxu0 0.0
    %2710 = vmatpush1.msra.mxu0 0.0
    %2711 = vmatprep.subr.mxu0 0.0
    %2712 = vmatpush1.msra.mxu0 0.0
    %2713 = vmatprep.subr.mxu0 0.0
    %2714 = vmatpush1.msra.mxu0 0.0
    %2715 = vmatprep.subr.mxu0 0.0
    %2716 = vmatpush1.msra.mxu0 0.0
    %2717 = vmatprep.subr.mxu0 0.0
    %2718 = vmatpush1.msra.mxu0 0.0
    %2719 = vmatprep.subr.mxu0 0.0
    %2720 = vmatpush1.msra.mxu0 0.0
    %2721 = vmatprep.subr.mxu0 0.0
    %2722 = vmatpush1.msra.mxu0 0.0
    %2723 = vmatprep.subr.mxu0 0.0
    %2724 = vmatpush1.msra.mxu0 0.0
    %2725 = vmatprep.subr.mxu0 0.0
    %2726 = vmatpush1.msra.mxu0 0.0
    %2727 = vmatprep.subr.mxu0 0.0
    %2728 = vmatpush1.msra.mxu0 0.0
    %2729 = vmatprep.subr.mxu0 0.0
    %2730 = vmatpush1.msra.mxu0 0.0
    %2731 = vmatprep.subr.mxu0 0.0
    %2732 = vmatpush1.msra.mxu0 0.0
    %2733 = vmatprep.subr.mxu0 0.0
    %2734 = vmatpush1.msra.mxu0 0.0
    %2735 = vmatprep.subr.mxu0 0.0
    %2736 = vmatpush1.msra.mxu0 0.0
    %2737 = vmatprep.subr.mxu0 0.0
    %2738 = vmatpush1.msra.mxu0 0.0
    %2739 = vmatprep.subr.mxu0 0.0
    %2740 = vmatpush1.msra.mxu0 0.0
    %2741 = vmatprep.subr.mxu0 0.0
    %2742 = vmatpush1.msra.mxu0 0.0
    %2743 = vmatprep.subr.mxu0 0.0
    %2744 = vmatpush1.msra.mxu0 0.0
    %2745 = vmatprep.subr.mxu0 0.0
    %2746 = vmatpush1.msra.mxu0 0.0
    %2747 = vmatprep.subr.mxu0 0.0
    %2748 = vmatpush1.msra.mxu0 0.0
    %2749 = vmatprep.subr.mxu0 0.0
    %2750 = vmatpush1.msra.mxu0 0.0
    %2751 = vmatprep.subr.mxu0 0.0
    %2752 = vmatpush1.msra.mxu0 0.0
    %2753 = vmatprep.subr.mxu0 0.0
    %2754 = vmatpush1.msra.mxu0 0.0
    %2755 = vmatprep.subr.mxu0 0.0
    %2756 = vmatpush1.msra.mxu0 0.0
    %2757 = vmatprep.subr.mxu0 0.0
    %2758 = vmatpush1.msra.mxu0 0.0
    %2759 = vmatprep.subr.mxu0 0.0
    %2760 = vmatpush1.msra.mxu0 0.0
    %2761 = vmatprep.mubr.f32.mxu0 0.0
    %2762 = vmatmul.mubr.f32.gmra.mrb[0].mxu0 %v2369
    %v2763 = vpop.f32.mrb[0].mxu0
    %v2764 = vadd.f32 0.0, %v2763
    %v2765 = vpop.f32.mrb[0].mxu0
    %2766 = vdwg.mxu0
    %v2768 = vsel %vm2294, %v2623, 0
    %2770 = vmatprep.subr.mxu0 0.0
    %2771 = vmatpush1.msra.mxu0 %v2694
    %2772 = vmatprep.subr.mxu0 0.0
    %2773 = vmatpush1.msra.mxu0 0.0
    %2774 = vmatprep.subr.mxu0 0.0
    %2775 = vmatpush1.msra.mxu0 0.0
    %2776 = vmatprep.subr.mxu0 0.0
    %2777 = vmatpush1.msra.mxu0 0.0
    %2778 = vmatprep.subr.mxu0 0.0
    %2779 = vmatpush1.msra.mxu0 0.0
    %2780 = vmatprep.subr.mxu0 0.0
    %2781 = vmatpush1.msra.mxu0 0.0
    %2782 = vmatprep.subr.mxu0 0.0
    %2783 = vmatpush1.msra.mxu0 0.0
    %2784 = vmatprep.subr.mxu0 0.0
    %2785 = vmatpush1.msra.mxu0 0.0
    %2786 = vmatprep.subr.mxu0 0.0
    %2787 = vmatpush1.msra.mxu0 0.0
    %2788 = vmatprep.subr.mxu0 0.0
    %2789 = vmatpush1.msra.mxu0 0.0
    %2790 = vmatprep.subr.mxu0 0.0
    %2791 = vmatpush1.msra.mxu0 0.0
    %2792 = vmatprep.subr.mxu0 0.0
    %2793 = vmatpush1.msra.mxu0 0.0
    %2794 = vmatprep.subr.mxu0 0.0
    %2795 = vmatpush1.msra.mxu0 0.0
    %2796 = vmatprep.subr.mxu0 0.0
    %2797 = vmatpush1.msra.mxu0 0.0
    %2798 = vmatprep.subr.mxu0 0.0
    %2799 = vmatpush1.msra.mxu0 0.0
    %2800 = vmatprep.subr.mxu0 0.0
    %2801 = vmatpush1.msra.mxu0 0.0
    %2802 = vmatprep.subr.mxu0 0.0
    %2803 = vmatpush1.msra.mxu0 0.0
    %2804 = vmatprep.subr.mxu0 0.0
    %2805 = vmatpush1.msra.mxu0 0.0
    %2806 = vmatprep.subr.mxu0 0.0
    %2807 = vmatpush1.msra.mxu0 0.0
    %2808 = vmatprep.subr.mxu0 0.0
    %2809 = vmatpush1.msra.mxu0 0.0
    %2810 = vmatprep.subr.mxu0 0.0
    %2811 = vmatpush1.msra.mxu0 0.0
    %2812 = vmatprep.subr.mxu0 0.0
    %2813 = vmatpush1.msra.mxu0 0.0
    %2814 = vmatprep.subr.mxu0 0.0
    %2815 = vmatpush1.msra.mxu0 0.0
    %2816 = vmatprep.subr.mxu0 0.0
    %2817 = vmatpush1.msra.mxu0 0.0
    %2818 = vmatprep.subr.mxu0 0.0
    %2819 = vmatpush1.msra.mxu0 0.0
    %2820 = vmatprep.subr.mxu0 0.0
    %2821 = vmatpush1.msra.mxu0 0.0
    %2822 = vmatprep.subr.mxu0 0.0
    %2823 = vmatpush1.msra.mxu0 0.0
    %2824 = vmatprep.subr.mxu0 0.0
    %2825 = vmatpush1.msra.mxu0 0.0
    %2826 = vmatprep.subr.mxu0 0.0
    %2827 = vmatpush1.msra.mxu0 0.0
    %2828 = vmatprep.subr.mxu0 0.0
    %2829 = vmatpush1.msra.mxu0 0.0
    %2830 = vmatprep.subr.mxu0 0.0
    %2831 = vmatpush1.msra.mxu0 0.0
    %2832 = vmatprep.subr.mxu0 0.0
    %2833 = vmatpush1.msra.mxu0 0.0
    %2834 = vmatprep.mubr.f32.mxu0 0.0
    %2835 = vmatmul.mubr.f32.gmra.mrb[0].mxu0 %v2768
    %v2836 = vpop.f32.mrb[0].mxu0
    %v2837 = vadd.f32 0.0, %v2836
    %v2838 = vpop.f32.mrb[0].mxu0
    %2839 = vdwg.mxu0
    %2840 = vmatprep.subr.mxu0 0.0
    %2841 = vmatpush1.msra.mxu0 %v2764
    %2842 = vmatprep.subr.mxu0 0.0
    %2843 = vmatpush1.msra.mxu0 0.0
    %2844 = vmatprep.subr.mxu0 0.0
    %2845 = vmatpush1.msra.mxu0 0.0
    %2846 = vmatprep.subr.mxu0 0.0
    %2847 = vmatpush1.msra.mxu0 0.0
    %2848 = vmatprep.subr.mxu0 0.0
    %2849 = vmatpush1.msra.mxu0 0.0
    %2850 = vmatprep.subr.mxu0 0.0
    %2851 = vmatpush1.msra.mxu0 0.0
    %2852 = vmatprep.subr.mxu0 0.0
    %2853 = vmatpush1.msra.mxu0 0.0
    %2854 = vmatprep.subr.mxu0 0.0
    %2855 = vmatpush1.msra.mxu0 0.0
    %2856 = vmatprep.subr.mxu0 0.0
    %2857 = vmatpush1.msra.mxu0 0.0
    %2858 = vmatprep.subr.mxu0 0.0
    %2859 = vmatpush1.msra.mxu0 0.0
    %2860 = vmatprep.subr.mxu0 0.0
    %2861 = vmatpush1.msra.mxu0 0.0
    %2862 = vmatprep.subr.mxu0 0.0
    %2863 = vmatpush1.msra.mxu0 0.0
    %2864 = vmatprep.subr.mxu0 0.0
    %2865 = vmatpush1.msra.mxu0 0.0
    %2866 = vmatprep.subr.mxu0 0.0
    %2867 = vmatpush1.msra.mxu0 0.0
    %2868 = vmatprep.subr.mxu0 0.0
    %2869 = vmatpush1.msra.mxu0 0.0
    %2870 = vmatprep.subr.mxu0 0.0
    %2871 = vmatpush1.msra.mxu0 0.0
    %2872 = vmatprep.subr.mxu0 0.0
    %2873 = vmatpush1.msra.mxu0 0.0
    %2874 = vmatprep.subr.mxu0 0.0
    %2875 = vmatpush1.msra.mxu0 0.0
    %2876 = vmatprep.subr.mxu0 0.0
    %2877 = vmatpush1.msra.mxu0 0.0
    %2878 = vmatprep.subr.mxu0 0.0
    %2879 = vmatpush1.msra.mxu0 0.0
    %2880 = vmatprep.subr.mxu0 0.0
    %2881 = vmatpush1.msra.mxu0 0.0
    %2882 = vmatprep.subr.mxu0 0.0
    %2883 = vmatpush1.msra.mxu0 0.0
    %2884 = vmatprep.subr.mxu0 0.0
    %2885 = vmatpush1.msra.mxu0 0.0
    %2886 = vmatprep.subr.mxu0 0.0
    %2887 = vmatpush1.msra.mxu0 0.0
    %2888 = vmatprep.subr.mxu0 0.0
    %2889 = vmatpush1.msra.mxu0 0.0
    %2890 = vmatprep.subr.mxu0 0.0
    %2891 = vmatpush1.msra.mxu0 0.0
    %2892 = vmatprep.subr.mxu0 0.0
    %2893 = vmatpush1.msra.mxu0 0.0
    %2894 = vmatprep.subr.mxu0 0.0
    %2895 = vmatpush1.msra.mxu0 0.0
    %2896 = vmatprep.subr.mxu0 0.0
    %2897 = vmatpush1.msra.mxu0 0.0
    %2898 = vmatprep.subr.mxu0 0.0
    %2899 = vmatpush1.msra.mxu0 0.0
    %2900 = vmatprep.subr.mxu0 0.0
    %2901 = vmatpush1.msra.mxu0 0.0
    %2902 = vmatprep.subr.mxu0 0.0
    %2903 = vmatpush1.msra.mxu0 0.0
    %2904 = vmatprep.mubr.f32.mxu0 0.0
    %2905 = vmatmul.mubr.f32.gmra.mrb[0].mxu0 %v2768
    %v2906 = vpop.f32.mrb[0].mxu0
    %v2907 = vadd.f32 0.0, %v2906
    %v2908 = vpop.f32.mrb[0].mxu0
    %2909 = vdwg.mxu0
    %vm2910 = vcmask 31744
    %v2912 = vsel %vm2910, %v2837, 0
    %vm2914 = vcmask 1043456
    %v2916 = vsel %vm2914, %v2626, 0
    %2918 = vmatprep.subr.mxu0 0.0
    %2919 = vmatpush1.msra.mxu0 %v2916
    %2920 = vmatprep.subr.mxu0 0.0
    %2921 = vmatpush1.msra.mxu0 0.0
    %2922 = vmatprep.subr.mxu0 0.0
    %2923 = vmatpush1.msra.mxu0 0.0
    %2924 = vmatprep.subr.mxu0 0.0
    %2925 = vmatpush1.msra.mxu0 0.0
    %2926 = vmatprep.subr.mxu0 0.0
    %2927 = vmatpush1.msra.mxu0 0.0
    %2928 = vmatprep.subr.mxu0 0.0
    %2929 = vmatpush1.msra.mxu0 0.0
    %2930 = vmatprep.subr.mxu0 0.0
    %2931 = vmatpush1.msra.mxu0 0.0
    %2932 = vmatprep.subr.mxu0 0.0
    %2933 = vmatpush1.msra.mxu0 0.0
    %2934 = vmatprep.subr.mxu0 0.0
    %2935 = vmatpush1.msra.mxu0 0.0
    %2936 = vmatprep.subr.mxu0 0.0
    %2937 = vmatpush1.msra.mxu0 0.0
    %2938 = vmatprep.subr.mxu0 0.0
    %2939 = vmatpush1.msra.mxu0 0.0
    %2940 = vmatprep.subr.mxu0 0.0
    %2941 = vmatpush1.msra.mxu0 0.0
    %2942 = vmatprep.subr.mxu0 0.0
    %2943 = vmatpush1.msra.mxu0 0.0
    %2944 = vmatprep.subr.mxu0 0.0
    %2945 = vmatpush1.msra.mxu0 0.0
    %2946 = vmatprep.subr.mxu0 0.0
    %2947 = vmatpush1.msra.mxu0 0.0
    %2948 = vmatprep.subr.mxu0 0.0
    %2949 = vmatpush1.msra.mxu0 0.0
    %2950 = vmatprep.subr.mxu0 0.0
    %2951 = vmatpush1.msra.mxu0 0.0
    %2952 = vmatprep.subr.mxu0 0.0
    %2953 = vmatpush1.msra.mxu0 0.0
    %2954 = vmatprep.subr.mxu0 0.0
    %2955 = vmatpush1.msra.mxu0 0.0
    %2956 = vmatprep.subr.mxu0 0.0
    %2957 = vmatpush1.msra.mxu0 0.0
    %2958 = vmatprep.subr.mxu0 0.0
    %2959 = vmatpush1.msra.mxu0 0.0
    %2960 = vmatprep.subr.mxu0 0.0
    %2961 = vmatpush1.msra.mxu0 0.0
    %2962 = vmatprep.subr.mxu0 0.0
    %2963 = vmatpush1.msra.mxu0 0.0
    %2964 = vmatprep.subr.mxu0 0.0
    %2965 = vmatpush1.msra.mxu0 0.0
    %2966 = vmatprep.subr.mxu0 0.0
    %2967 = vmatpush1.msra.mxu0 0.0
    %2968 = vmatprep.subr.mxu0 0.0
    %2969 = vmatpush1.msra.mxu0 0.0
    %2970 = vmatprep.subr.mxu0 0.0
    %2971 = vmatpush1.msra.mxu0 0.0
    %2972 = vmatprep.subr.mxu0 0.0
    %2973 = vmatpush1.msra.mxu0 0.0
    %2974 = vmatprep.subr.mxu0 0.0
    %2975 = vmatpush1.msra.mxu0 0.0
    %2976 = vmatprep.subr.mxu0 0.0
    %2977 = vmatpush1.msra.mxu0 0.0
    %2978 = vmatprep.subr.mxu0 0.0
    %2979 = vmatpush1.msra.mxu0 0.0
    %2980 = vmatprep.subr.mxu0 0.0
    %2981 = vmatpush1.msra.mxu0 0.0
    %2982 = vmatprep.mubr.f32.mxu0 0.0
    %2983 = vmatmul.mubr.f32.gmra.mrb[0].mxu0 %v2912
    %v2984 = vpop.f32.mrb[0].mxu0
    %v2985 = vadd.f32 0.0, %v2984
    %v2986 = vpop.f32.mrb[0].mxu0
    %2987 = vdwg.mxu0
    %v2989 = vsel %vm2910, %v2907, 0
    %2991 = vmatprep.subr.mxu0 0.0
    %2992 = vmatpush1.msra.mxu0 %v2916
    %2993 = vmatprep.subr.mxu0 0.0
    %2994 = vmatpush1.msra.mxu0 0.0
    %2995 = vmatprep.subr.mxu0 0.0
    %2996 = vmatpush1.msra.mxu0 0.0
    %2997 = vmatprep.subr.mxu0 0.0
    %2998 = vmatpush1.msra.mxu0 0.0
    %2999 = vmatprep.subr.mxu0 0.0
    %3000 = vmatpush1.msra.mxu0 0.0
    %3001 = vmatprep.subr.mxu0 0.0
    %3002 = vmatpush1.msra.mxu0 0.0
    %3003 = vmatprep.subr.mxu0 0.0
    %3004 = vmatpush1.msra.mxu0 0.0
    %3005 = vmatprep.subr.mxu0 0.0
    %3006 = vmatpush1.msra.mxu0 0.0
    %3007 = vmatprep.subr.mxu0 0.0
    %3008 = vmatpush1.msra.mxu0 0.0
    %3009 = vmatprep.subr.mxu0 0.0
    %3010 = vmatpush1.msra.mxu0 0.0
    %3011 = vmatprep.subr.mxu0 0.0
    %3012 = vmatpush1.msra.mxu0 0.0
    %3013 = vmatprep.subr.mxu0 0.0
    %3014 = vmatpush1.msra.mxu0 0.0
    %3015 = vmatprep.subr.mxu0 0.0
    %3016 = vmatpush1.msra.mxu0 0.0
    %3017 = vmatprep.subr.mxu0 0.0
    %3018 = vmatpush1.msra.mxu0 0.0
    %3019 = vmatprep.subr.mxu0 0.0
    %3020 = vmatpush1.msra.mxu0 0.0
    %3021 = vmatprep.subr.mxu0 0.0
    %3022 = vmatpush1.msra.mxu0 0.0
    %3023 = vmatprep.subr.mxu0 0.0
    %3024 = vmatpush1.msra.mxu0 0.0
    %3025 = vmatprep.subr.mxu0 0.0
    %3026 = vmatpush1.msra.mxu0 0.0
    %3027 = vmatprep.subr.mxu0 0.0
    %3028 = vmatpush1.msra.mxu0 0.0
    %3029 = vmatprep.subr.mxu0 0.0
    %3030 = vmatpush1.msra.mxu0 0.0
    %3031 = vmatprep.subr.mxu0 0.0
    %3032 = vmatpush1.msra.mxu0 0.0
    %3033 = vmatprep.subr.mxu0 0.0
    %3034 = vmatpush1.msra.mxu0 0.0
    %3035 = vmatprep.subr.mxu0 0.0
    %3036 = vmatpush1.msra.mxu0 0.0
    %3037 = vmatprep.subr.mxu0 0.0
    %3038 = vmatpush1.msra.mxu0 0.0
    %3039 = vmatprep.subr.mxu0 0.0
    %3040 = vmatpush1.msra.mxu0 0.0
    %3041 = vmatprep.subr.mxu0 0.0
    %3042 = vmatpush1.msra.mxu0 0.0
    %3043 = vmatprep.subr.mxu0 0.0
    %3044 = vmatpush1.msra.mxu0 0.0
    %3045 = vmatprep.subr.mxu0 0.0
    %3046 = vmatpush1.msra.mxu0 0.0
    %3047 = vmatprep.subr.mxu0 0.0
    %3048 = vmatpush1.msra.mxu0 0.0
    %3049 = vmatprep.subr.mxu0 0.0
    %3050 = vmatpush1.msra.mxu0 0.0
    %3051 = vmatprep.subr.mxu0 0.0
    %3052 = vmatpush1.msra.mxu0 0.0
    %3053 = vmatprep.subr.mxu0 0.0
    %3054 = vmatpush1.msra.mxu0 0.0
    %3055 = vmatprep.mubr.f32.mxu0 0.0
    %3056 = vmatmul.mubr.f32.gmra.mrb[0].mxu0 %v2989
    %v3057 = vpop.f32.mrb[0].mxu0
    %v3058 = vadd.f32 0.0, %v3057
    %v3059 = vpop.f32.mrb[0].mxu0
    %3060 = vdwg.mxu0
    %v3062 = vsel %vm2910, %v2625, 0
    %v3065 = vsel %vm2914, %v2985, 0
    %3067 = vmatprep.subr.mxu0 0.0
    %3068 = vmatpush1.msra.mxu0 %v3065
    %3069 = vmatprep.subr.mxu0 0.0
    %3070 = vmatpush1.msra.mxu0 0.0
    %3071 = vmatprep.subr.mxu0 0.0
    %3072 = vmatpush1.msra.mxu0 0.0
    %3073 = vmatprep.subr.mxu0 0.0
    %3074 = vmatpush1.msra.mxu0 0.0
    %3075 = vmatprep.subr.mxu0 0.0
    %3076 = vmatpush1.msra.mxu0 0.0
    %3077 = vmatprep.subr.mxu0 0.0
    %3078 = vmatpush1.msra.mxu0 0.0
    %3079 = vmatprep.subr.mxu0 0.0
    %3080 = vmatpush1.msra.mxu0 0.0
    %3081 = vmatprep.subr.mxu0 0.0
    %3082 = vmatpush1.msra.mxu0 0.0
    %3083 = vmatprep.subr.mxu0 0.0
    %3084 = vmatpush1.msra.mxu0 0.0
    %3085 = vmatprep.subr.mxu0 0.0
    %3086 = vmatpush1.msra.mxu0 0.0
    %3087 = vmatprep.subr.mxu0 0.0
    %3088 = vmatpush1.msra.mxu0 0.0
    %3089 = vmatprep.subr.mxu0 0.0
    %3090 = vmatpush1.msra.mxu0 0.0
    %3091 = vmatprep.subr.mxu0 0.0
    %3092 = vmatpush1.msra.mxu0 0.0
    %3093 = vmatprep.subr.mxu0 0.0
    %3094 = vmatpush1.msra.mxu0 0.0
    %3095 = vmatprep.subr.mxu0 0.0
    %3096 = vmatpush1.msra.mxu0 0.0
    %3097 = vmatprep.subr.mxu0 0.0
    %3098 = vmatpush1.msra.mxu0 0.0
    %3099 = vmatprep.subr.mxu0 0.0
    %3100 = vmatpush1.msra.mxu0 0.0
    %3101 = vmatprep.subr.mxu0 0.0
    %3102 = vmatpush1.msra.mxu0 0.0
    %3103 = vmatprep.subr.mxu0 0.0
    %3104 = vmatpush1.msra.mxu0 0.0
    %3105 = vmatprep.subr.mxu0 0.0
    %3106 = vmatpush1.msra.mxu0 0.0
    %3107 = vmatprep.subr.mxu0 0.0
    %3108 = vmatpush1.msra.mxu0 0.0
    %3109 = vmatprep.subr.mxu0 0.0
    %3110 = vmatpush1.msra.mxu0 0.0
    %3111 = vmatprep.subr.mxu0 0.0
    %3112 = vmatpush1.msra.mxu0 0.0
    %3113 = vmatprep.subr.mxu0 0.0
    %3114 = vmatpush1.msra.mxu0 0.0
    %3115 = vmatprep.subr.mxu0 0.0
    %3116 = vmatpush1.msra.mxu0 0.0
    %3117 = vmatprep.subr.mxu0 0.0
    %3118 = vmatpush1.msra.mxu0 0.0
    %3119 = vmatprep.subr.mxu0 0.0
    %3120 = vmatpush1.msra.mxu0 0.0
    %3121 = vmatprep.subr.mxu0 0.0
    %3122 = vmatpush1.msra.mxu0 0.0
    %3123 = vmatprep.subr.mxu0 0.0
    %3124 = vmatpush1.msra.mxu0 0.0
    %3125 = vmatprep.subr.mxu0 0.0
    %3126 = vmatpush1.msra.mxu0 0.0
    %3127 = vmatprep.subr.mxu0 0.0
    %3128 = vmatpush1.msra.mxu0 0.0
    %3129 = vmatprep.subr.mxu0 0.0
    %3130 = vmatpush1.msra.mxu0 0.0
    %3131 = vmatprep.mubr.f32.mxu0 0.0
    %3132 = vmatmul.mubr.f32.gmra.mrb[0].mxu0 %v3062
    %v3133 = vpop.f32.mrb[0].mxu0
    %v3134 = vadd.f32 0.0, %v3133
    %v3135 = vpop.f32.mrb[0].mxu0
    %3136 = vdwg.mxu0
    %v3138 = vsel %vm2914, %v3058, 0
    %3140 = vmatprep.subr.mxu0 0.0
    %3141 = vmatpush1.msra.mxu0 %v3138
    %3142 = vmatprep.subr.mxu0 0.0
    %3143 = vmatpush1.msra.mxu0 0.0
    %3144 = vmatprep.subr.mxu0 0.0
    %3145 = vmatpush1.msra.mxu0 0.0
    %3146 = vmatprep.subr.mxu0 0.0
    %3147 = vmatpush1.msra.mxu0 0.0
    %3148 = vmatprep.subr.mxu0 0.0
    %3149 = vmatpush1.msra.mxu0 0.0
    %3150 = vmatprep.subr.mxu0 0.0
    %3151 = vmatpush1.msra.mxu0 0.0
    %3152 = vmatprep.subr.mxu0 0.0
    %3153 = vmatpush1.msra.mxu0 0.0
    %3154 = vmatprep.subr.mxu0 0.0
    %3155 = vmatpush1.msra.mxu0 0.0
    %3156 = vmatprep.subr.mxu0 0.0
    %3157 = vmatpush1.msra.mxu0 0.0
    %3158 = vmatprep.subr.mxu0 0.0
    %3159 = vmatpush1.msra.mxu0 0.0
    %3160 = vmatprep.subr.mxu0 0.0
    %3161 = vmatpush1.msra.mxu0 0.0
    %3162 = vmatprep.subr.mxu0 0.0
    %3163 = vmatpush1.msra.mxu0 0.0
    %3164 = vmatprep.subr.mxu0 0.0
    %3165 = vmatpush1.msra.mxu0 0.0
    %3166 = vmatprep.subr.mxu0 0.0
    %3167 = vmatpush1.msra.mxu0 0.0
    %3168 = vmatprep.subr.mxu0 0.0
    %3169 = vmatpush1.msra.mxu0 0.0
    %3170 = vmatprep.subr.mxu0 0.0
    %3171 = vmatpush1.msra.mxu0 0.0
    %3172 = vmatprep.subr.mxu0 0.0
    %3173 = vmatpush1.msra.mxu0 0.0
    %3174 = vmatprep.subr.mxu0 0.0
    %3175 = vmatpush1.msra.mxu0 0.0
    %3176 = vmatprep.subr.mxu0 0.0
    %3177 = vmatpush1.msra.mxu0 0.0
    %3178 = vmatprep.subr.mxu0 0.0
    %3179 = vmatpush1.msra.mxu0 0.0
    %3180 = vmatprep.subr.mxu0 0.0
    %3181 = vmatpush1.msra.mxu0 0.0
    %3182 = vmatprep.subr.mxu0 0.0
    %3183 = vmatpush1.msra.mxu0 0.0
    %3184 = vmatprep.subr.mxu0 0.0
    %3185 = vmatpush1.msra.mxu0 0.0
    %3186 = vmatprep.subr.mxu0 0.0
    %3187 = vmatpush1.msra.mxu0 0.0
    %3188 = vmatprep.subr.mxu0 0.0
    %3189 = vmatpush1.msra.mxu0 0.0
    %3190 = vmatprep.subr.mxu0 0.0
    %3191 = vmatpush1.msra.mxu0 0.0
    %3192 = vmatprep.subr.mxu0 0.0
    %3193 = vmatpush1.msra.mxu0 0.0
    %3194 = vmatprep.subr.mxu0 0.0
    %3195 = vmatpush1.msra.mxu0 0.0
    %3196 = vmatprep.subr.mxu0 0.0
    %3197 = vmatpush1.msra.mxu0 0.0
    %3198 = vmatprep.subr.mxu0 0.0
    %3199 = vmatpush1.msra.mxu0 0.0
    %3200 = vmatprep.subr.mxu0 0.0
    %3201 = vmatpush1.msra.mxu0 0.0
    %3202 = vmatprep.subr.mxu0 0.0
    %3203 = vmatpush1.msra.mxu0 0.0
    %3204 = vmatprep.mubr.f32.mxu0 0.0
    %3205 = vmatmul.mubr.f32.gmra.mrb[0].mxu0 %v3062
    %v3206 = vpop.f32.mrb[0].mxu0
    %v3207 = vadd.f32 0.0, %v3206
    %v3208 = vpop.f32.mrb[0].mxu0
    %3209 = vdwg.mxu0
    %v3210 = vsub.f32 %v2221, %v3134
    %v3211 = vsub.f32 %v2291, %v3207
    %v3212 = vand.u32 2147483647, %v3210
    %v3213 = vand.u32 2147483647, %v3211
    %v3214 = vsel %vm2294, %v3212, 0.0
    %v3215 = vsel %vm2294, %v3213, 0.0
    %v3216 = vadd.f32 %v3214, %v3215
    %3217 = vadd.xlane.f32.xlu0 %v3216
    %v3218 = vpop.xlane.xlu0 %3217
    %v3219 = vrot.slane %v3218, 4
    %v3220 = vadd.f32 %v3218, %v3219
    %v3221 = vrot.slane %v3220, 2
    %v3222 = vadd.f32 %v3220, %v3221
    %v3223 = vrot.slane %v3222, 1
    %v3224 = vadd.f32 %v3222, %v3223
    %s3225 = vtos %v3224
    %s3226 = smul.f32 %s3225, 0.125
    %s3227 = sadd.f32 %s2622, %s3226
    %v3228 = vld [vmem:[%s16] sm:$0x3]
    %v3229 = vld [vmem:[%s17] sm:$0xf]
    %v3230 = vld [vmem:[%s18] sm:$0xf]
    %v3231 = vld [vmem:[%s19] sm:$0x3]
    %v3233 = vsel %vm2914, %v3229, 0
    %3235 = vmatprep.subr.mxu0 0.0
    %3236 = vmatpush1.msra.mxu0 %v3233
    %3237 = vmatprep.subr.mxu0 0.0
    %3238 = vmatpush1.msra.mxu0 0.0
    %3239 = vmatprep.subr.mxu0 0.0
    %3240 = vmatpush1.msra.mxu0 0.0
    %3241 = vmatprep.subr.mxu0 0.0
    %3242 = vmatpush1.msra.mxu0 0.0
    %3243 = vmatprep.subr.mxu0 0.0
    %3244 = vmatpush1.msra.mxu0 0.0
    %3245 = vmatprep.subr.mxu0 0.0
    %3246 = vmatpush1.msra.mxu0 0.0
    %3247 = vmatprep.subr.mxu0 0.0
    %3248 = vmatpush1.msra.mxu0 0.0
    %3249 = vmatprep.subr.mxu0 0.0
    %3250 = vmatpush1.msra.mxu0 0.0
    %3251 = vmatprep.subr.mxu0 0.0
    %3252 = vmatpush1.msra.mxu0 0.0
    %3253 = vmatprep.subr.mxu0 0.0
    %3254 = vmatpush1.msra.mxu0 0.0
    %3255 = vmatprep.subr.mxu0 0.0
    %3256 = vmatpush1.msra.mxu0 0.0
    %3257 = vmatprep.subr.mxu0 0.0
    %3258 = vmatpush1.msra.mxu0 0.0
    %3259 = vmatprep.subr.mxu0 0.0
    %3260 = vmatpush1.msra.mxu0 0.0
    %3261 = vmatprep.subr.mxu0 0.0
    %3262 = vmatpush1.msra.mxu0 0.0
    %3263 = vmatprep.subr.mxu0 0.0
    %3264 = vmatpush1.msra.mxu0 0.0
    %3265 = vmatprep.subr.mxu0 0.0
    %3266 = vmatpush1.msra.mxu0 0.0
    %3267 = vmatprep.subr.mxu0 0.0
    %3268 = vmatpush1.msra.mxu0 0.0
    %3269 = vmatprep.subr.mxu0 0.0
    %3270 = vmatpush1.msra.mxu0 0.0
    %3271 = vmatprep.subr.mxu0 0.0
    %3272 = vmatpush1.msra.mxu0 0.0
    %3273 = vmatprep.subr.mxu0 0.0
    %3274 = vmatpush1.msra.mxu0 0.0
    %3275 = vmatprep.subr.mxu0 0.0
    %3276 = vmatpush1.msra.mxu0 0.0
    %3277 = vmatprep.subr.mxu0 0.0
    %3278 = vmatpush1.msra.mxu0 0.0
    %3279 = vmatprep.subr.mxu0 0.0
    %3280 = vmatpush1.msra.mxu0 0.0
    %3281 = vmatprep.subr.mxu0 0.0
    %3282 = vmatpush1.msra.mxu0 0.0
    %3283 = vmatprep.subr.mxu0 0.0
    %3284 = vmatpush1.msra.mxu0 0.0
    %3285 = vmatprep.subr.mxu0 0.0
    %3286 = vmatpush1.msra.mxu0 0.0
    %3287 = vmatprep.subr.mxu0 0.0
    %3288 = vmatpush1.msra.mxu0 0.0
    %3289 = vmatprep.subr.mxu0 0.0
    %3290 = vmatpush1.msra.mxu0 0.0
    %3291 = vmatprep.subr.mxu0 0.0
    %3292 = vmatpush1.msra.mxu0 0.0
    %3293 = vmatprep.subr.mxu0 0.0
    %3294 = vmatpush1.msra.mxu0 0.0
    %3295 = vmatprep.subr.mxu0 0.0
    %3296 = vmatpush1.msra.mxu0 0.0
    %3297 = vmatprep.subr.mxu0 0.0
    %3298 = vmatpush1.msra.mxu0 0.0
    %3299 = vmatprep.mubr.f32.mxu0 0.0
    %3300 = vmatmul.mubr.f32.gmra.mrb[0].mxu0 %v2912
    %v3301 = vpop.f32.mrb[0].mxu0
    %v3302 = vadd.f32 0.0, %v3301
    %v3303 = vpop.f32.mrb[0].mxu0
    %3304 = vdwg.mxu0
    %3305 = vmatprep.subr.mxu0 0.0
    %3306 = vmatpush1.msra.mxu0 %v3233
    %3307 = vmatprep.subr.mxu0 0.0
    %3308 = vmatpush1.msra.mxu0 0.0
    %3309 = vmatprep.subr.mxu0 0.0
    %3310 = vmatpush1.msra.mxu0 0.0
    %3311 = vmatprep.subr.mxu0 0.0
    %3312 = vmatpush1.msra.mxu0 0.0
    %3313 = vmatprep.subr.mxu0 0.0
    %3314 = vmatpush1.msra.mxu0 0.0
    %3315 = vmatprep.subr.mxu0 0.0
    %3316 = vmatpush1.msra.mxu0 0.0
    %3317 = vmatprep.subr.mxu0 0.0
    %3318 = vmatpush1.msra.mxu0 0.0
    %3319 = vmatprep.subr.mxu0 0.0
    %3320 = vmatpush1.msra.mxu0 0.0
    %3321 = vmatprep.subr.mxu0 0.0
    %3322 = vmatpush1.msra.mxu0 0.0
    %3323 = vmatprep.subr.mxu0 0.0
    %3324 = vmatpush1.msra.mxu0 0.0
    %3325 = vmatprep.subr.mxu0 0.0
    %3326 = vmatpush1.msra.mxu0 0.0
    %3327 = vmatprep.subr.mxu0 0.0
    %3328 = vmatpush1.msra.mxu0 0.0
    %3329 = vmatprep.subr.mxu0 0.0
    %3330 = vmatpush1.msra.mxu0 0.0
    %3331 = vmatprep.subr.mxu0 0.0
    %3332 = vmatpush1.msra.mxu0 0.0
    %3333 = vmatprep.subr.mxu0 0.0
    %3334 = vmatpush1.msra.mxu0 0.0
    %3335 = vmatprep.subr.mxu0 0.0
    %3336 = vmatpush1.msra.mxu0 0.0
    %3337 = vmatprep.subr.mxu0 0.0
    %3338 = vmatpush1.msra.mxu0 0.0
    %3339 = vmatprep.subr.mxu0 0.0
    %3340 = vmatpush1.msra.mxu0 0.0
    %3341 = vmatprep.subr.mxu0 0.0
    %3342 = vmatpush1.msra.mxu0 0.0
    %3343 = vmatprep.subr.mxu0 0.0
    %3344 = vmatpush1.msra.mxu0 0.0
    %3345 = vmatprep.subr.mxu0 0.0
    %3346 = vmatpush1.msra.mxu0 0.0
    %3347 = vmatprep.subr.mxu0 0.0
    %3348 = vmatpush1.msra.mxu0 0.0
    %3349 = vmatprep.subr.mxu0 0.0
    %3350 = vmatpush1.msra.mxu0 0.0
    %3351 = vmatprep.subr.mxu0 0.0
    %3352 = vmatpush1.msra.mxu0 0.0
    %3353 = vmatprep.subr.mxu0 0.0
    %3354 = vmatpush1.msra.mxu0 0.0
    %3355 = vmatprep.subr.mxu0 0.0
    %3356 = vmatpush1.msra.mxu0 0.0
    %3357 = vmatprep.subr.mxu0 0.0
    %3358 = vmatpush1.msra.mxu0 0.0
    %3359 = vmatprep.subr.mxu0 0.0
    %3360 = vmatpush1.msra.mxu0 0.0
    %3361 = vmatprep.subr.mxu0 0.0
    %3362 = vmatpush1.msra.mxu0 0.0
    %3363 = vmatprep.subr.mxu0 0.0
    %3364 = vmatpush1.msra.mxu0 0.0
    %3365 = vmatprep.subr.mxu0 0.0
    %3366 = vmatpush1.msra.mxu0 0.0
    %3367 = vmatprep.subr.mxu0 0.0
    %3368 = vmatpush1.msra.mxu0 0.0
    %3369 = vmatprep.mubr.f32.mxu0 0.0
    %3370 = vmatmul.mubr.f32.gmra.mrb[0].mxu0 %v2989
    %v3371 = vpop.f32.mrb[0].mxu0
    %v3372 = vadd.f32 0.0, %v3371
    %v3373 = vpop.f32.mrb[0].mxu0
    %3374 = vdwg.mxu0
    %v3376 = vsel %vm2910, %v3228, 0
    %v3379 = vsel %vm2914, %v3302, 0
    %3381 = vmatprep.subr.mxu0 0.0
    %3382 = vmatpush1.msra.mxu0 %v3379
    %3383 = vmatprep.subr.mxu0 0.0
    %3384 = vmatpush1.msra.mxu0 0.0
    %3385 = vmatprep.subr.mxu0 0.0
    %3386 = vmatpush1.msra.mxu0 0.0
    %3387 = vmatprep.subr.mxu0 0.0
    %3388 = vmatpush1.msra.mxu0 0.0
    %3389 = vmatprep.subr.mxu0 0.0
    %3390 = vmatpush1.msra.mxu0 0.0
    %3391 = vmatprep.subr.mxu0 0.0
    %3392 = vmatpush1.msra.mxu0 0.0
    %3393 = vmatprep.subr.mxu0 0.0
    %3394 = vmatpush1.msra.mxu0 0.0
    %3395 = vmatprep.subr.mxu0 0.0
    %3396 = vmatpush1.msra.mxu0 0.0
    %3397 = vmatprep.subr.mxu0 0.0
    %3398 = vmatpush1.msra.mxu0 0.0
    %3399 = vmatprep.subr.mxu0 0.0
    %3400 = vmatpush1.msra.mxu0 0.0
    %3401 = vmatprep.subr.mxu0 0.0
    %3402 = vmatpush1.msra.mxu0 0.0
    %3403 = vmatprep.subr.mxu0 0.0
    %3404 = vmatpush1.msra.mxu0 0.0
    %3405 = vmatprep.subr.mxu0 0.0
    %3406 = vmatpush1.msra.mxu0 0.0
    %3407 = vmatprep.subr.mxu0 0.0
    %3408 = vmatpush1.msra.mxu0 0.0
    %3409 = vmatprep.subr.mxu0 0.0
    %3410 = vmatpush1.msra.mxu0 0.0
    %3411 = vmatprep.subr.mxu0 0.0
    %3412 = vmatpush1.msra.mxu0 0.0
    %3413 = vmatprep.subr.mxu0 0.0
    %3414 = vmatpush1.msra.mxu0 0.0
    %3415 = vmatprep.subr.mxu0 0.0
    %3416 = vmatpush1.msra.mxu0 0.0
    %3417 = vmatprep.subr.mxu0 0.0
    %3418 = vmatpush1.msra.mxu0 0.0
    %3419 = vmatprep.subr.mxu0 0.0
    %3420 = vmatpush1.msra.mxu0 0.0
    %3421 = vmatprep.subr.mxu0 0.0
    %3422 = vmatpush1.msra.mxu0 0.0
    %3423 = vmatprep.subr.mxu0 0.0
    %3424 = vmatpush1.msra.mxu0 0.0
    %3425 = vmatprep.subr.mxu0 0.0
    %3426 = vmatpush1.msra.mxu0 0.0
    %3427 = vmatprep.subr.mxu0 0.0
    %3428 = vmatpush1.msra.mxu0 0.0
    %3429 = vmatprep.subr.mxu0 0.0
    %3430 = vmatpush1.msra.mxu0 0.0
    %3431 = vmatprep.subr.mxu0 0.0
    %3432 = vmatpush1.msra.mxu0 0.0
    %3433 = vmatprep.subr.mxu0 0.0
    %3434 = vmatpush1.msra.mxu0 0.0
    %3435 = vmatprep.subr.mxu0 0.0
    %3436 = vmatpush1.msra.mxu0 0.0
    %3437 = vmatprep.subr.mxu0 0.0
    %3438 = vmatpush1.msra.mxu0 0.0
    %3439 = vmatprep.subr.mxu0 0.0
    %3440 = vmatpush1.msra.mxu0 0.0
    %3441 = vmatprep.subr.mxu0 0.0
    %3442 = vmatpush1.msra.mxu0 0.0
    %3443 = vmatprep.subr.mxu0 0.0
    %3444 = vmatpush1.msra.mxu0 0.0
    %3445 = vmatprep.mubr.f32.mxu0 0.0
    %3446 = vmatmul.mubr.f32.gmra.mrb[0].mxu0 %v3376
    %v3447 = vpop.f32.mrb[0].mxu0
    %v3448 = vadd.f32 0.0, %v3447
    %v3449 = vpop.f32.mrb[0].mxu0
    %3450 = vdwg.mxu0
    %v3452 = vsel %vm2914, %v3372, 0
    %3454 = vmatprep.subr.mxu0 0.0
    %3455 = vmatpush1.msra.mxu0 %v3452
    %3456 = vmatprep.subr.mxu0 0.0
    %3457 = vmatpush1.msra.mxu0 0.0
    %3458 = vmatprep.subr.mxu0 0.0
    %3459 = vmatpush1.msra.mxu0 0.0
    %3460 = vmatprep.subr.mxu0 0.0
    %3461 = vmatpush1.msra.mxu0 0.0
    %3462 = vmatprep.subr.mxu0 0.0
    %3463 = vmatpush1.msra.mxu0 0.0
    %3464 = vmatprep.subr.mxu0 0.0
    %3465 = vmatpush1.msra.mxu0 0.0
    %3466 = vmatprep.subr.mxu0 0.0
    %3467 = vmatpush1.msra.mxu0 0.0
    %3468 = vmatprep.subr.mxu0 0.0
    %3469 = vmatpush1.msra.mxu0 0.0
    %3470 = vmatprep.subr.mxu0 0.0
    %3471 = vmatpush1.msra.mxu0 0.0
    %3472 = vmatprep.subr.mxu0 0.0
    %3473 = vmatpush1.msra.mxu0 0.0
    %3474 = vmatprep.subr.mxu0 0.0
    %3475 = vmatpush1.msra.mxu0 0.0
    %3476 = vmatprep.subr.mxu0 0.0
    %3477 = vmatpush1.msra.mxu0 0.0
    %3478 = vmatprep.subr.mxu0 0.0
    %3479 = vmatpush1.msra.mxu0 0.0
    %3480 = vmatprep.subr.mxu0 0.0
    %3481 = vmatpush1.msra.mxu0 0.0
    %3482 = vmatprep.subr.mxu0 0.0
    %3483 = vmatpush1.msra.mxu0 0.0
    %3484 = vmatprep.subr.mxu0 0.0
    %3485 = vmatpush1.msra.mxu0 0.0
    %3486 = vmatprep.subr.mxu0 0.0
    %3487 = vmatpush1.msra.mxu0 0.0
    %3488 = vmatprep.subr.mxu0 0.0
    %3489 = vmatpush1.msra.mxu0 0.0
    %3490 = vmatprep.subr.mxu0 0.0
    %3491 = vmatpush1.msra.mxu0 0.0
    %3492 = vmatprep.subr.mxu0 0.0
    %3493 = vmatpush1.msra.mxu0 0.0
    %3494 = vmatprep.subr.mxu0 0.0
    %3495 = vmatpush1.msra.mxu0 0.0
    %3496 = vmatprep.subr.mxu0 0.0
    %3497 = vmatpush1.msra.mxu0 0.0
    %3498 = vmatprep.subr.mxu0 0.0
    %3499 = vmatpush1.msra.mxu0 0.0
    %3500 = vmatprep.subr.mxu0 0.0
    %3501 = vmatpush1.msra.mxu0 0.0
    %3502 = vmatprep.subr.mxu0 0.0
    %3503 = vmatpush1.msra.mxu0 0.0
    %3504 = vmatprep.subr.mxu0 0.0
    %3505 = vmatpush1.msra.mxu0 0.0
    %3506 = vmatprep.subr.mxu0 0.0
    %3507 = vmatpush1.msra.mxu0 0.0
    %3508 = vmatprep.subr.mxu0 0.0
    %3509 = vmatpush1.msra.mxu0 0.0
    %3510 = vmatprep.subr.mxu0 0.0
    %3511 = vmatpush1.msra.mxu0 0.0
    %3512 = vmatprep.subr.mxu0 0.0
    %3513 = vmatpush1.msra.mxu0 0.0
    %3514 = vmatprep.subr.mxu0 0.0
    %3515 = vmatpush1.msra.mxu0 0.0
    %3516 = vmatprep.subr.mxu0 0.0
    %3517 = vmatpush1.msra.mxu0 0.0
    %3518 = vmatprep.mubr.f32.mxu0 0.0
    %3519 = vmatmul.mubr.f32.gmra.mrb[0].mxu0 %v3376
    %v3520 = vpop.f32.mrb[0].mxu0
    %v3521 = vadd.f32 0.0, %v3520
    %v3522 = vpop.f32.mrb[0].mxu0
    %3523 = vdwg.mxu0
    %vm3524 = vcmask 15360
    %v3526 = vsel %vm3524, %v3448, 0
    %vm3528 = vcmask 1041408
    %v3530 = vsel %vm3528, %v3231, 0
    %3532 = vmatprep.subr.mxu0 0.0
    %3533 = vmatpush1.msra.mxu0 %v3530
    %3534 = vmatprep.subr.mxu0 0.0
    %3535 = vmatpush1.msra.mxu0 0.0
    %3536 = vmatprep.subr.mxu0 0.0
    %3537 = vmatpush1.msra.mxu0 0.0
    %3538 = vmatprep.subr.mxu0 0.0
    %3539 = vmatpush1.msra.mxu0 0.0
    %3540 = vmatprep.subr.mxu0 0.0
    %3541 = vmatpush1.msra.mxu0 0.0
    %3542 = vmatprep.subr.mxu0 0.0
    %3543 = vmatpush1.msra.mxu0 0.0
    %3544 = vmatprep.subr.mxu0 0.0
    %3545 = vmatpush1.msra.mxu0 0.0
    %3546 = vmatprep.subr.mxu0 0.0
    %3547 = vmatpush1.msra.mxu0 0.0
    %3548 = vmatprep.subr.mxu0 0.0
    %3549 = vmatpush1.msra.mxu0 0.0
    %3550 = vmatprep.subr.mxu0 0.0
    %3551 = vmatpush1.msra.mxu0 0.0
    %3552 = vmatprep.subr.mxu0 0.0
    %3553 = vmatpush1.msra.mxu0 0.0
    %3554 = vmatprep.subr.mxu0 0.0
    %3555 = vmatpush1.msra.mxu0 0.0
    %3556 = vmatprep.subr.mxu0 0.0
    %3557 = vmatpush1.msra.mxu0 0.0
    %3558 = vmatprep.subr.mxu0 0.0
    %3559 = vmatpush1.msra.mxu0 0.0
    %3560 = vmatprep.subr.mxu0 0.0
    %3561 = vmatpush1.msra.mxu0 0.0
    %3562 = vmatprep.subr.mxu0 0.0
    %3563 = vmatpush1.msra.mxu0 0.0
    %3564 = vmatprep.subr.mxu0 0.0
    %3565 = vmatpush1.msra.mxu0 0.0
    %3566 = vmatprep.subr.mxu0 0.0
    %3567 = vmatpush1.msra.mxu0 0.0
    %3568 = vmatprep.subr.mxu0 0.0
    %3569 = vmatpush1.msra.mxu0 0.0
    %3570 = vmatprep.subr.mxu0 0.0
    %3571 = vmatpush1.msra.mxu0 0.0
    %3572 = vmatprep.subr.mxu0 0.0
    %3573 = vmatpush1.msra.mxu0 0.0
    %3574 = vmatprep.subr.mxu0 0.0
    %3575 = vmatpush1.msra.mxu0 0.0
    %3576 = vmatprep.subr.mxu0 0.0
    %3577 = vmatpush1.msra.mxu0 0.0
    %3578 = vmatprep.subr.mxu0 0.0
    %3579 = vmatpush1.msra.mxu0 0.0
    %3580 = vmatprep.subr.mxu0 0.0
    %3581 = vmatpush1.msra.mxu0 0.0
    %3582 = vmatprep.subr.mxu0 0.0
    %3583 = vmatpush1.msra.mxu0 0.0
    %3584 = vmatprep.subr.mxu0 0.0
    %3585 = vmatpush1.msra.mxu0 0.0
    %3586 = vmatprep.subr.mxu0 0.0
    %3587 = vmatpush1.msra.mxu0 0.0
    %3588 = vmatprep.subr.mxu0 0.0
    %3589 = vmatpush1.msra.mxu0 0.0
    %3590 = vmatprep.subr.mxu0 0.0
    %3591 = vmatpush1.msra.mxu0 0.0
    %3592 = vmatprep.subr.mxu0 0.0
    %3593 = vmatpush1.msra.mxu0 0.0
    %3594 = vmatprep.subr.mxu0 0.0
    %3595 = vmatpush1.msra.mxu0 0.0
    %3596 = vmatprep.mubr.f32.mxu0 0.0
    %3597 = vmatmul.mubr.f32.gmra.mrb[0].mxu0 %v3526
    %v3598 = vpop.f32.mrb[0].mxu0
    %v3599 = vadd.f32 0.0, %v3598
    %v3600 = vpop.f32.mrb[0].mxu0
    %3601 = vdwg.mxu0
    %v3603 = vsel %vm3524, %v3521, 0
    %3605 = vmatprep.subr.mxu0 0.0
    %3606 = vmatpush1.msra.mxu0 %v3530
    %3607 = vmatprep.subr.mxu0 0.0
    %3608 = vmatpush1.msra.mxu0 0.0
    %3609 = vmatprep.subr.mxu0 0.0
    %3610 = vmatpush1.msra.mxu0 0.0
    %3611 = vmatprep.subr.mxu0 0.0
    %3612 = vmatpush1.msra.mxu0 0.0
    %3613 = vmatprep.subr.mxu0 0.0
    %3614 = vmatpush1.msra.mxu0 0.0
    %3615 = vmatprep.subr.mxu0 0.0
    %3616 = vmatpush1.msra.mxu0 0.0
    %3617 = vmatprep.subr.mxu0 0.0
    %3618 = vmatpush1.msra.mxu0 0.0
    %3619 = vmatprep.subr.mxu0 0.0
    %3620 = vmatpush1.msra.mxu0 0.0
    %3621 = vmatprep.subr.mxu0 0.0
    %3622 = vmatpush1.msra.mxu0 0.0
    %3623 = vmatprep.subr.mxu0 0.0
    %3624 = vmatpush1.msra.mxu0 0.0
    %3625 = vmatprep.subr.mxu0 0.0
    %3626 = vmatpush1.msra.mxu0 0.0
    %3627 = vmatprep.subr.mxu0 0.0
    %3628 = vmatpush1.msra.mxu0 0.0
    %3629 = vmatprep.subr.mxu0 0.0
    %3630 = vmatpush1.msra.mxu0 0.0
    %3631 = vmatprep.subr.mxu0 0.0
    %3632 = vmatpush1.msra.mxu0 0.0
    %3633 = vmatprep.subr.mxu0 0.0
    %3634 = vmatpush1.msra.mxu0 0.0
    %3635 = vmatprep.subr.mxu0 0.0
    %3636 = vmatpush1.msra.mxu0 0.0
    %3637 = vmatprep.subr.mxu0 0.0
    %3638 = vmatpush1.msra.mxu0 0.0
    %3639 = vmatprep.subr.mxu0 0.0
    %3640 = vmatpush1.msra.mxu0 0.0
    %3641 = vmatprep.subr.mxu0 0.0
    %3642 = vmatpush1.msra.mxu0 0.0
    %3643 = vmatprep.subr.mxu0 0.0
    %3644 = vmatpush1.msra.mxu0 0.0
    %3645 = vmatprep.subr.mxu0 0.0
    %3646 = vmatpush1.msra.mxu0 0.0
    %3647 = vmatprep.subr.mxu0 0.0
    %3648 = vmatpush1.msra.mxu0 0.0
    %3649 = vmatprep.subr.mxu0 0.0
    %3650 = vmatpush1.msra.mxu0 0.0
    %3651 = vmatprep.subr.mxu0 0.0
    %3652 = vmatpush1.msra.mxu0 0.0
    %3653 = vmatprep.subr.mxu0 0.0
    %3654 = vmatpush1.msra.mxu0 0.0
    %3655 = vmatprep.subr.mxu0 0.0
    %3656 = vmatpush1.msra.mxu0 0.0
    %3657 = vmatprep.subr.mxu0 0.0
    %3658 = vmatpush1.msra.mxu0 0.0
    %3659 = vmatprep.subr.mxu0 0.0
    %3660 = vmatpush1.msra.mxu0 0.0
    %3661 = vmatprep.subr.mxu0 0.0
    %3662 = vmatpush1.msra.mxu0 0.0
    %3663 = vmatprep.subr.mxu0 0.0
    %3664 = vmatpush1.msra.mxu0 0.0
    %3665 = vmatprep.subr.mxu0 0.0
    %3666 = vmatpush1.msra.mxu0 0.0
    %3667 = vmatprep.subr.mxu0 0.0
    %3668 = vmatpush1.msra.mxu0 0.0
    %3669 = vmatprep.mubr.f32.mxu0 0.0
    %3670 = vmatmul.mubr.f32.gmra.mrb[0].mxu0 %v3603
    %v3671 = vpop.f32.mrb[0].mxu0
    %v3672 = vadd.f32 0.0, %v3671
    %v3673 = vpop.f32.mrb[0].mxu0
    %3674 = vdwg.mxu0
    %v3676 = vsel %vm3524, %v3230, 0
    %v3679 = vsel %vm3528, %v3599, 0
    %3681 = vmatprep.subr.mxu0 0.0
    %3682 = vmatpush1.msra.mxu0 %v3679
    %3683 = vmatprep.subr.mxu0 0.0
    %3684 = vmatpush1.msra.mxu0 0.0
    %3685 = vmatprep.subr.mxu0 0.0
    %3686 = vmatpush1.msra.mxu0 0.0
    %3687 = vmatprep.subr.mxu0 0.0
    %3688 = vmatpush1.msra.mxu0 0.0
    %3689 = vmatprep.subr.mxu0 0.0
    %3690 = vmatpush1.msra.mxu0 0.0
    %3691 = vmatprep.subr.mxu0 0.0
    %3692 = vmatpush1.msra.mxu0 0.0
    %3693 = vmatprep.subr.mxu0 0.0
    %3694 = vmatpush1.msra.mxu0 0.0
    %3695 = vmatprep.subr.mxu0 0.0
    %3696 = vmatpush1.msra.mxu0 0.0
    %3697 = vmatprep.subr.mxu0 0.0
    %3698 = vmatpush1.msra.mxu0 0.0
    %3699 = vmatprep.subr.mxu0 0.0
    %3700 = vmatpush1.msra.mxu0 0.0
    %3701 = vmatprep.subr.mxu0 0.0
    %3702 = vmatpush1.msra.mxu0 0.0
    %3703 = vmatprep.subr.mxu0 0.0
    %3704 = vmatpush1.msra.mxu0 0.0
    %3705 = vmatprep.subr.mxu0 0.0
    %3706 = vmatpush1.msra.mxu0 0.0
    %3707 = vmatprep.subr.mxu0 0.0
    %3708 = vmatpush1.msra.mxu0 0.0
    %3709 = vmatprep.subr.mxu0 0.0
    %3710 = vmatpush1.msra.mxu0 0.0
    %3711 = vmatprep.subr.mxu0 0.0
    %3712 = vmatpush1.msra.mxu0 0.0
    %3713 = vmatprep.subr.mxu0 0.0
    %3714 = vmatpush1.msra.mxu0 0.0
    %3715 = vmatprep.subr.mxu0 0.0
    %3716 = vmatpush1.msra.mxu0 0.0
    %3717 = vmatprep.subr.mxu0 0.0
    %3718 = vmatpush1.msra.mxu0 0.0
    %3719 = vmatprep.subr.mxu0 0.0
    %3720 = vmatpush1.msra.mxu0 0.0
    %3721 = vmatprep.subr.mxu0 0.0
    %3722 = vmatpush1.msra.mxu0 0.0
    %3723 = vmatprep.subr.mxu0 0.0
    %3724 = vmatpush1.msra.mxu0 0.0
    %3725 = vmatprep.subr.mxu0 0.0
    %3726 = vmatpush1.msra.mxu0 0.0
    %3727 = vmatprep.subr.mxu0 0.0
    %3728 = vmatpush1.msra.mxu0 0.0
    %3729 = vmatprep.subr.mxu0 0.0
    %3730 = vmatpush1.msra.mxu0 0.0
    %3731 = vmatprep.subr.mxu0 0.0
    %3732 = vmatpush1.msra.mxu0 0.0
    %3733 = vmatprep.subr.mxu0 0.0
    %3734 = vmatpush1.msra.mxu0 0.0
    %3735 = vmatprep.subr.mxu0 0.0
    %3736 = vmatpush1.msra.mxu0 0.0
    %3737 = vmatprep.subr.mxu0 0.0
    %3738 = vmatpush1.msra.mxu0 0.0
    %3739 = vmatprep.subr.mxu0 0.0
    %3740 = vmatpush1.msra.mxu0 0.0
    %3741 = vmatprep.subr.mxu0 0.0
    %3742 = vmatpush1.msra.mxu0 0.0
    %3743 = vmatprep.subr.mxu0 0.0
    %3744 = vmatpush1.msra.mxu0 0.0
    %3745 = vmatprep.mubr.f32.mxu0 0.0
    %3746 = vmatmul.mubr.f32.gmra.mrb[0].mxu0 %v3676
    %v3747 = vpop.f32.mrb[0].mxu0
    %v3748 = vadd.f32 0.0, %v3747
    %v3749 = vpop.f32.mrb[0].mxu0
    %3750 = vdwg.mxu0
    %v3752 = vsel %vm3528, %v3672, 0
    %3754 = vmatprep.subr.mxu0 0.0
    %3755 = vmatpush1.msra.mxu0 %v3752
    %3756 = vmatprep.subr.mxu0 0.0
    %3757 = vmatpush1.msra.mxu0 0.0
    %3758 = vmatprep.subr.mxu0 0.0
    %3759 = vmatpush1.msra.mxu0 0.0
    %3760 = vmatprep.subr.mxu0 0.0
    %3761 = vmatpush1.msra.mxu0 0.0
    %3762 = vmatprep.subr.mxu0 0.0
    %3763 = vmatpush1.msra.mxu0 0.0
    %3764 = vmatprep.subr.mxu0 0.0
    %3765 = vmatpush1.msra.mxu0 0.0
    %3766 = vmatprep.subr.mxu0 0.0
    %3767 = vmatpush1.msra.mxu0 0.0
    %3768 = vmatprep.subr.mxu0 0.0
    %3769 = vmatpush1.msra.mxu0 0.0
    %3770 = vmatprep.subr.mxu0 0.0
    %3771 = vmatpush1.msra.mxu0 0.0
    %3772 = vmatprep.subr.mxu0 0.0
    %3773 = vmatpush1.msra.mxu0 0.0
    %3774 = vmatprep.subr.mxu0 0.0
    %3775 = vmatpush1.msra.mxu0 0.0
    %3776 = vmatprep.subr.mxu0 0.0
    %3777 = vmatpush1.msra.mxu0 0.0
    %3778 = vmatprep.subr.mxu0 0.0
    %3779 = vmatpush1.msra.mxu0 0.0
    %3780 = vmatprep.subr.mxu0 0.0
    %3781 = vmatpush1.msra.mxu0 0.0
    %3782 = vmatprep.subr.mxu0 0.0
    %3783 = vmatpush1.msra.mxu0 0.0
    %3784 = vmatprep.subr.mxu0 0.0
    %3785 = vmatpush1.msra.mxu0 0.0
    %3786 = vmatprep.subr.mxu0 0.0
    %3787 = vmatpush1.msra.mxu0 0.0
    %3788 = vmatprep.subr.mxu0 0.0
    %3789 = vmatpush1.msra.mxu0 0.0
    %3790 = vmatprep.subr.mxu0 0.0
    %3791 = vmatpush1.msra.mxu0 0.0
    %3792 = vmatprep.subr.mxu0 0.0
    %3793 = vmatpush1.msra.mxu0 0.0
    %3794 = vmatprep.subr.mxu0 0.0
    %3795 = vmatpush1.msra.mxu0 0.0
    %3796 = vmatprep.subr.mxu0 0.0
    %3797 = vmatpush1.msra.mxu0 0.0
    %3798 = vmatprep.subr.mxu0 0.0
    %3799 = vmatpush1.msra.mxu0 0.0
    %3800 = vmatprep.subr.mxu0 0.0
    %3801 = vmatpush1.msra.mxu0 0.0
    %3802 = vmatprep.subr.mxu0 0.0
    %3803 = vmatpush1.msra.mxu0 0.0
    %3804 = vmatprep.subr.mxu0 0.0
    %3805 = vmatpush1.msra.mxu0 0.0
    %3806 = vmatprep.subr.mxu0 0.0
    %3807 = vmatpush1.msra.mxu0 0.0
    %3808 = vmatprep.subr.mxu0 0.0
    %3809 = vmatpush1.msra.mxu0 0.0
    %3810 = vmatprep.subr.mxu0 0.0
    %3811 = vmatpush1.msra.mxu0 0.0
    %3812 = vmatprep.subr.mxu0 0.0
    %3813 = vmatpush1.msra.mxu0 0.0
    %3814 = vmatprep.subr.mxu0 0.0
    %3815 = vmatpush1.msra.mxu0 0.0
    %3816 = vmatprep.subr.mxu0 0.0
    %3817 = vmatpush1.msra.mxu0 0.0
    %3818 = vmatprep.mubr.f32.mxu0 0.0
    %3819 = vmatmul.mubr.f32.gmra.mrb[0].mxu0 %v3676
    %v3820 = vpop.f32.mrb[0].mxu0
    %v3821 = vadd.f32 0.0, %v3820
    %v3822 = vpop.f32.mrb[0].mxu0
    %3823 = vdwg.mxu0
    %v3824 = vsub.f32 %v2837, %v3748
    %v3825 = vsub.f32 %v2907, %v3821
    %v3826 = vand.u32 2147483647, %v3824
    %v3827 = vand.u32 2147483647, %v3825
    %vm3828 = vcmask 27648
    %v3829 = vsel %vm3828, %v3826, 0.0
    %v3830 = vsel %vm3828, %v3827, 0.0
    %v3831 = vadd.f32 %v3829, %v3830
    %3832 = vadd.xlane.f32.xlu0 %v3831
    %v3833 = vpop.xlane.xlu0 %3832
    %v3834 = vrot.slane %v3833, 4
    %v3835 = vadd.f32 %v3833, %v3834
    %v3836 = vrot.slane %v3835, 2
    %v3837 = vadd.f32 %v3835, %v3836
    %v3838 = vrot.slane %v3837, 1
    %v3839 = vadd.f32 %v3837, %v3838
    %s3840 = vtos %v3839
    %s3841 = sadd.f32 %s3227, %s3840
    %s3842 = scalar_lea.smem [#allocation25], 0
    %3843 = sst [smem:[%s3842]] %s3841
    // Predicated region
    $region146: #{lap_loss.1} parent=1 // pred_check
      _
    $region147: #{lap_loss.1} parent=1 // pred_check_branch
      %3845 = sbr.rel (0) target = $region149
    $region148: #{lap_loss.1} parent=1 // pred_region
      %s3847 = ssub.s32 16, 16
      %3848 = vsyncadd [#allocation4], %s3847
      %3851 = dma.smem_to_hbm [#allocation25], 16, %s22, [#allocation4]
    $region149: #{lap_loss.1} parent=1 // pred_fallthru
      _
    // Predicated region
    $region150: #{lap_loss.1} parent=1 // pred_check
      _
    $region151: #{lap_loss.1} parent=1 // pred_check_branch
      %3853 = sbr.rel (0) target = $region153
    $region152: #{lap_loss.1} parent=1 // pred_region
      %3854 = dma.done [#allocation4], 16
    $region153: #{lap_loss.1} parent=1 // pred_fallthru
      _
    %3855 = sfence
    %3856 = vsyncpa [#allocation3], 1
    %3857 = vsyncpa [#allocation6], 1
    %3858 = vsyncpa [#allocation9], 1
    %3859 = vsyncpa [#allocation12], 1
    %3860 = vsyncpa [#allocation15], 1
    %3861 = vsyncpa [#allocation18], 1
    %3862 = vsyncpa [#allocation21], 1
    %3863 = vsyncpa [#allocation24], 1
    %3864 = vsyncpa [#allocation4], 1

</llo_original>
